<compile_context>
chip_gen: v7x
topology: tpu7x:2x2x1
jax: 0.10.0
libtpu: 0.0.40
codegen_flags: <defaults>
</compile_context>

<pallas_src>
import math
from functools import partial

import jax
import jax.numpy as jnp
from jax import lax
from jax.experimental import pallas as pl
from jax.experimental.pallas import tpu as pltpu

EPS = 1e-5
_CP = pltpu.CompilerParams(dimension_semantics=("parallel",),
                           vmem_limit_bytes=32 * 1024 * 1024)


# ------------------------------- kernels ------------------------------------

def _conv1x1_from_nchw_stats_kernel(x_ref, w_ref, y_ref, st_ref):
    """One sample: y1 = x_hwc @ w1, NCHW->NHWC transpose fused in-kernel (XLU).

    Also emits this sample's per-channel (sum, centered sum-of-squares).
    """
    x_hwc = jnp.transpose(x_ref[0])                               # (HW, Cin)
    y = jnp.dot(x_hwc, w_ref[...], preferred_element_type=jnp.float32)
    y_ref[...] = y                                                # (HW, DC)
    s = jnp.sum(y, axis=0, keepdims=True)
    m2 = jnp.sum(jnp.square(y - s / y.shape[0]), axis=0, keepdims=True)
    st_ref[...] = jnp.concatenate([s, m2], axis=0)[None]          # (1, 2, DC)


def _bn_relu_conv3x3_stats_kernel(y1_ref, s1_ref, t1_ref, w2_ref,
                                  y2_ref, st_ref, *, H, W, DC):
    """One sample: z = relu(y1*scale1 + shift1); y2 = conv3x3(z, pad=1); stats(y2).

    Padding is fused in-kernel; the conv is ONE im2col matmul with K = 9*DC.
    """
    z = jnp.maximum(y1_ref[0] * s1_ref[...] + t1_ref[...], 0.0)    # (H, W, DC)
    zc = jnp.zeros((H, 1, DC), jnp.float32)
    zw = jnp.concatenate([zc, z, zc], axis=1)                      # (H, W+2, DC)
    zr = jnp.zeros((1, W + 2, DC), jnp.float32)
    zp = jnp.concatenate([zr, zw, zr], axis=0)                     # (H+2, W+2, DC)
    cat = jnp.concatenate(
        [zp[ky:ky + H, kx:kx + W, :] for ky in range(3) for kx in range(3)],
        axis=-1)                                                   # (H, W, 9*DC)
    y2 = jnp.dot(cat.reshape(H * W, 9 * DC), w2_ref[...],
                 preferred_element_type=jnp.float32)               # (HW, DC)
    y2_ref[...] = y2
    s = jnp.sum(y2, axis=0, keepdims=True)
    m2 = jnp.sum(jnp.square(y2 - s / (H * W)), axis=0, keepdims=True)
    st_ref[...] = jnp.concatenate([s, m2], axis=0)[None]           # (1, 2, DC)


def _bn_relu_conv1x1_stats_kernel(y2_ref, s2_ref, t2_ref, w3_ref, st_ref):
    """Per-sample spatial sum and centered sumsq of y3 = relu(bn2(y2)) @ w3."""
    z = jnp.maximum(y2_ref[...] * s2_ref[...] + t2_ref[...], 0.0)
    y3 = jnp.dot(z, w3_ref[...], preferred_element_type=jnp.float32)
    sp = jnp.sum(y3, axis=0, keepdims=True)
    m2 = jnp.sum(jnp.square(y3 - sp / y3.shape[0]), axis=0, keepdims=True)
    st_ref[...] = jnp.concatenate([sp, m2], axis=0)[None]          # (1, 2, Cout)


def _bn_gapsub_residual_to_nchw_kernel(y2_ref, s2_ref, t2_ref, w3_ref, s3_ref,
                                       spm_ref, xres_ref, o_ref):
    """out = relu(scale3 * (y3 - spatial_mean(y3)) + residual), written as NCHW.

    bn3's shift term cancels exactly against the global-average-pool
    subtraction, so only scale3 = gamma3 * rsqrt(var3 + eps) is needed.  The
    NHWC->NCHW transpose is fused here (lane-dense (Cout, HW) output blocks).
    """
    z = jnp.maximum(y2_ref[...] * s2_ref[...] + t2_ref[...], 0.0)
    y3 = jnp.dot(z, w3_ref[...], preferred_element_type=jnp.float32)  # (HW, Cout)
    y3_chw = jnp.transpose(y3)                                        # (Cout, HW)
    out = s3_ref[...] * (y3_chw - spm_ref[0]) + xres_ref[0]
    o_ref[0] = jnp.maximum(out, 0.0)


# ------------------------------ host helpers ---------------------------------

def _combine_bn_stats(stats, rows_per_tile, total):
    """Chan-style combine of per-tile (sum, centered sumsq) -> (mean, var)."""
    s = stats[:, 0, :]                                   # (T, C) per-tile sums
    m2 = stats[:, 1, :]                                  # per-tile centered M2
    mean = jnp.sum(s, axis=0) / total
    tile_mean = s / rows_per_tile
    var = (jnp.sum(m2, axis=0)
           + rows_per_tile * jnp.sum(jnp.square(tile_mean - mean), axis=0)) / total
    return mean, jnp.maximum(var, 0.0)


def _bn_scale_shift(stats, rows_per_tile, total, gamma, beta):
    """Fold BN(training) + affine into a per-channel scale/shift."""
    mean, var = _combine_bn_stats(stats, rows_per_tile, total)
    scale = gamma * lax.rsqrt(var + EPS)
    shift = beta - mean * scale
    return scale.reshape(1, -1), shift.reshape(1, -1)


def resbottleneck_forward(x_nchw, params, stride=1):
    """ResBottleneck forward (NCHW in / NCHW out), training-mode BatchNorm."""
    N, Cin, H, W = x_nchw.shape
    if stride > 1:
        # ResBottleneck: x = F.avg_pool2d(x, stride) before the transfer block.
        # TODO(synk): fuse this pooling into K1 to save one full pass over x
        # when stride > 1; kept as an XLA pre-pass (secondary path) for now.
        assert H % stride == 0 and W % stride == 0
        x_nchw = x_nchw.reshape(N, Cin, H // stride, stride,
                                W // stride, stride).mean(axis=(3, 5))
        H, W = H // stride, W // stride
    assert H == W, "avg_pool2d(out, out.size(3)) is global pooling only for square maps"

    DC = params["w1"].shape[1]
    Cout = params["w3"].shape[1]
    assert Cin == Cout, "identity residual (downsample=None) needs inplanes == 4*planes"
    HW = H * W
    M = N * HW

    # NCHW stays put; this (and the reshapes between stages) are free
    # leading-dim splits of contiguous arrays -- no extra HBM passes.
    x_c = x_nchw.reshape(N, Cin, HW)

    # ---- stage 1: conv1 (1x1), NCHW->NHWC fused in-kernel + batch stats -----
    y1, st1 = pl.pallas_call(
        _conv1x1_from_nchw_stats_kernel,
        grid=(N,),
        in_specs=[pl.BlockSpec((1, Cin, HW), lambda n: (n, 0, 0)),
                  pl.BlockSpec((Cin, DC), lambda n: (0, 0))],
        out_specs=[pl.BlockSpec((HW, DC), lambda n: (n, 0)),
                   pl.BlockSpec((1, 2, DC), lambda n: (n, 0, 0))],
        out_shape=[jax.ShapeDtypeStruct((M, DC), jnp.float32),
                   jax.ShapeDtypeStruct((N, 2, DC), jnp.float32)],
        compiler_params=_CP,
    )(x_c, params["w1"])
    scale1, shift1 = _bn_scale_shift(st1, HW, M, params["g1"], params["b1"])

    # ---- stage 2: bn1+relu fused into the 3x3 conv (single K=9*DC matmul) ----
    y2, st2 = pl.pallas_call(
        partial(_bn_relu_conv3x3_stats_kernel, H=H, W=W, DC=DC),
        grid=(N,),
        in_specs=[pl.BlockSpec((1, H, W, DC), lambda n: (n, 0, 0, 0)),
                  pl.BlockSpec((1, DC), lambda n: (0, 0)),
                  pl.BlockSpec((1, DC), lambda n: (0, 0)),
                  pl.BlockSpec((9 * DC, DC), lambda n: (0, 0))],
        out_specs=[pl.BlockSpec((HW, DC), lambda n: (n, 0)),
                   pl.BlockSpec((1, 2, DC), lambda n: (n, 0, 0))],
        out_shape=[jax.ShapeDtypeStruct((M, DC), jnp.float32),
                   jax.ShapeDtypeStruct((N, 2, DC), jnp.float32)],
        compiler_params=_CP,
    )(y1.reshape(N, H, W, DC), scale1, shift1, params["w2_packed"])
    scale2, shift2 = _bn_scale_shift(st2, HW, M, params["g2"], params["b2"])

    # ---- stage 3: statistics of y3 = relu(bn2(y2)) @ w3 (y3 not stored) -----
    st3 = pl.pallas_call(
        _bn_relu_conv1x1_stats_kernel,
        grid=(N,),
        in_specs=[pl.BlockSpec((HW, DC), lambda n: (n, 0)),
                  pl.BlockSpec((1, DC), lambda n: (0, 0)),
                  pl.BlockSpec((1, DC), lambda n: (0, 0)),
                  pl.BlockSpec((DC, Cout), lambda n: (0, 0))],
        out_specs=pl.BlockSpec((1, 2, Cout), lambda n: (n, 0, 0)),
        out_shape=jax.ShapeDtypeStruct((N, 2, Cout), jnp.float32),
        compiler_params=_CP,
    )(y2, scale2, shift2, params["w3"])

    _, var3 = _combine_bn_stats(st3, HW, M)
    scale3 = (params["g3"] * lax.rsqrt(var3 + EPS)).reshape(Cout, 1)
    spmean = (st3[:, 0, :] / HW).reshape(N, Cout, 1)    # spatial mean of y3

    # ---- stage 4: bn3 + GAP subtraction + residual + relu, NCHW output ------
    out_c = pl.pallas_call(
        _bn_gapsub_residual_to_nchw_kernel,
        grid=(N,),
        in_specs=[pl.BlockSpec((HW, DC), lambda n: (n, 0)),
                  pl.BlockSpec((1, DC), lambda n: (0, 0)),
                  pl.BlockSpec((1, DC), lambda n: (0, 0)),
                  pl.BlockSpec((DC, Cout), lambda n: (0, 0)),
                  pl.BlockSpec((Cout, 1), lambda n: (0, 0)),
                  pl.BlockSpec((1, Cout, 1), lambda n: (n, 0, 0)),
                  pl.BlockSpec((1, Cin, HW), lambda n: (n, 0, 0))],
        out_specs=pl.BlockSpec((1, Cout, HW), lambda n: (n, 0, 0)),
        out_shape=jax.ShapeDtypeStruct((N, Cout, HW), jnp.float32),
        compiler_params=_CP,
    )(y2, scale2, shift2, params["w3"], scale3, spmean, x_c)

    return out_c.reshape(N, Cout, H, W)


# --------------------------- deterministic params ----------------------------

def init_params(key, inplanes, planes, cardinate=1):
    """Parameters for transfer(inplanes, planes, cardinate) as built by ResBottleneck.

    ResBottleneck always uses cardinality 1, so the grouped 3x3 conv is a dense
    conv.  (For C > 1 one would add a group grid axis instead of a block-diagonal
    dense weight, to avoid C x wasted MXU FLOPs.)
    """
    assert cardinate == 1, "ResBottleneck always builds transfer with cardinality 1"
    DC = planes * cardinate
    cout = 4 * planes
    ks = jax.random.split(key, 9)
    w1 = jax.random.normal(ks[0], (inplanes, DC), jnp.float32) / math.sqrt(inplanes)
    w2_hwio = jax.random.normal(ks[1], (3, 3, DC, DC), jnp.float32) / math.sqrt(9 * DC)
    w3 = jax.random.normal(ks[2], (DC, cout), jnp.float32) / math.sqrt(DC)
    return dict(
        w1=w1,
        w2_hwio=w2_hwio,
        # ((ky*3+kx)*DC + i, o): matches the in-kernel im2col concat ordering.
        w2_packed=w2_hwio.reshape(9 * DC, DC),
        w3=w3,
        g1=1.0 + 0.1 * jax.random.normal(ks[3], (DC,), jnp.float32),
        b1=0.1 * jax.random.normal(ks[4], (DC,), jnp.float32),
        g2=1.0 + 0.1 * jax.random.normal(ks[5], (DC,), jnp.float32),
        b2=0.1 * jax.random.normal(ks[6], (DC,), jnp.float32),
        g3=1.0 + 0.1 * jax.random.normal(ks[7], (cout,), jnp.float32),
        b3=0.1 * jax.random.normal(ks[8], (cout,), jnp.float32),
    )


# ----------------------------- pure-JAX reference ----------------------------

def _bn_train_ref(y, gamma, beta):
    mean = jnp.mean(y, axis=(0, 1, 2), keepdims=True)
    var = jnp.mean(jnp.square(y - mean), axis=(0, 1, 2), keepdims=True)
    return (y - mean) * lax.rsqrt(var + EPS) * gamma + beta


def resbottleneck_forward_ref(x_nchw, params, stride=1):
    N, Cin, H, W = x_nchw.shape
    if stride > 1:
        x_nchw = x_nchw.reshape(N, Cin, H // stride, stride,
                                W // stride, stride).mean(axis=(3, 5))
    dn = ("NHWC", "HWIO", "NHWC")
    x = jnp.transpose(x_nchw, (0, 2, 3, 1))
    h = lax.conv_general_dilated(x, params["w1"][None, None], (1, 1), "VALID",
                                 dimension_numbers=dn)
    h = jnp.maximum(_bn_train_ref(h, params["g1"], params["b1"]), 0.0)
    h = lax.conv_general_dilated(h, params["w2_hwio"], (1, 1), [(1, 1), (1, 1)],
                                 dimension_numbers=dn)
    h = jnp.maximum(_bn_train_ref(h, params["g2"], params["b2"]), 0.0)
    h = lax.conv_general_dilated(h, params["w3"][None, None], (1, 1), "VALID",
                                 dimension_numbers=dn)
    h = _bn_train_ref(h, params["g3"], params["b3"])
    out = h - jnp.mean(h, axis=(1, 2), keepdims=True)     # F.avg_pool2d(out, W)
    out = jnp.maximum(out + x, 0.0)                        # residual + ReLU
    return jnp.transpose(out, (0, 3, 1, 2))


# ----------------------------------- main ------------------------------------

if __name__ == "__main__":
    planes = 32
    inplanes = 4 * planes          # identity residual requires inplanes == 4*planes
    N, H, W = 2, 16, 16

    key = jax.random.PRNGKey(0)
    kp, kx = jax.random.split(key)
    params = init_params(kp, inplanes, planes)
    x = jax.random.normal(kx, (N, inplanes, H, W), jnp.float32)   # NCHW, like PyTorch

    fwd = jax.jit(resbottleneck_forward, static_argnames=("stride",))

    out = jax.block_until_ready(fwd(x, params, stride=1))
    ref = jax.block_until_ready(resbottleneck_forward_ref(x, params, stride=1))
    assert out.shape == (N, 4 * planes, H, W), out.shape
    err = float(jnp.max(jnp.abs(out - ref)))
    assert err < 2e-3, f"stride=1 mismatch vs reference: {err}"

    # stride > 1 path of ResBottleneck (input avg-pool before the block).
    out2 = jax.block_until_ready(fwd(x, params, stride=2))
    ref2 = jax.block_until_ready(resbottleneck_forward_ref(x, params, stride=2))
    assert out2.shape == (N, 4 * planes, H // 2, W // 2), out2.shape
    err2 = float(jnp.max(jnp.abs(out2 - ref2)))
    assert err2 < 2e-3, f"stride=2 mismatch vs reference: {err2}"

    print("KERNEL_OK")
</pallas_src>

<mosaic_0001>
module attributes {stable_mosaic.version = 11 : i64} {
  func.func @_conv1x1_from_nchw_stats_kernel(%arg0: i32, %arg1: memref<1x128x256xf32, #tpu.memory_space<vmem>>, %arg2: memref<128x32xf32, #tpu.memory_space<vmem>>, %arg3: memref<256x32xf32, #tpu.memory_space<vmem>>, %arg4: memref<1x2x32xf32, #tpu.memory_space<vmem>>) attributes {dimension_semantics = [#tpu.dimension_semantics<parallel>], iteration_bounds = array<i64: 2>, scalar_prefetch = 0 : i64, scratch_operands = 0 : i64, tpu.core_type = #tpu.core_type<tc>, window_params = [{transform_indices = @transform_0, window_bounds = array<i64: 1, 128, 256>}, {pipeline_mode = #tpu.pipeline_mode<synchronous>, transform_indices = @transform_1, window_bounds = array<i64: 128, 32>}, {transform_indices = @transform_2, window_bounds = array<i64: 256, 32>}, {transform_indices = @transform_3, window_bounds = array<i64: 1, 2, 32>}]} {
    %c0 = arith.constant 0 : index
    %c0_0 = arith.constant 0 : index
    %c0_1 = arith.constant 0 : index
    %0 = vector.load %arg1[%c0, %c0_0, %c0_1] : memref<1x128x256xf32, #tpu.memory_space<vmem>>, vector<1x128x256xf32>
    %1 = vector.shape_cast %0 : vector<1x128x256xf32> to vector<128x256xf32>
    %2 = tpu.transpose %1, [1, 0] : vector<128x256xf32> -> vector<256x128xf32>
    %c0_2 = arith.constant 0 : index
    %c0_3 = arith.constant 0 : index
    %3 = vector.load %arg2[%c0_2, %c0_3] : memref<128x32xf32, #tpu.memory_space<vmem>>, vector<128x32xf32>
    %cst = arith.constant dense<0.000000e+00> : vector<256x32xf32>
    %4 = tpu.matmul %2, %3, %cst {dimension_numbers = #tpu.dot_dimension_numbers<[1], [0], [0], [1], [0, 0, 1, 1], [], []>} : vector<256x128xf32>, vector<128x32xf32>, vector<256x32xf32> -> vector<256x32xf32>
    %c0_4 = arith.constant 0 : index
    %c0_5 = arith.constant 0 : index
    %5 = vector.load %arg3[%c0_4, %c0_5] : memref<256x32xf32, #tpu.memory_space<vmem>>, vector<256x32xf32>
    tpu.vector_store %arg3[%c0_4, %c0_5], %4 {strides = array<i32>} : memref<256x32xf32, #tpu.memory_space<vmem>>, vector<256x32xf32>,
    %cst_6 = arith.constant dense<0.000000e+00> : vector<32xf32>
    %6 = vector.multi_reduction <add>, %4, %cst_6 [0] : vector<256x32xf32> to vector<32xf32>
    %7 = vector.shape_cast %6 : vector<32xf32> to vector<1x32xf32>
    %cst_7 = arith.constant 2.560000e+02 : f32
    %8 = vector.broadcast %cst_7 : f32 to vector<1x32xf32>
    %9 = arith.divf %7, %8 : vector<1x32xf32>
    %10 = vector.broadcast %9 : vector<1x32xf32> to vector<256x32xf32>
    %11 = arith.subf %4, %10 : vector<256x32xf32>
    %12 = arith.mulf %11, %11 : vector<256x32xf32>
    %cst_8 = arith.constant dense<0.000000e+00> : vector<32xf32>
    %13 = vector.multi_reduction <add>, %12, %cst_8 [0] : vector<256x32xf32> to vector<32xf32>
    %14 = vector.shape_cast %13 : vector<32xf32> to vector<1x32xf32>
    %15 = tpu.concatenate %7, %14 in 0 : vector<1x32xf32>, vector<1x32xf32> -> vector<2x32xf32>
    %16 = vector.shape_cast %15 : vector<2x32xf32> to vector<1x2x32xf32>
    %c0_9 = arith.constant 0 : index
    %c0_10 = arith.constant 0 : index
    %c0_11 = arith.constant 0 : index
    %17 = vector.load %arg4[%c0_9, %c0_10, %c0_11] : memref<1x2x32xf32, #tpu.memory_space<vmem>>, vector<1x2x32xf32>
    tpu.vector_store %arg4[%c0_9, %c0_10, %c0_11], %16 {strides = array<i32>} : memref<1x2x32xf32, #tpu.memory_space<vmem>>, vector<1x2x32xf32>,
    return
  }
  func.func @transform_0(%arg0: i32) -> (i32, i32, i32) {
    %c0_i32 = arith.constant 0 : i32
    %c0_i32_0 = arith.constant 0 : i32
    %c0_i32_1 = arith.constant 0 : i32
    return %arg0, %c0_i32, %c0_i32_0 : i32, i32, i32
  }
  func.func @transform_1(%arg0: i32) -> (i32, i32) {
    %c0_i32 = arith.constant 0 : i32
    %c0_i32_0 = arith.constant 0 : i32
    %c0_i32_1 = arith.constant 0 : i32
    return %c0_i32, %c0_i32_0 : i32, i32
  }
  func.func @transform_2(%arg0: i32) -> (i32, i32) {
    %c0_i32 = arith.constant 0 : i32
    %c0_i32_0 = arith.constant 0 : i32
    return %arg0, %c0_i32 : i32, i32
  }
  func.func @transform_3(%arg0: i32) -> (i32, i32, i32) {
    %c0_i32 = arith.constant 0 : i32
    %c0_i32_0 = arith.constant 0 : i32
    %c0_i32_1 = arith.constant 0 : i32
    return %arg0, %c0_i32, %c0_i32_0 : i32, i32, i32
  }
}

module attributes {stable_mosaic.version = 11 : i64} {
  func.func @_bn_relu_conv1x1_stats_kernel(%arg0: i32, %arg1: memref<256x32xf32, #tpu.memory_space<vmem>>, %arg2: memref<1x32xf32, #tpu.memory_space<vmem>>, %arg3: memref<1x32xf32, #tpu.memory_space<vmem>>, %arg4: memref<32x128xf32, #tpu.memory_space<vmem>>, %arg5: memref<1x2x128xf32, #tpu.memory_space<vmem>>) attributes {dimension_semantics = [#tpu.dimension_semantics<parallel>], iteration_bounds = array<i64: 2>, scalar_prefetch = 0 : i64, scratch_operands = 0 : i64, tpu.core_type = #tpu.core_type<tc>, window_params = [{transform_indices = @transform_0, window_bounds = array<i64: 256, 32>}, {pipeline_mode = #tpu.pipeline_mode<synchronous>, transform_indices = @transform_1, window_bounds = array<i64: 1, 32>}, {pipeline_mode = #tpu.pipeline_mode<synchronous>, transform_indices = @transform_2, window_bounds = array<i64: 1, 32>}, {pipeline_mode = #tpu.pipeline_mode<synchronous>, transform_indices = @transform_3, window_bounds = array<i64: 32, 128>}, {transform_indices = @transform_4, window_bounds = array<i64: 1, 2, 128>}]} {
    %c0 = arith.constant 0 : index
    %c0_0 = arith.constant 0 : index
    %0 = vector.load %arg1[%c0, %c0_0] : memref<256x32xf32, #tpu.memory_space<vmem>>, vector<256x32xf32>
    %c0_1 = arith.constant 0 : index
    %c0_2 = arith.constant 0 : index
    %1 = vector.load %arg2[%c0_1, %c0_2] : memref<1x32xf32, #tpu.memory_space<vmem>>, vector<1x32xf32>
    %2 = vector.broadcast %1 : vector<1x32xf32> to vector<256x32xf32>
    %3 = arith.mulf %0, %2 : vector<256x32xf32>
    %c0_3 = arith.constant 0 : index
    %c0_4 = arith.constant 0 : index
    %4 = vector.load %arg3[%c0_3, %c0_4] : memref<1x32xf32, #tpu.memory_space<vmem>>, vector<1x32xf32>
    %5 = vector.broadcast %4 : vector<1x32xf32> to vector<256x32xf32>
    %6 = arith.addf %3, %5 : vector<256x32xf32>
    %cst = arith.constant 0.000000e+00 : f32
    %7 = vector.broadcast %cst : f32 to vector<256x32xf32>
    %8 = arith.maximumf %6, %7 : vector<256x32xf32>
    %c0_5 = arith.constant 0 : index
    %c0_6 = arith.constant 0 : index
    %9 = vector.load %arg4[%c0_5, %c0_6] : memref<32x128xf32, #tpu.memory_space<vmem>>, vector<32x128xf32>
    %cst_7 = arith.constant dense<0.000000e+00> : vector<256x128xf32>
    %10 = tpu.matmul %8, %9, %cst_7 {dimension_numbers = #tpu.dot_dimension_numbers<[1], [0], [0], [1], [0, 0, 1, 1], [], []>} : vector<256x32xf32>, vector<32x128xf32>, vector<256x128xf32> -> vector<256x128xf32>
    %cst_8 = arith.constant dense<0.000000e+00> : vector<128xf32>
    %11 = vector.multi_reduction <add>, %10, %cst_8 [0] : vector<256x128xf32> to vector<128xf32>
    %12 = vector.shape_cast %11 : vector<128xf32> to vector<1x128xf32>
    %cst_9 = arith.constant 2.560000e+02 : f32
    %13 = vector.broadcast %cst_9 : f32 to vector<1x128xf32>
    %14 = arith.divf %12, %13 : vector<1x128xf32>
    %15 = vector.broadcast %14 : vector<1x128xf32> to vector<256x128xf32>
    %16 = arith.subf %10, %15 : vector<256x128xf32>
    %17 = arith.mulf %16, %16 : vector<256x128xf32>
    %cst_10 = arith.constant dense<0.000000e+00> : vector<128xf32>
    %18 = vector.multi_reduction <add>, %17, %cst_10 [0] : vector<256x128xf32> to vector<128xf32>
    %19 = vector.shape_cast %18 : vector<128xf32> to vector<1x128xf32>
    %20 = tpu.concatenate %12, %19 in 0 : vector<1x128xf32>, vector<1x128xf32> -> vector<2x128xf32>
    %21 = vector.shape_cast %20 : vector<2x128xf32> to vector<1x2x128xf32>
    %c0_11 = arith.constant 0 : index
    %c0_12 = arith.constant 0 : index
    %c0_13 = arith.constant 0 : index
    %22 = vector.load %arg5[%c0_11, %c0_12, %c0_13] : memref<1x2x128xf32, #tpu.memory_space<vmem>>, vector<1x2x128xf32>
    tpu.vector_store %arg5[%c0_11, %c0_12, %c0_13], %21 {strides = array<i32>} : memref<1x2x128xf32, #tpu.memory_space<vmem>>, vector<1x2x128xf32>,
    return
  }
  func.func @transform_0(%arg0: i32) -> (i32, i32) {
    %c0_i32 = arith.constant 0 : i32
    %c0_i32_0 = arith.constant 0 : i32
    return %arg0, %c0_i32 : i32, i32
  }
  func.func @transform_1(%arg0: i32) -> (i32, i32) {
    %c0_i32 = arith.constant 0 : i32
    %c0_i32_0 = arith.constant 0 : i32
    %c0_i32_1 = arith.constant 0 : i32
    return %c0_i32, %c0_i32_0 : i32, i32
  }
  func.func @transform_2(%arg0: i32) -> (i32, i32) {
    %c0_i32 = arith.constant 0 : i32
    %c0_i32_0 = arith.constant 0 : i32
    %c0_i32_1 = arith.constant 0 : i32
    return %c0_i32, %c0_i32_0 : i32, i32
  }
  func.func @transform_3(%arg0: i32) -> (i32, i32) {
    %c0_i32 = arith.constant 0 : i32
    %c0_i32_0 = arith.constant 0 : i32
    %c0_i32_1 = arith.constant 0 : i32
    return %c0_i32, %c0_i32_0 : i32, i32
  }
  func.func @transform_4(%arg0: i32) -> (i32, i32, i32) {
    %c0_i32 = arith.constant 0 : i32
    %c0_i32_0 = arith.constant 0 : i32
    %c0_i32_1 = arith.constant 0 : i32
    return %arg0, %c0_i32, %c0_i32_0 : i32, i32, i32
  }
}

module attributes {stable_mosaic.version = 11 : i64} {
  func.func @_bn_relu_conv3x3_stats_kernel(%arg0: i32, %arg1: memref<1x16x16x32xf32, #tpu.memory_space<vmem>>, %arg2: memref<1x32xf32, #tpu.memory_space<vmem>>, %arg3: memref<1x32xf32, #tpu.memory_space<vmem>>, %arg4: memref<288x32xf32, #tpu.memory_space<vmem>>, %arg5: memref<256x32xf32, #tpu.memory_space<vmem>>, %arg6: memref<1x2x32xf32, #tpu.memory_space<vmem>>) attributes {dimension_semantics = [#tpu.dimension_semantics<parallel>], iteration_bounds = array<i64: 2>, scalar_prefetch = 0 : i64, scratch_operands = 0 : i64, tpu.core_type = #tpu.core_type<tc>, window_params = [{transform_indices = @transform_0, window_bounds = array<i64: 1, 16, 16, 32>}, {pipeline_mode = #tpu.pipeline_mode<synchronous>, transform_indices = @transform_1, window_bounds = array<i64: 1, 32>}, {pipeline_mode = #tpu.pipeline_mode<synchronous>, transform_indices = @transform_2, window_bounds = array<i64: 1, 32>}, {pipeline_mode = #tpu.pipeline_mode<synchronous>, transform_indices = @transform_3, window_bounds = array<i64: 288, 32>}, {transform_indices = @transform_4, window_bounds = array<i64: 256, 32>}, {transform_indices = @transform_5, window_bounds = array<i64: 1, 2, 32>}]} {
    %c0 = arith.constant 0 : index
    %c0_0 = arith.constant 0 : index
    %c0_1 = arith.constant 0 : index
    %c0_2 = arith.constant 0 : index
    %0 = vector.load %arg1[%c0, %c0_0, %c0_1, %c0_2] : memref<1x16x16x32xf32, #tpu.memory_space<vmem>>, vector<1x16x16x32xf32>
    %1 = vector.shape_cast %0 : vector<1x16x16x32xf32> to vector<16x16x32xf32>
    %c0_3 = arith.constant 0 : index
    %c0_4 = arith.constant 0 : index
    %2 = vector.load %arg2[%c0_3, %c0_4] : memref<1x32xf32, #tpu.memory_space<vmem>>, vector<1x32xf32>
    %3 = vector.shape_cast %2 : vector<1x32xf32> to vector<1x1x32xf32>
    %4 = vector.broadcast %3 : vector<1x1x32xf32> to vector<16x16x32xf32>
    %5 = arith.mulf %1, %4 : vector<16x16x32xf32>
    %c0_5 = arith.constant 0 : index
    %c0_6 = arith.constant 0 : index
    %6 = vector.load %arg3[%c0_5, %c0_6] : memref<1x32xf32, #tpu.memory_space<vmem>>, vector<1x32xf32>
    %7 = vector.shape_cast %6 : vector<1x32xf32> to vector<1x1x32xf32>
    %8 = vector.broadcast %7 : vector<1x1x32xf32> to vector<16x16x32xf32>
    %9 = arith.addf %5, %8 : vector<16x16x32xf32>
    %cst = arith.constant 0.000000e+00 : f32
    %10 = vector.broadcast %cst : f32 to vector<16x16x32xf32>
    %11 = arith.maximumf %9, %10 : vector<16x16x32xf32>
    %cst_7 = arith.constant 0.000000e+00 : f32
    %12 = vector.broadcast %cst_7 : f32 to vector<16x1x32xf32>
    %13 = tpu.concatenate %12, %11, %12 in 1 : vector<16x1x32xf32>, vector<16x16x32xf32>, vector<16x1x32xf32> -> vector<16x18x32xf32>
    %cst_8 = arith.constant 0.000000e+00 : f32
    %14 = vector.broadcast %cst_8 : f32 to vector<1x18x32xf32>
    %15 = tpu.concatenate %14, %13, %14 in 0 : vector<1x18x32xf32>, vector<16x18x32xf32>, vector<1x18x32xf32> -> vector<18x18x32xf32>
    %16 = vector.extract_strided_slice %15 {offsets = [0, 0, 0], sizes = [16, 16, 32], strides = [1, 1, 1]} : vector<18x18x32xf32> to vector<16x16x32xf32>
    %17 = vector.extract_strided_slice %15 {offsets = [0, 1, 0], sizes = [16, 16, 32], strides = [1, 1, 1]} : vector<18x18x32xf32> to vector<16x16x32xf32>
    %18 = vector.extract_strided_slice %15 {offsets = [0, 2, 0], sizes = [16, 16, 32], strides = [1, 1, 1]} : vector<18x18x32xf32> to vector<16x16x32xf32>
    %19 = vector.extract_strided_slice %15 {offsets = [1, 0, 0], sizes = [16, 16, 32], strides = [1, 1, 1]} : vector<18x18x32xf32> to vector<16x16x32xf32>
    %20 = vector.extract_strided_slice %15 {offsets = [1, 1, 0], sizes = [16, 16, 32], strides = [1, 1, 1]} : vector<18x18x32xf32> to vector<16x16x32xf32>
    %21 = vector.extract_strided_slice %15 {offsets = [1, 2, 0], sizes = [16, 16, 32], strides = [1, 1, 1]} : vector<18x18x32xf32> to vector<16x16x32xf32>
    %22 = vector.extract_strided_slice %15 {offsets = [2, 0, 0], sizes = [16, 16, 32], strides = [1, 1, 1]} : vector<18x18x32xf32> to vector<16x16x32xf32>
    %23 = vector.extract_strided_slice %15 {offsets = [2, 1, 0], sizes = [16, 16, 32], strides = [1, 1, 1]} : vector<18x18x32xf32> to vector<16x16x32xf32>
    %24 = vector.extract_strided_slice %15 {offsets = [2, 2, 0], sizes = [16, 16, 32], strides = [1, 1, 1]} : vector<18x18x32xf32> to vector<16x16x32xf32>
    %25 = tpu.concatenate %16, %17, %18, %19, %20, %21, %22, %23, %24 in 2 : vector<16x16x32xf32>, vector<16x16x32xf32>, vector<16x16x32xf32>, vector<16x16x32xf32>, vector<16x16x32xf32>, vector<16x16x32xf32>, vector<16x16x32xf32>, vector<16x16x32xf32>, vector<16x16x32xf32> -> vector<16x16x288xf32>
    %26 = vector.shape_cast %25 : vector<16x16x288xf32> to vector<256x288xf32>
    %c0_9 = arith.constant 0 : index
    %c0_10 = arith.constant 0 : index
    %27 = vector.load %arg4[%c0_9, %c0_10] : memref<288x32xf32, #tpu.memory_space<vmem>>, vector<288x32xf32>
    %cst_11 = arith.constant dense<0.000000e+00> : vector<256x32xf32>
    %28 = tpu.matmul %26, %27, %cst_11 {dimension_numbers = #tpu.dot_dimension_numbers<[1], [0], [0], [1], [0, 0, 1, 1], [], []>} : vector<256x288xf32>, vector<288x32xf32>, vector<256x32xf32> -> vector<256x32xf32>
    %c0_12 = arith.constant 0 : index
    %c0_13 = arith.constant 0 : index
    %29 = vector.load %arg5[%c0_12, %c0_13] : memref<256x32xf32, #tpu.memory_space<vmem>>, vector<256x32xf32>
    tpu.vector_store %arg5[%c0_12, %c0_13], %28 {strides = array<i32>} : memref<256x32xf32, #tpu.memory_space<vmem>>, vector<256x32xf32>,
    %cst_14 = arith.constant dense<0.000000e+00> : vector<32xf32>
    %30 = vector.multi_reduction <add>, %28, %cst_14 [0] : vector<256x32xf32> to vector<32xf32>
    %31 = vector.shape_cast %30 : vector<32xf32> to vector<1x32xf32>
    %cst_15 = arith.constant 2.560000e+02 : f32
    %32 = vector.broadcast %cst_15 : f32 to vector<1x32xf32>
    %33 = arith.divf %31, %32 : vector<1x32xf32>
    %34 = vector.broadcast %33 : vector<1x32xf32> to vector<256x32xf32>
    %35 = arith.subf %28, %34 : vector<256x32xf32>
    %36 = arith.mulf %35, %35 : vector<256x32xf32>
    %cst_16 = arith.constant dense<0.000000e+00> : vector<32xf32>
    %37 = vector.multi_reduction <add>, %36, %cst_16 [0] : vector<256x32xf32> to vector<32xf32>
    %38 = vector.shape_cast %37 : vector<32xf32> to vector<1x32xf32>
    %39 = tpu.concatenate %31, %38 in 0 : vector<1x32xf32>, vector<1x32xf32> -> vector<2x32xf32>
    %40 = vector.shape_cast %39 : vector<2x32xf32> to vector<1x2x32xf32>
    %c0_17 = arith.constant 0 : index
    %c0_18 = arith.constant 0 : index
    %c0_19 = arith.constant 0 : index
    %41 = vector.load %arg6[%c0_17, %c0_18, %c0_19] : memref<1x2x32xf32, #tpu.memory_space<vmem>>, vector<1x2x32xf32>
    tpu.vector_store %arg6[%c0_17, %c0_18, %c0_19], %40 {strides = array<i32>} : memref<1x2x32xf32, #tpu.memory_space<vmem>>, vector<1x2x32xf32>,
    return
  }
  func.func @transform_0(%arg0: i32) -> (i32, i32, i32, i32) {
    %c0_i32 = arith.constant 0 : i32
    %c0_i32_0 = arith.constant 0 : i32
    %c0_i32_1 = arith.constant 0 : i32
    %c0_i32_2 = arith.constant 0 : i32
    return %arg0, %c0_i32, %c0_i32_0, %c0_i32_1 : i32, i32, i32, i32
  }
  func.func @transform_1(%arg0: i32) -> (i32, i32) {
    %c0_i32 = arith.constant 0 : i32
    %c0_i32_0 = arith.constant 0 : i32
    %c0_i32_1 = arith.constant 0 : i32
    return %c0_i32, %c0_i32_0 : i32, i32
  }
  func.func @transform_2(%arg0: i32) -> (i32, i32) {
    %c0_i32 = arith.constant 0 : i32
    %c0_i32_0 = arith.constant 0 : i32
    %c0_i32_1 = arith.constant 0 : i32
    return %c0_i32, %c0_i32_0 : i32, i32
  }
  func.func @transform_3(%arg0: i32) -> (i32, i32) {
    %c0_i32 = arith.constant 0 : i32
    %c0_i32_0 = arith.constant 0 : i32
    %c0_i32_1 = arith.constant 0 : i32
    return %c0_i32, %c0_i32_0 : i32, i32
  }
  func.func @transform_4(%arg0: i32) -> (i32, i32) {
    %c0_i32 = arith.constant 0 : i32
    %c0_i32_0 = arith.constant 0 : i32
    return %arg0, %c0_i32 : i32, i32
  }
  func.func @transform_5(%arg0: i32) -> (i32, i32, i32) {
    %c0_i32 = arith.constant 0 : i32
    %c0_i32_0 = arith.constant 0 : i32
    %c0_i32_1 = arith.constant 0 : i32
    return %arg0, %c0_i32, %c0_i32_0 : i32, i32, i32
  }
}

module attributes {stable_mosaic.version = 11 : i64} {
  func.func @_bn_gapsub_residual_to_nchw_kernel(%arg0: i32, %arg1: memref<256x32xf32, #tpu.memory_space<vmem>>, %arg2: memref<1x32xf32, #tpu.memory_space<vmem>>, %arg3: memref<1x32xf32, #tpu.memory_space<vmem>>, %arg4: memref<32x128xf32, #tpu.memory_space<vmem>>, %arg5: memref<128x1xf32, #tpu.memory_space<vmem>>, %arg6: memref<1x128x1xf32, #tpu.memory_space<vmem>>, %arg7: memref<1x128x256xf32, #tpu.memory_space<vmem>>, %arg8: memref<1x128x256xf32, #tpu.memory_space<vmem>>) attributes {dimension_semantics = [#tpu.dimension_semantics<parallel>], iteration_bounds = array<i64: 2>, scalar_prefetch = 0 : i64, scratch_operands = 0 : i64, tpu.core_type = #tpu.core_type<tc>, window_params = [{transform_indices = @transform_0, window_bounds = array<i64: 256, 32>}, {pipeline_mode = #tpu.pipeline_mode<synchronous>, transform_indices = @transform_1, window_bounds = array<i64: 1, 32>}, {pipeline_mode = #tpu.pipeline_mode<synchronous>, transform_indices = @transform_2, window_bounds = array<i64: 1, 32>}, {pipeline_mode = #tpu.pipeline_mode<synchronous>, transform_indices = @transform_3, window_bounds = array<i64: 32, 128>}, {pipeline_mode = #tpu.pipeline_mode<synchronous>, transform_indices = @transform_4, window_bounds = array<i64: 128, 1>}, {transform_indices = @transform_5, window_bounds = array<i64: 1, 128, 1>}, {transform_indices = @transform_6, window_bounds = array<i64: 1, 128, 256>}, {transform_indices = @transform_7, window_bounds = array<i64: 1, 128, 256>}]} {
    %c0 = arith.constant 0 : index
    %c0_0 = arith.constant 0 : index
    %0 = vector.load %arg1[%c0, %c0_0] : memref<256x32xf32, #tpu.memory_space<vmem>>, vector<256x32xf32>
    %c0_1 = arith.constant 0 : index
    %c0_2 = arith.constant 0 : index
    %1 = vector.load %arg2[%c0_1, %c0_2] : memref<1x32xf32, #tpu.memory_space<vmem>>, vector<1x32xf32>
    %2 = vector.broadcast %1 : vector<1x32xf32> to vector<256x32xf32>
    %3 = arith.mulf %0, %2 : vector<256x32xf32>
    %c0_3 = arith.constant 0 : index
    %c0_4 = arith.constant 0 : index
    %4 = vector.load %arg3[%c0_3, %c0_4] : memref<1x32xf32, #tpu.memory_space<vmem>>, vector<1x32xf32>
    %5 = vector.broadcast %4 : vector<1x32xf32> to vector<256x32xf32>
    %6 = arith.addf %3, %5 : vector<256x32xf32>
    %cst = arith.constant 0.000000e+00 : f32
    %7 = vector.broadcast %cst : f32 to vector<256x32xf32>
    %8 = arith.maximumf %6, %7 : vector<256x32xf32>
    %c0_5 = arith.constant 0 : index
    %c0_6 = arith.constant 0 : index
    %9 = vector.load %arg4[%c0_5, %c0_6] : memref<32x128xf32, #tpu.memory_space<vmem>>, vector<32x128xf32>
    %cst_7 = arith.constant dense<0.000000e+00> : vector<256x128xf32>
    %10 = tpu.matmul %8, %9, %cst_7 {dimension_numbers = #tpu.dot_dimension_numbers<[1], [0], [0], [1], [0, 0, 1, 1], [], []>} : vector<256x32xf32>, vector<32x128xf32>, vector<256x128xf32> -> vector<256x128xf32>
    %11 = tpu.transpose %10, [1, 0] : vector<256x128xf32> -> vector<128x256xf32>
    %c0_8 = arith.constant 0 : index
    %c0_9 = arith.constant 0 : index
    %12 = vector.load %arg5[%c0_8, %c0_9] : memref<128x1xf32, #tpu.memory_space<vmem>>, vector<128x1xf32>
    %c0_10 = arith.constant 0 : index
    %c0_11 = arith.constant 0 : index
    %c0_12 = arith.constant 0 : index
    %13 = vector.load %arg6[%c0_10, %c0_11, %c0_12] : memref<1x128x1xf32, #tpu.memory_space<vmem>>, vector<1x128x1xf32>
    %14 = vector.shape_cast %13 : vector<1x128x1xf32> to vector<128x1xf32>
    %15 = vector.broadcast %14 : vector<128x1xf32> to vector<128x256xf32>
    %16 = arith.subf %11, %15 : vector<128x256xf32>
    %17 = vector.broadcast %12 : vector<128x1xf32> to vector<128x256xf32>
    %18 = arith.mulf %17, %16 : vector<128x256xf32>
    %c0_13 = arith.constant 0 : index
    %c0_14 = arith.constant 0 : index
    %c0_15 = arith.constant 0 : index
    %19 = vector.load %arg7[%c0_13, %c0_14, %c0_15] : memref<1x128x256xf32, #tpu.memory_space<vmem>>, vector<1x128x256xf32>
    %20 = vector.shape_cast %19 : vector<1x128x256xf32> to vector<128x256xf32>
    %21 = arith.addf %18, %20 : vector<128x256xf32>
    %cst_16 = arith.constant 0.000000e+00 : f32
    %22 = vector.broadcast %cst_16 : f32 to vector<128x256xf32>
    %23 = arith.maximumf %21, %22 : vector<128x256xf32>
    %c0_17 = arith.constant 0 : index
    %c0_18 = arith.constant 0 : index
    %c0_19 = arith.constant 0 : index
    %24 = vector.load %arg8[%c0_17, %c0_18, %c0_19] : memref<1x128x256xf32, #tpu.memory_space<vmem>>, vector<1x128x256xf32>
    %25 = vector.shape_cast %24 : vector<1x128x256xf32> to vector<128x256xf32>
    %26 = vector.shape_cast %23 : vector<128x256xf32> to vector<1x128x256xf32>
    tpu.vector_store %arg8[%c0_17, %c0_18, %c0_19], %26 {strides = array<i32>} : memref<1x128x256xf32, #tpu.memory_space<vmem>>, vector<1x128x256xf32>,
    return
  }
  func.func @transform_0(%arg0: i32) -> (i32, i32) {
    %c0_i32 = arith.constant 0 : i32
    %c0_i32_0 = arith.constant 0 : i32
    return %arg0, %c0_i32 : i32, i32
  }
  func.func @transform_1(%arg0: i32) -> (i32, i32) {
    %c0_i32 = arith.constant 0 : i32
    %c0_i32_0 = arith.constant 0 : i32
    %c0_i32_1 = arith.constant 0 : i32
    return %c0_i32, %c0_i32_0 : i32, i32
  }
  func.func @transform_2(%arg0: i32) -> (i32, i32) {
    %c0_i32 = arith.constant 0 : i32
    %c0_i32_0 = arith.constant 0 : i32
    %c0_i32_1 = arith.constant 0 : i32
    return %c0_i32, %c0_i32_0 : i32, i32
  }
  func.func @transform_3(%arg0: i32) -> (i32, i32) {
    %c0_i32 = arith.constant 0 : i32
    %c0_i32_0 = arith.constant 0 : i32
    %c0_i32_1 = arith.constant 0 : i32
    return %c0_i32, %c0_i32_0 : i32, i32
  }
  func.func @transform_4(%arg0: i32) -> (i32, i32) {
    %c0_i32 = arith.constant 0 : i32
    %c0_i32_0 = arith.constant 0 : i32
    %c0_i32_1 = arith.constant 0 : i32
    return %c0_i32, %c0_i32_0 : i32, i32
  }
  func.func @transform_5(%arg0: i32) -> (i32, i32, i32) {
    %c0_i32 = arith.constant 0 : i32
    %c0_i32_0 = arith.constant 0 : i32
    %c0_i32_1 = arith.constant 0 : i32
    return %arg0, %c0_i32, %c0_i32_0 : i32, i32, i32
  }
  func.func @transform_6(%arg0: i32) -> (i32, i32, i32) {
    %c0_i32 = arith.constant 0 : i32
    %c0_i32_0 = arith.constant 0 : i32
    %c0_i32_1 = arith.constant 0 : i32
    return %arg0, %c0_i32, %c0_i32_0 : i32, i32, i32
  }
  func.func @transform_7(%arg0: i32) -> (i32, i32, i32) {
    %c0_i32 = arith.constant 0 : i32
    %c0_i32_0 = arith.constant 0 : i32
    %c0_i32_1 = arith.constant 0 : i32
    return %arg0, %c0_i32, %c0_i32_0 : i32, i32, i32
  }
}

</mosaic_0001>

<llo_original>
// kernel: resbottleneck_forward.4
$region0: #{resbottleneck_forward.4}
  #allocation0 [shape = 'u32[]', space=smem, size = 0x4, offset = 0x4, fixed_abs, tag = 'smem constant byte address 0x4 - core index']
  #allocation1 [shape = 'u32[144,128]{1,0:T(1,128)}', space=vmem, size = 0x12000, scoped, tag = 'internal scratch']
  %s0 = inlined_call_operand.vmem [shape: f32[2,128,256], index: 0, kind: input, shape index: {}]
  %s1 = inlined_call_operand.vmem [shape: f32[128,32], index: 1, kind: input, shape index: {}]
  %s2 = inlined_call_operand.vmem [shape: f32[512,32], index: 2, kind: output, shape index: {0}]
  %s3 = inlined_call_operand.vmem [shape: f32[2,2,32], index: 3, kind: output, shape index: {1}]
  %4 = xla_tuple %s2, %s3
  %s5 = sld [smem:[#allocation0]]
  $region49: #{resbottleneck_forward.4} parent=0
    _
  %s7 = ssub.s32 1, %s5
  %s8 = scalar_select 0, %s7, %s5
  loop: start=0, step=1, limit=4
  $region2: #{resbottleneck_forward.4} parent=0 // loop_pre_header
    _
  $region3: #{resbottleneck_forward.4} parent=0 // loop_header
    %s10 = sphi 0, %s14
    %p11 = scmp.ge.s32.totalorder %s10, 4
    %s20 = sphi 0, %s22
    %s23 = sphi 0, %s20
    %s24 = sphi 0, %s23
    %s40 = sphi 0, %s24
    %s44 = sphi 0, %s44
    %s46 = sphi 0, %s44
    %s47 = sphi 0, %s46
    %s61 = sphi 0, %s47
    %s67 = sphi 0, %s69
    %s70 = sphi 0, %s67
    %s71 = sphi 0, %s70
    %s87 = sphi 0, %s71
    %s93 = sphi 0, %s95
    %s96 = sphi 0, %s93
    %s97 = sphi 0, %s96
    %s113 = sphi 0, %s97
  $region4: #{resbottleneck_forward.4} parent=0 // loop_header_branch
    %13 = sbr.rel (%p11) target = $region8
  $region5: #{resbottleneck_forward.4} parent=0 // loop_body
    %s15 = ssub.s32 %s10, 1
    %s16 = ssub.s32 %s10, 2
    %s17 = sadd.s32 %s10, 1
    %s18 = ssub.s32 %s10, %s17
    %p19 = scmp.eq.s32.totalorder %s18, 0
    %s21 = sadd.s32 %s20, 1
    %s22 = scalar_select %p19, %s20, %s21
    %p25 = pneg %p19
    %p26 = scmp.eq.s32.totalorder %s10, 1
    %p27 = por %p25, %p26
    %p28 = scmp.ne.s32.totalorder %s20, %s23
    %p29 = scmp.eq.s32.totalorder %s10, 0
    %p30 = por %p28, %p29
    %p31 = scmp.ne.s32.totalorder %s20, %s23
    %p32 = scmp.eq.s32.totalorder %s15, 1
    %p33 = por %p31, %p32
    %p34 = scmp.ne.s32.totalorder %s23, %s24
    %p35 = scmp.eq.s32.totalorder %s15, 0
    %p36 = por %p34, %p35
    %p37 = scmp.ne.s32.totalorder %s23, %s24
    %p38 = scmp.eq.s32.totalorder %s16, 1
    %p39 = por %p37, %p38
    %p41 = scmp.ne.s32.totalorder %s24, %s40
    %p42 = scmp.eq.s32.totalorder %s16, 0
    %p43 = por %p41, %p42
    %s45 = sadd.s32 %s44, 1
    %p48 = scmp.eq.s32.totalorder %s10, 1
    %p49 = scmp.ne.s32.totalorder %s44, %s46
    %p50 = scmp.eq.s32.totalorder %s10, 0
    %p51 = por %p49, %p50
    %p52 = scmp.ne.s32.totalorder %s44, %s46
    %p53 = scmp.eq.s32.totalorder %s15, 1
    %p54 = por %p52, %p53
    %p55 = scmp.ne.s32.totalorder %s46, %s47
    %p56 = scmp.eq.s32.totalorder %s15, 0
    %p57 = por %p55, %p56
    %p58 = scmp.ne.s32.totalorder %s46, %s47
    %p59 = scmp.eq.s32.totalorder %s16, 1
    %p60 = por %p58, %p59
    %p62 = scmp.ne.s32.totalorder %s47, %s61
    %p63 = scmp.eq.s32.totalorder %s16, 0
    %p64 = por %p62, %p63
    %s65 = ssub.s32 %s10, %s17
    %p66 = scmp.eq.s32.totalorder %s65, 0
    %s68 = sadd.s32 %s67, 1
    %s69 = scalar_select %p66, %s67, %s68
    %p72 = pneg %p66
    %p73 = scmp.eq.s32.totalorder %s10, 1
    %p74 = por %p72, %p73
    %p75 = scmp.ne.s32.totalorder %s67, %s70
    %p76 = scmp.eq.s32.totalorder %s10, 0
    %p77 = por %p75, %p76
    %p78 = scmp.ne.s32.totalorder %s67, %s70
    %p79 = scmp.eq.s32.totalorder %s15, 1
    %p80 = por %p78, %p79
    %p81 = scmp.ne.s32.totalorder %s70, %s71
    %p82 = scmp.eq.s32.totalorder %s15, 0
    %p83 = por %p81, %p82
    %p84 = scmp.ne.s32.totalorder %s70, %s71
    %p85 = scmp.eq.s32.totalorder %s16, 1
    %p86 = por %p84, %p85
    %p88 = scmp.ne.s32.totalorder %s71, %s87
    %p89 = scmp.eq.s32.totalorder %s16, 0
    %p90 = por %p88, %p89
    %s91 = ssub.s32 %s10, %s17
    %p92 = scmp.eq.s32.totalorder %s91, 0
    %s94 = sadd.s32 %s93, 1
    %s95 = scalar_select %p92, %s93, %s94
    %p98 = pneg %p92
    %p99 = scmp.eq.s32.totalorder %s10, 1
    %p100 = por %p98, %p99
    %p101 = scmp.ne.s32.totalorder %s93, %s96
    %p102 = scmp.eq.s32.totalorder %s10, 0
    %p103 = por %p101, %p102
    %p104 = scmp.ne.s32.totalorder %s93, %s96
    %p105 = scmp.eq.s32.totalorder %s15, 1
    %p106 = por %p104, %p105
    %p107 = scmp.ne.s32.totalorder %s96, %s97
    %p108 = scmp.eq.s32.totalorder %s15, 0
    %p109 = por %p107, %p108
    %p110 = scmp.ne.s32.totalorder %s96, %s97
    %p111 = scmp.eq.s32.totalorder %s16, 1
    %p112 = por %p110, %p111
    %p114 = scmp.ne.s32.totalorder %s97, %s113
    %p115 = scmp.eq.s32.totalorder %s16, 0
    %p116 = por %p114, %p115
    %p117 = scmp.le.s32.totalorder 1, %s10
    %p118 = scmp.lt.s32.totalorder %s10, 3
    %p119 = pnand %p117, %p118
    %p120 = pneg %p119
    // Predicated region
    $region9: #{resbottleneck_forward.4} parent=5 // pred_check
      _
    $region10: #{resbottleneck_forward.4} parent=5 // pred_check_branch
      %122 = sbr.rel (%p119) target = $region12
    $region11: #{resbottleneck_forward.4} parent=5 // pred_region
      %s123 = ssub.s32 %s10, 1
      // Predicated region
      $region13: #{resbottleneck_forward.4} parent=11 // pred_check
        %p124 = pneg %p57
      $region14: #{resbottleneck_forward.4} parent=11 // pred_check_branch
        %126 = sbr.rel (%p124) target = $region16
      $region15: #{resbottleneck_forward.4} parent=11 // pred_region
        _
      $region16: #{resbottleneck_forward.4} parent=11 // pred_fallthru
        _
    $region12: #{resbottleneck_forward.4} parent=5 // pred_fallthru
      _
    %p127 = scmp.lt.s32.totalorder %s10, 2
    // Predicated region
    $region17: #{resbottleneck_forward.4} parent=5 // pred_check
      %p128 = pneg %p127
    $region18: #{resbottleneck_forward.4} parent=5 // pred_check_branch
      %130 = sbr.rel (%p128) target = $region20
    $region19: #{resbottleneck_forward.4} parent=5 // pred_region
      // Predicated region
      $region21: #{resbottleneck_forward.4} parent=19 // pred_check
        %p131 = pneg %p30
      $region22: #{resbottleneck_forward.4} parent=19 // pred_check_branch
        %133 = sbr.rel (%p131) target = $region24
      $region23: #{resbottleneck_forward.4} parent=19 // pred_region
        %p134 = scmp.lt.s32.totalorder %s10, 1
        %s135 = scalar_select %p134, %s10, 1
        %s136 = smul.addr %s135, 32
        %s137 = smul.addr %s136, 8
        %s138 = scalar_lea.vmem %s0, %s137
      $region24: #{resbottleneck_forward.4} parent=19 // pred_fallthru
        _
    $region20: #{resbottleneck_forward.4} parent=5 // pred_fallthru
      _
    %p139 = scmp.le.s32.totalorder 1, %s10
    %p140 = scmp.lt.s32.totalorder %s10, 3
    %p141 = pnand %p139, %p140
    %p142 = pneg %p141
    // Predicated region
    $region25: #{resbottleneck_forward.4} parent=5 // pred_check
      _
    $region26: #{resbottleneck_forward.4} parent=5 // pred_check_branch
      %144 = sbr.rel (%p141) target = $region28
    $region27: #{resbottleneck_forward.4} parent=5 // pred_region
      %s145 = ssub.s32 %s10, 1
      %p146 = scmp.lt.s32.totalorder %s15, 1
      %s147 = scalar_select %p146, %s15, 1
      %s148 = smul.addr %s147, 32
      %s149 = smul.addr %s148, 8
      %s150 = scalar_lea.vmem %s0, %s149
      %p151 = pneg %p36
      %p152 = pneg %p33
      %p153 = pneg %p57
      %p154 = pneg %p54
      %p155 = pneg %p83
      %p156 = pneg %p80
      %s157 = smul.u32 32, %s15
      %p158 = scmp.lt.s32.totalorder %s157, 63
      %s159 = scalar_select %p158, %s157, 63
      %s160 = smul.addr %s159, 8
      %s161 = scalar_lea.vmem %s2, %s160
      %p162 = pneg %p109
      %p163 = pneg %p106
      %p164 = scmp.lt.s32.totalorder %s15, 1
      %s165 = scalar_select %p164, %s15, 1
      %s166 = smul.addr %s165, 2
      %s167 = scalar_lea.vmem %s3, %s166
      %p168 = scmp.lt.s32.totalorder %s15, 1
      %s169 = scalar_select %p168, %s15, 1
      %s170 = smul.addr %s169, 32
      %s171 = smul.addr %s170, 8
      %s172 = scalar_lea.vmem %s0, %s171
      %s173 = smul.u32 32, %s15
      %p174 = scmp.lt.s32.totalorder %s173, 63
      %s175 = scalar_select %p174, %s173, 63
      %s176 = smul.addr %s175, 8
      %s177 = scalar_lea.vmem %s2, %s176
      %s178 = smul.u32 32, %s15
      %p179 = scmp.lt.s32.totalorder %s15, 1
      %s180 = scalar_select %p179, %s15, 1
      %s181 = smul.addr %s180, 2
      %s182 = scalar_lea.vmem %s3, %s181
      %v183 = vld [vmem:[%s172] sm:$0xff]
      %v184 = vld [vmem:[%s172 + $0x8] sm:$0xff]
      %v185 = vld [vmem:[%s172 + $0x10] sm:$0xff]
      %v186 = vld [vmem:[%s172 + $0x18] sm:$0xff]
      %v187 = vld [vmem:[%s172 + $0x20] sm:$0xff]
      %v188 = vld [vmem:[%s172 + $0x28] sm:$0xff]
      %v189 = vld [vmem:[%s172 + $0x30] sm:$0xff]
      %v190 = vld [vmem:[%s172 + $0x38] sm:$0xff]
      %v191 = vld [vmem:[%s172 + $0x40] sm:$0xff]
      %v192 = vld [vmem:[%s172 + $0x48] sm:$0xff]
      %v193 = vld [vmem:[%s172 + $0x50] sm:$0xff]
      %v194 = vld [vmem:[%s172 + $0x58] sm:$0xff]
      %v195 = vld [vmem:[%s172 + $0x60] sm:$0xff]
      %v196 = vld [vmem:[%s172 + $0x68] sm:$0xff]
      %v197 = vld [vmem:[%s172 + $0x70] sm:$0xff]
      %v198 = vld [vmem:[%s172 + $0x78] sm:$0xff]
      %v199 = vld [vmem:[%s172 + $0x80] sm:$0xff]
      %v200 = vld [vmem:[%s172 + $0x88] sm:$0xff]
      %v201 = vld [vmem:[%s172 + $0x90] sm:$0xff]
      %v202 = vld [vmem:[%s172 + $0x98] sm:$0xff]
      %v203 = vld [vmem:[%s172 + $0xa0] sm:$0xff]
      %v204 = vld [vmem:[%s172 + $0xa8] sm:$0xff]
      %v205 = vld [vmem:[%s172 + $0xb0] sm:$0xff]
      %v206 = vld [vmem:[%s172 + $0xb8] sm:$0xff]
      %v207 = vld [vmem:[%s172 + $0xc0] sm:$0xff]
      %v208 = vld [vmem:[%s172 + $0xc8] sm:$0xff]
      %v209 = vld [vmem:[%s172 + $0xd0] sm:$0xff]
      %v210 = vld [vmem:[%s172 + $0xd8] sm:$0xff]
      %v211 = vld [vmem:[%s172 + $0xe0] sm:$0xff]
      %v212 = vld [vmem:[%s172 + $0xe8] sm:$0xff]
      %v213 = vld [vmem:[%s172 + $0xf0] sm:$0xff]
      %v214 = vld [vmem:[%s172 + $0xf8] sm:$0xff]
      %215 = vxpose.xlu0.b32.start [1/16] %v183, 128
      %216 = vxpose.xlu0.b32.cont [2/16] %v185, 128
      %217 = vxpose.xlu0.b32.cont [3/16] %v187, 128
      %218 = vxpose.xlu0.b32.cont [4/16] %v189, 128
      %219 = vxpose.xlu0.b32.cont [5/16] %v191, 128
      %220 = vxpose.xlu0.b32.cont [6/16] %v193, 128
      %221 = vxpose.xlu0.b32.cont [7/16] %v195, 128
      %222 = vxpose.xlu0.b32.cont [8/16] %v197, 128
      %223 = vxpose.xlu0.b32.cont [9/16] %v199, 128
      %224 = vxpose.xlu0.b32.cont [10/16] %v201, 128
      %225 = vxpose.xlu0.b32.cont [11/16] %v203, 128
      %226 = vxpose.xlu0.b32.cont [12/16] %v205, 128
      %227 = vxpose.xlu0.b32.cont [13/16] %v207, 128
      %228 = vxpose.xlu0.b32.cont [14/16] %v209, 128
      %229 = vxpose.xlu0.b32.cont [15/16] %v211, 128
      %230 = vxpose.xlu0.b32.end [16/16] %v213, 128
      %v231 = vpop.trf.xlu0
      %v232 = vpop.trf.xlu0
      %v233 = vpop.trf.xlu0
      %v234 = vpop.trf.xlu0
      %v235 = vpop.trf.xlu0
      %v236 = vpop.trf.xlu0
      %v237 = vpop.trf.xlu0
      %v238 = vpop.trf.xlu0
      %v239 = vpop.trf.xlu0
      %v240 = vpop.trf.xlu0
      %v241 = vpop.trf.xlu0
      %v242 = vpop.trf.xlu0
      %v243 = vpop.trf.xlu0
      %v244 = vpop.trf.xlu0
      %v245 = vpop.trf.xlu0
      %v246 = vpop.trf.xlu0
      %247 = vxpose.xlu0.b32.start [1/16] %v184, 128
      %248 = vxpose.xlu0.b32.cont [2/16] %v186, 128
      %249 = vxpose.xlu0.b32.cont [3/16] %v188, 128
      %250 = vxpose.xlu0.b32.cont [4/16] %v190, 128
      %251 = vxpose.xlu0.b32.cont [5/16] %v192, 128
      %252 = vxpose.xlu0.b32.cont [6/16] %v194, 128
      %253 = vxpose.xlu0.b32.cont [7/16] %v196, 128
      %254 = vxpose.xlu0.b32.cont [8/16] %v198, 128
      %255 = vxpose.xlu0.b32.cont [9/16] %v200, 128
      %256 = vxpose.xlu0.b32.cont [10/16] %v202, 128
      %257 = vxpose.xlu0.b32.cont [11/16] %v204, 128
      %258 = vxpose.xlu0.b32.cont [12/16] %v206, 128
      %259 = vxpose.xlu0.b32.cont [13/16] %v208, 128
      %260 = vxpose.xlu0.b32.cont [14/16] %v210, 128
      %261 = vxpose.xlu0.b32.cont [15/16] %v212, 128
      %262 = vxpose.xlu0.b32.end [16/16] %v214, 128
      %v263 = vpop.trf.xlu0
      %v264 = vpop.trf.xlu0
      %v265 = vpop.trf.xlu0
      %v266 = vpop.trf.xlu0
      %v267 = vpop.trf.xlu0
      %v268 = vpop.trf.xlu0
      %v269 = vpop.trf.xlu0
      %v270 = vpop.trf.xlu0
      %v271 = vpop.trf.xlu0
      %v272 = vpop.trf.xlu0
      %v273 = vpop.trf.xlu0
      %v274 = vpop.trf.xlu0
      %v275 = vpop.trf.xlu0
      %v276 = vpop.trf.xlu0
      %v277 = vpop.trf.xlu0
      %v278 = vpop.trf.xlu0
      %v279 = vld [vmem:[%s1] sm:$0xff]
      %v280 = vld [vmem:[%s1 + $0x8] sm:$0xff]
      %v281 = vld [vmem:[%s1 + $0x10] sm:$0xff]
      %v282 = vld [vmem:[%s1 + $0x18] sm:$0xff]
      %v283 = vld [vmem:[%s1 + $0x20] sm:$0xff]
      %v284 = vld [vmem:[%s1 + $0x28] sm:$0xff]
      %v285 = vld [vmem:[%s1 + $0x30] sm:$0xff]
      %v286 = vld [vmem:[%s1 + $0x38] sm:$0xff]
      %v287 = vld [vmem:[%s1 + $0x40] sm:$0xff]
      %v288 = vld [vmem:[%s1 + $0x48] sm:$0xff]
      %v289 = vld [vmem:[%s1 + $0x50] sm:$0xff]
      %v290 = vld [vmem:[%s1 + $0x58] sm:$0xff]
      %v291 = vld [vmem:[%s1 + $0x60] sm:$0xff]
      %v292 = vld [vmem:[%s1 + $0x68] sm:$0xff]
      %v293 = vld [vmem:[%s1 + $0x70] sm:$0xff]
      %v294 = vld [vmem:[%s1 + $0x78] sm:$0xff]
      %295 = vmatprep.subr.mxu0 0.0
      %296 = vmatpush1.msra.mxu0 %v279
      %297 = vmatprep.subr.mxu0 0.0
      %298 = vmatpush1.msra.mxu0 %v280
      %299 = vmatprep.subr.mxu0 0.0
      %300 = vmatpush1.msra.mxu0 %v281
      %301 = vmatprep.subr.mxu0 0.0
      %302 = vmatpush1.msra.mxu0 %v282
      %303 = vmatprep.subr.mxu0 0.0
      %304 = vmatpush1.msra.mxu0 %v283
      %305 = vmatprep.subr.mxu0 0.0
      %306 = vmatpush1.msra.mxu0 %v284
      %307 = vmatprep.subr.mxu0 0.0
      %308 = vmatpush1.msra.mxu0 %v285
      %309 = vmatprep.subr.mxu0 0.0
      %310 = vmatpush1.msra.mxu0 %v286
      %311 = vmatprep.subr.mxu0 0.0
      %312 = vmatpush1.msra.mxu0 %v287
      %313 = vmatprep.subr.mxu0 0.0
      %314 = vmatpush1.msra.mxu0 %v288
      %315 = vmatprep.subr.mxu0 0.0
      %316 = vmatpush1.msra.mxu0 %v289
      %317 = vmatprep.subr.mxu0 0.0
      %318 = vmatpush1.msra.mxu0 %v290
      %319 = vmatprep.subr.mxu0 0.0
      %320 = vmatpush1.msra.mxu0 %v291
      %321 = vmatprep.subr.mxu0 0.0
      %322 = vmatpush1.msra.mxu0 %v292
      %323 = vmatprep.subr.mxu0 0.0
      %324 = vmatpush1.msra.mxu0 %v293
      %325 = vmatprep.subr.mxu0 0.0
      %326 = vmatpush1.msra.mxu0 %v294
      %327 = vmatprep.subr.mxu0 0.0
      %328 = vmatpush1.msra.mxu0 0.0
      %329 = vmatprep.subr.mxu0 0.0
      %330 = vmatpush1.msra.mxu0 0.0
      %331 = vmatprep.subr.mxu0 0.0
      %332 = vmatpush1.msra.mxu0 0.0
      %333 = vmatprep.subr.mxu0 0.0
      %334 = vmatpush1.msra.mxu0 0.0
      %335 = vmatprep.subr.mxu0 0.0
      %336 = vmatpush1.msra.mxu0 0.0
      %337 = vmatprep.subr.mxu0 0.0
      %338 = vmatpush1.msra.mxu0 0.0
      %339 = vmatprep.subr.mxu0 0.0
      %340 = vmatpush1.msra.mxu0 0.0
      %341 = vmatprep.subr.mxu0 0.0
      %342 = vmatpush1.msra.mxu0 0.0
      %343 = vmatprep.subr.mxu0 0.0
      %344 = vmatpush1.msra.mxu0 0.0
      %345 = vmatprep.subr.mxu0 0.0
      %346 = vmatpush1.msra.mxu0 0.0
      %347 = vmatprep.subr.mxu0 0.0
      %348 = vmatpush1.msra.mxu0 0.0
      %349 = vmatprep.subr.mxu0 0.0
      %350 = vmatpush1.msra.mxu0 0.0
      %351 = vmatprep.subr.mxu0 0.0
      %352 = vmatpush1.msra.mxu0 0.0
      %353 = vmatprep.subr.mxu0 0.0
      %354 = vmatpush1.msra.mxu0 0.0
      %355 = vmatprep.subr.mxu0 0.0
      %356 = vmatpush1.msra.mxu0 0.0
      %357 = vmatprep.subr.mxu0 0.0
      %358 = vmatpush1.msra.mxu0 0.0
      %359 = vmatprep.mubr.f32.mxu0 0.0
      %360 = vmatmul.mubr.f32.gmra.mrb[0].mxu0 %v231
      %v361 = vpop.f32.mrb[0].mxu0
      %v362 = vadd.f32 0.0, %v361
      %v363 = vpop.f32.mrb[0].mxu0
      %364 = vmatprep.mubr.f32.mxu0 0.0
      %365 = vmatmul.mubr.f32.gmra.mrb[0].mxu0 %v232
      %v366 = vpop.f32.mrb[0].mxu0
      %v367 = vadd.f32 0.0, %v366
      %v368 = vpop.f32.mrb[0].mxu0
      %369 = vmatprep.mubr.f32.mxu0 0.0
      %370 = vmatmul.mubr.f32.gmra.mrb[0].mxu0 %v233
      %v371 = vpop.f32.mrb[0].mxu0
      %v372 = vadd.f32 0.0, %v371
      %v373 = vpop.f32.mrb[0].mxu0
      %374 = vmatprep.mubr.f32.mxu0 0.0
      %375 = vmatmul.mubr.f32.gmra.mrb[0].mxu0 %v234
      %v376 = vpop.f32.mrb[0].mxu0
      %v377 = vadd.f32 0.0, %v376
      %v378 = vpop.f32.mrb[0].mxu0
      %379 = vmatprep.mubr.f32.mxu0 0.0
      %380 = vmatmul.mubr.f32.gmra.mrb[0].mxu0 %v235
      %v381 = vpop.f32.mrb[0].mxu0
      %v382 = vadd.f32 0.0, %v381
      %v383 = vpop.f32.mrb[0].mxu0
      %384 = vmatprep.mubr.f32.mxu0 0.0
      %385 = vmatmul.mubr.f32.gmra.mrb[0].mxu0 %v236
      %v386 = vpop.f32.mrb[0].mxu0
      %v387 = vadd.f32 0.0, %v386
      %v388 = vpop.f32.mrb[0].mxu0
      %389 = vmatprep.mubr.f32.mxu0 0.0
      %390 = vmatmul.mubr.f32.gmra.mrb[0].mxu0 %v237
      %v391 = vpop.f32.mrb[0].mxu0
      %v392 = vadd.f32 0.0, %v391
      %v393 = vpop.f32.mrb[0].mxu0
      %394 = vmatprep.mubr.f32.mxu0 0.0
      %395 = vmatmul.mubr.f32.gmra.mrb[0].mxu0 %v238
      %v396 = vpop.f32.mrb[0].mxu0
      %v397 = vadd.f32 0.0, %v396
      %v398 = vpop.f32.mrb[0].mxu0
      %399 = vmatprep.mubr.f32.mxu0 0.0
      %400 = vmatmul.mubr.f32.gmra.mrb[0].mxu0 %v239
      %v401 = vpop.f32.mrb[0].mxu0
      %v402 = vadd.f32 0.0, %v401
      %v403 = vpop.f32.mrb[0].mxu0
      %404 = vmatprep.mubr.f32.mxu0 0.0
      %405 = vmatmul.mubr.f32.gmra.mrb[0].mxu0 %v240
      %v406 = vpop.f32.mrb[0].mxu0
      %v407 = vadd.f32 0.0, %v406
      %v408 = vpop.f32.mrb[0].mxu0
      %409 = vmatprep.mubr.f32.mxu0 0.0
      %410 = vmatmul.mubr.f32.gmra.mrb[0].mxu0 %v241
      %v411 = vpop.f32.mrb[0].mxu0
      %v412 = vadd.f32 0.0, %v411
      %v413 = vpop.f32.mrb[0].mxu0
      %414 = vmatprep.mubr.f32.mxu0 0.0
      %415 = vmatmul.mubr.f32.gmra.mrb[0].mxu0 %v242
      %v416 = vpop.f32.mrb[0].mxu0
      %v417 = vadd.f32 0.0, %v416
      %v418 = vpop.f32.mrb[0].mxu0
      %419 = vmatprep.mubr.f32.mxu0 0.0
      %420 = vmatmul.mubr.f32.gmra.mrb[0].mxu0 %v243
      %v421 = vpop.f32.mrb[0].mxu0
      %v422 = vadd.f32 0.0, %v421
      %v423 = vpop.f32.mrb[0].mxu0
      %424 = vmatprep.mubr.f32.mxu0 0.0
      %425 = vmatmul.mubr.f32.gmra.mrb[0].mxu0 %v244
      %v426 = vpop.f32.mrb[0].mxu0
      %v427 = vadd.f32 0.0, %v426
      %v428 = vpop.f32.mrb[0].mxu0
      %429 = vmatprep.mubr.f32.mxu0 0.0
      %430 = vmatmul.mubr.f32.gmra.mrb[0].mxu0 %v245
      %v431 = vpop.f32.mrb[0].mxu0
      %v432 = vadd.f32 0.0, %v431
      %v433 = vpop.f32.mrb[0].mxu0
      %434 = vmatprep.mubr.f32.mxu0 0.0
      %435 = vmatmul.mubr.f32.gmra.mrb[0].mxu0 %v246
      %v436 = vpop.f32.mrb[0].mxu0
      %v437 = vadd.f32 0.0, %v436
      %v438 = vpop.f32.mrb[0].mxu0
      %439 = vmatprep.mubr.f32.mxu0 0.0
      %440 = vmatmul.mubr.f32.gmra.mrb[0].mxu0 %v263
      %v441 = vpop.f32.mrb[0].mxu0
      %v442 = vadd.f32 0.0, %v441
      %v443 = vpop.f32.mrb[0].mxu0
      %444 = vmatprep.mubr.f32.mxu0 0.0
      %445 = vmatmul.mubr.f32.gmra.mrb[0].mxu0 %v264
      %v446 = vpop.f32.mrb[0].mxu0
      %v447 = vadd.f32 0.0, %v446
      %v448 = vpop.f32.mrb[0].mxu0
      %449 = vmatprep.mubr.f32.mxu0 0.0
      %450 = vmatmul.mubr.f32.gmra.mrb[0].mxu0 %v265
      %v451 = vpop.f32.mrb[0].mxu0
      %v452 = vadd.f32 0.0, %v451
      %v453 = vpop.f32.mrb[0].mxu0
      %454 = vmatprep.mubr.f32.mxu0 0.0
      %455 = vmatmul.mubr.f32.gmra.mrb[0].mxu0 %v266
      %v456 = vpop.f32.mrb[0].mxu0
      %v457 = vadd.f32 0.0, %v456
      %v458 = vpop.f32.mrb[0].mxu0
      %459 = vmatprep.mubr.f32.mxu0 0.0
      %460 = vmatmul.mubr.f32.gmra.mrb[0].mxu0 %v267
      %v461 = vpop.f32.mrb[0].mxu0
      %v462 = vadd.f32 0.0, %v461
      %v463 = vpop.f32.mrb[0].mxu0
      %464 = vmatprep.mubr.f32.mxu0 0.0
      %465 = vmatmul.mubr.f32.gmra.mrb[0].mxu0 %v268
      %v466 = vpop.f32.mrb[0].mxu0
      %v467 = vadd.f32 0.0, %v466
      %v468 = vpop.f32.mrb[0].mxu0
      %469 = vmatprep.mubr.f32.mxu0 0.0
      %470 = vmatmul.mubr.f32.gmra.mrb[0].mxu0 %v269
      %v471 = vpop.f32.mrb[0].mxu0
      %v472 = vadd.f32 0.0, %v471
      %v473 = vpop.f32.mrb[0].mxu0
      %474 = vmatprep.mubr.f32.mxu0 0.0
      %475 = vmatmul.mubr.f32.gmra.mrb[0].mxu0 %v270
      %v476 = vpop.f32.mrb[0].mxu0
      %v477 = vadd.f32 0.0, %v476
      %v478 = vpop.f32.mrb[0].mxu0
      %479 = vmatprep.mubr.f32.mxu0 0.0
      %480 = vmatmul.mubr.f32.gmra.mrb[0].mxu0 %v271
      %v481 = vpop.f32.mrb[0].mxu0
      %v482 = vadd.f32 0.0, %v481
      %v483 = vpop.f32.mrb[0].mxu0
      %484 = vmatprep.mubr.f32.mxu0 0.0
      %485 = vmatmul.mubr.f32.gmra.mrb[0].mxu0 %v272
      %v486 = vpop.f32.mrb[0].mxu0
      %v487 = vadd.f32 0.0, %v486
      %v488 = vpop.f32.mrb[0].mxu0
      %489 = vmatprep.mubr.f32.mxu0 0.0
      %490 = vmatmul.mubr.f32.gmra.mrb[0].mxu0 %v273
      %v491 = vpop.f32.mrb[0].mxu0
      %v492 = vadd.f32 0.0, %v491
      %v493 = vpop.f32.mrb[0].mxu0
      %494 = vmatprep.mubr.f32.mxu0 0.0
      %495 = vmatmul.mubr.f32.gmra.mrb[0].mxu0 %v274
      %v496 = vpop.f32.mrb[0].mxu0
      %v497 = vadd.f32 0.0, %v496
      %v498 = vpop.f32.mrb[0].mxu0
      %499 = vmatprep.mubr.f32.mxu0 0.0
      %500 = vmatmul.mubr.f32.gmra.mrb[0].mxu0 %v275
      %v501 = vpop.f32.mrb[0].mxu0
      %v502 = vadd.f32 0.0, %v501
      %v503 = vpop.f32.mrb[0].mxu0
      %504 = vmatprep.mubr.f32.mxu0 0.0
      %505 = vmatmul.mubr.f32.gmra.mrb[0].mxu0 %v276
      %v506 = vpop.f32.mrb[0].mxu0
      %v507 = vadd.f32 0.0, %v506
      %v508 = vpop.f32.mrb[0].mxu0
      %509 = vmatprep.mubr.f32.mxu0 0.0
      %510 = vmatmul.mubr.f32.gmra.mrb[0].mxu0 %v277
      %v511 = vpop.f32.mrb[0].mxu0
      %v512 = vadd.f32 0.0, %v511
      %v513 = vpop.f32.mrb[0].mxu0
      %514 = vmatprep.mubr.f32.mxu0 0.0
      %515 = vmatmul.mubr.f32.gmra.mrb[0].mxu0 %v278
      %v516 = vpop.f32.mrb[0].mxu0
      %v517 = vadd.f32 0.0, %v516
      %v518 = vpop.f32.mrb[0].mxu0
      %519 = vdwg.mxu0
      %vm520 = vcmask 261120
      %521 = vst.msk [vmem:[%s177] sm:$0xff] %vm520, %v362
      %522 = vst.msk [vmem:[%s177 + $0x8] sm:$0xff] %vm520, %v367
      %523 = vst.msk [vmem:[%s177 + $0x10] sm:$0xff] %vm520, %v372
      %524 = vst.msk [vmem:[%s177 + $0x18] sm:$0xff] %vm520, %v377
      %525 = vst.msk [vmem:[%s177 + $0x20] sm:$0xff] %vm520, %v382
      %526 = vst.msk [vmem:[%s177 + $0x28] sm:$0xff] %vm520, %v387
      %527 = vst.msk [vmem:[%s177 + $0x30] sm:$0xff] %vm520, %v392
      %528 = vst.msk [vmem:[%s177 + $0x38] sm:$0xff] %vm520, %v397
      %529 = vst.msk [vmem:[%s177 + $0x40] sm:$0xff] %vm520, %v402
      %530 = vst.msk [vmem:[%s177 + $0x48] sm:$0xff] %vm520, %v407
      %531 = vst.msk [vmem:[%s177 + $0x50] sm:$0xff] %vm520, %v412
      %532 = vst.msk [vmem:[%s177 + $0x58] sm:$0xff] %vm520, %v417
      %533 = vst.msk [vmem:[%s177 + $0x60] sm:$0xff] %vm520, %v422
      %534 = vst.msk [vmem:[%s177 + $0x68] sm:$0xff] %vm520, %v427
      %535 = vst.msk [vmem:[%s177 + $0x70] sm:$0xff] %vm520, %v432
      %536 = vst.msk [vmem:[%s177 + $0x78] sm:$0xff] %vm520, %v437
      %537 = vst.msk [vmem:[%s177 + $0x80] sm:$0xff] %vm520, %v442
      %538 = vst.msk [vmem:[%s177 + $0x88] sm:$0xff] %vm520, %v447
      %539 = vst.msk [vmem:[%s177 + $0x90] sm:$0xff] %vm520, %v452
      %540 = vst.msk [vmem:[%s177 + $0x98] sm:$0xff] %vm520, %v457
      %541 = vst.msk [vmem:[%s177 + $0xa0] sm:$0xff] %vm520, %v462
      %542 = vst.msk [vmem:[%s177 + $0xa8] sm:$0xff] %vm520, %v467
      %543 = vst.msk [vmem:[%s177 + $0xb0] sm:$0xff] %vm520, %v472
      %544 = vst.msk [vmem:[%s177 + $0xb8] sm:$0xff] %vm520, %v477
      %545 = vst.msk [vmem:[%s177 + $0xc0] sm:$0xff] %vm520, %v482
      %546 = vst.msk [vmem:[%s177 + $0xc8] sm:$0xff] %vm520, %v487
      %547 = vst.msk [vmem:[%s177 + $0xd0] sm:$0xff] %vm520, %v492
      %548 = vst.msk [vmem:[%s177 + $0xd8] sm:$0xff] %vm520, %v497
      %549 = vst.msk [vmem:[%s177 + $0xe0] sm:$0xff] %vm520, %v502
      %550 = vst.msk [vmem:[%s177 + $0xe8] sm:$0xff] %vm520, %v507
      %551 = vst.msk [vmem:[%s177 + $0xf0] sm:$0xff] %vm520, %v512
      %552 = vst.msk [vmem:[%s177 + $0xf8] sm:$0xff] %vm520, %v517
      %v553 = vsel %vm520, %v362, 0.0
      %v554 = vsel %vm520, %v367, 0.0
      %v555 = vadd.f32 %v553, %v554
      %v556 = vsel %vm520, %v372, 0.0
      %v557 = vadd.f32 %v555, %v556
      %v558 = vsel %vm520, %v377, 0.0
      %v559 = vadd.f32 %v557, %v558
      %v560 = vsel %vm520, %v382, 0.0
      %v561 = vadd.f32 %v559, %v560
      %v562 = vsel %vm520, %v387, 0.0
      %v563 = vadd.f32 %v561, %v562
      %v564 = vsel %vm520, %v392, 0.0
      %v565 = vadd.f32 %v563, %v564
      %v566 = vsel %vm520, %v397, 0.0
      %v567 = vadd.f32 %v565, %v566
      %v568 = vsel %vm520, %v402, 0.0
      %v569 = vadd.f32 %v567, %v568
      %v570 = vsel %vm520, %v407, 0.0
      %v571 = vadd.f32 %v569, %v570
      %v572 = vsel %vm520, %v412, 0.0
      %v573 = vadd.f32 %v571, %v572
      %v574 = vsel %vm520, %v417, 0.0
      %v575 = vadd.f32 %v573, %v574
      %v576 = vsel %vm520, %v422, 0.0
      %v577 = vadd.f32 %v575, %v576
      %v578 = vsel %vm520, %v427, 0.0
      %v579 = vadd.f32 %v577, %v578
      %v580 = vsel %vm520, %v432, 0.0
      %v581 = vadd.f32 %v579, %v580
      %v582 = vsel %vm520, %v437, 0.0
      %v583 = vadd.f32 %v581, %v582
      %v584 = vsel %vm520, %v442, 0.0
      %v585 = vadd.f32 %v583, %v584
      %v586 = vsel %vm520, %v447, 0.0
      %v587 = vadd.f32 %v585, %v586
      %v588 = vsel %vm520, %v452, 0.0
      %v589 = vadd.f32 %v587, %v588
      %v590 = vsel %vm520, %v457, 0.0
      %v591 = vadd.f32 %v589, %v590
      %v592 = vsel %vm520, %v462, 0.0
      %v593 = vadd.f32 %v591, %v592
      %v594 = vsel %vm520, %v467, 0.0
      %v595 = vadd.f32 %v593, %v594
      %v596 = vsel %vm520, %v472, 0.0
      %v597 = vadd.f32 %v595, %v596
      %v598 = vsel %vm520, %v477, 0.0
      %v599 = vadd.f32 %v597, %v598
      %v600 = vsel %vm520, %v482, 0.0
      %v601 = vadd.f32 %v599, %v600
      %v602 = vsel %vm520, %v487, 0.0
      %v603 = vadd.f32 %v601, %v602
      %v604 = vsel %vm520, %v492, 0.0
      %v605 = vadd.f32 %v603, %v604
      %v606 = vsel %vm520, %v497, 0.0
      %v607 = vadd.f32 %v605, %v606
      %v608 = vsel %vm520, %v502, 0.0
      %v609 = vadd.f32 %v607, %v608
      %v610 = vsel %vm520, %v507, 0.0
      %v611 = vadd.f32 %v609, %v610
      %v612 = vsel %vm520, %v512, 0.0
      %v613 = vadd.f32 %v611, %v612
      %v614 = vsel %vm520, %v517, 0.0
      %v615 = vadd.f32 %v613, %v614
      %v616 = vrot.slane %v615, 4
      %v617 = vadd.f32 %v615, %v616
      %v618 = vrot.slane %v617, 2
      %v619 = vadd.f32 %v617, %v618
      %v620 = vrot.slane %v619, 1
      %v621 = vadd.f32 %v619, %v620
      %v622 = vrcp.pop 256.0
      %v623 = vmul.f32 %v621, %v622
      %v624 = vsub.f32 %v362, %v623
      %v625 = vsub.f32 %v367, %v623
      %v626 = vsub.f32 %v372, %v623
      %v627 = vsub.f32 %v377, %v623
      %v628 = vsub.f32 %v382, %v623
      %v629 = vsub.f32 %v387, %v623
      %v630 = vsub.f32 %v392, %v623
      %v631 = vsub.f32 %v397, %v623
      %v632 = vsub.f32 %v402, %v623
      %v633 = vsub.f32 %v407, %v623
      %v634 = vsub.f32 %v412, %v623
      %v635 = vsub.f32 %v417, %v623
      %v636 = vsub.f32 %v422, %v623
      %v637 = vsub.f32 %v427, %v623
      %v638 = vsub.f32 %v432, %v623
      %v639 = vsub.f32 %v437, %v623
      %v640 = vsub.f32 %v442, %v623
      %v641 = vsub.f32 %v447, %v623
      %v642 = vsub.f32 %v452, %v623
      %v643 = vsub.f32 %v457, %v623
      %v644 = vsub.f32 %v462, %v623
      %v645 = vsub.f32 %v467, %v623
      %v646 = vsub.f32 %v472, %v623
      %v647 = vsub.f32 %v477, %v623
      %v648 = vsub.f32 %v482, %v623
      %v649 = vsub.f32 %v487, %v623
      %v650 = vsub.f32 %v492, %v623
      %v651 = vsub.f32 %v497, %v623
      %v652 = vsub.f32 %v502, %v623
      %v653 = vsub.f32 %v507, %v623
      %v654 = vsub.f32 %v512, %v623
      %v655 = vsub.f32 %v517, %v623
      %v656 = vmul.f32 %v624, %v624
      %v657 = vmul.f32 %v625, %v625
      %v658 = vmul.f32 %v626, %v626
      %v659 = vmul.f32 %v627, %v627
      %v660 = vmul.f32 %v628, %v628
      %v661 = vmul.f32 %v629, %v629
      %v662 = vmul.f32 %v630, %v630
      %v663 = vmul.f32 %v631, %v631
      %v664 = vmul.f32 %v632, %v632
      %v665 = vmul.f32 %v633, %v633
      %v666 = vmul.f32 %v634, %v634
      %v667 = vmul.f32 %v635, %v635
      %v668 = vmul.f32 %v636, %v636
      %v669 = vmul.f32 %v637, %v637
      %v670 = vmul.f32 %v638, %v638
      %v671 = vmul.f32 %v639, %v639
      %v672 = vmul.f32 %v640, %v640
      %v673 = vmul.f32 %v641, %v641
      %v674 = vmul.f32 %v642, %v642
      %v675 = vmul.f32 %v643, %v643
      %v676 = vmul.f32 %v644, %v644
      %v677 = vmul.f32 %v645, %v645
      %v678 = vmul.f32 %v646, %v646
      %v679 = vmul.f32 %v647, %v647
      %v680 = vmul.f32 %v648, %v648
      %v681 = vmul.f32 %v649, %v649
      %v682 = vmul.f32 %v650, %v650
      %v683 = vmul.f32 %v651, %v651
      %v684 = vmul.f32 %v652, %v652
      %v685 = vmul.f32 %v653, %v653
      %v686 = vmul.f32 %v654, %v654
      %v687 = vmul.f32 %v655, %v655
      %v688 = vsel %vm520, %v656, 0.0
      %v689 = vsel %vm520, %v657, 0.0
      %v690 = vadd.f32 %v688, %v689
      %v691 = vsel %vm520, %v658, 0.0
      %v692 = vadd.f32 %v690, %v691
      %v693 = vsel %vm520, %v659, 0.0
      %v694 = vadd.f32 %v692, %v693
      %v695 = vsel %vm520, %v660, 0.0
      %v696 = vadd.f32 %v694, %v695
      %v697 = vsel %vm520, %v661, 0.0
      %v698 = vadd.f32 %v696, %v697
      %v699 = vsel %vm520, %v662, 0.0
      %v700 = vadd.f32 %v698, %v699
      %v701 = vsel %vm520, %v663, 0.0
      %v702 = vadd.f32 %v700, %v701
      %v703 = vsel %vm520, %v664, 0.0
      %v704 = vadd.f32 %v702, %v703
      %v705 = vsel %vm520, %v665, 0.0
      %v706 = vadd.f32 %v704, %v705
      %v707 = vsel %vm520, %v666, 0.0
      %v708 = vadd.f32 %v706, %v707
      %v709 = vsel %vm520, %v667, 0.0
      %v710 = vadd.f32 %v708, %v709
      %v711 = vsel %vm520, %v668, 0.0
      %v712 = vadd.f32 %v710, %v711
      %v713 = vsel %vm520, %v669, 0.0
      %v714 = vadd.f32 %v712, %v713
      %v715 = vsel %vm520, %v670, 0.0
      %v716 = vadd.f32 %v714, %v715
      %v717 = vsel %vm520, %v671, 0.0
      %v718 = vadd.f32 %v716, %v717
      %v719 = vsel %vm520, %v672, 0.0
      %v720 = vadd.f32 %v718, %v719
      %v721 = vsel %vm520, %v673, 0.0
      %v722 = vadd.f32 %v720, %v721
      %v723 = vsel %vm520, %v674, 0.0
      %v724 = vadd.f32 %v722, %v723
      %v725 = vsel %vm520, %v675, 0.0
      %v726 = vadd.f32 %v724, %v725
      %v727 = vsel %vm520, %v676, 0.0
      %v728 = vadd.f32 %v726, %v727
      %v729 = vsel %vm520, %v677, 0.0
      %v730 = vadd.f32 %v728, %v729
      %v731 = vsel %vm520, %v678, 0.0
      %v732 = vadd.f32 %v730, %v731
      %v733 = vsel %vm520, %v679, 0.0
      %v734 = vadd.f32 %v732, %v733
      %v735 = vsel %vm520, %v680, 0.0
      %v736 = vadd.f32 %v734, %v735
      %v737 = vsel %vm520, %v681, 0.0
      %v738 = vadd.f32 %v736, %v737
      %v739 = vsel %vm520, %v682, 0.0
      %v740 = vadd.f32 %v738, %v739
      %v741 = vsel %vm520, %v683, 0.0
      %v742 = vadd.f32 %v740, %v741
      %v743 = vsel %vm520, %v684, 0.0
      %v744 = vadd.f32 %v742, %v743
      %v745 = vsel %vm520, %v685, 0.0
      %v746 = vadd.f32 %v744, %v745
      %v747 = vsel %vm520, %v686, 0.0
      %v748 = vadd.f32 %v746, %v747
      %v749 = vsel %vm520, %v687, 0.0
      %v750 = vadd.f32 %v748, %v749
      %v751 = vrot.slane %v750, 4
      %v752 = vadd.f32 %v750, %v751
      %v753 = vrot.slane %v752, 2
      %v754 = vadd.f32 %v752, %v753
      %v755 = vrot.slane %v754, 1
      %v756 = vadd.f32 %v754, %v755
      %vm757 = vcmask 1040384
      %v758 = vsel %vm757, %v621, %v756
      %vm759 = vcmask 254976
      %760 = vst.msk [vmem:[%s182] sm:$0x3] %vm759, %v758
      %s761 = smul.u32 32, %s15
      %p762 = scmp.lt.s32.totalorder %s761, 63
      %s763 = scalar_select %p762, %s761, 63
      %s764 = smul.addr %s763, 8
      %s765 = scalar_lea.vmem %s2, %s764
      %p766 = scmp.lt.s32.totalorder %s15, 1
      %s767 = scalar_select %p766, %s15, 1
      %s768 = smul.addr %s767, 2
      %s769 = scalar_lea.vmem %s3, %s768
      // Predicated region
      $region29: #{resbottleneck_forward.4} parent=27 // pred_check
        %p770 = pneg %p80
      $region30: #{resbottleneck_forward.4} parent=27 // pred_check_branch
        %772 = sbr.rel (%p770) target = $region32
      $region31: #{resbottleneck_forward.4} parent=27 // pred_region
        %s773 = smul.u32 32, %s15
      $region32: #{resbottleneck_forward.4} parent=27 // pred_fallthru
        _
      // Predicated region
      $region33: #{resbottleneck_forward.4} parent=27 // pred_check
        %p774 = pneg %p106
      $region34: #{resbottleneck_forward.4} parent=27 // pred_check_branch
        %776 = sbr.rel (%p774) target = $region36
      $region35: #{resbottleneck_forward.4} parent=27 // pred_region
        _
      $region36: #{resbottleneck_forward.4} parent=27 // pred_fallthru
        _
    $region28: #{resbottleneck_forward.4} parent=5 // pred_fallthru
      _
    %p777 = scmp.le.s32.totalorder 2, %s10
    // Predicated region
    $region37: #{resbottleneck_forward.4} parent=5 // pred_check
      %p778 = pneg %p777
    $region38: #{resbottleneck_forward.4} parent=5 // pred_check_branch
      %780 = sbr.rel (%p778) target = $region40
    $region39: #{resbottleneck_forward.4} parent=5 // pred_region
      %s781 = ssub.s32 %s10, 2
      // Predicated region
      $region41: #{resbottleneck_forward.4} parent=39 // pred_check
        %p782 = pneg %p86
      $region42: #{resbottleneck_forward.4} parent=39 // pred_check_branch
        %784 = sbr.rel (%p782) target = $region44
      $region43: #{resbottleneck_forward.4} parent=39 // pred_region
        %s785 = smul.u32 32, %s16
        %p786 = scmp.lt.s32.totalorder %s785, 63
        %s787 = scalar_select %p786, %s785, 63
        %s788 = smul.addr %s787, 8
        %s789 = scalar_lea.vmem %s2, %s788
      $region44: #{resbottleneck_forward.4} parent=39 // pred_fallthru
        _
      // Predicated region
      $region45: #{resbottleneck_forward.4} parent=39 // pred_check
        %p790 = pneg %p112
      $region46: #{resbottleneck_forward.4} parent=39 // pred_check_branch
        %792 = sbr.rel (%p790) target = $region48
      $region47: #{resbottleneck_forward.4} parent=39 // pred_region
        %p793 = scmp.lt.s32.totalorder %s16, 1
        %s794 = scalar_select %p793, %s16, 1
        %s795 = smul.addr %s794, 2
        %s796 = scalar_lea.vmem %s3, %s795
      $region48: #{resbottleneck_forward.4} parent=39 // pred_fallthru
        _
    $region40: #{resbottleneck_forward.4} parent=5 // pred_fallthru
      _
  $region6: #{resbottleneck_forward.4} parent=0 // loop_footer
    %s14 = sadd.s32 1, %s10
  $region7: #{resbottleneck_forward.4} parent=0 // loop_footer_branch
    %9 = sbr.rel target = $region3
  $region8: #{resbottleneck_forward.4} parent=0 // loop_exit
    _

// kernel: resbottleneck_forward.6
$region0: #{resbottleneck_forward.6}
  #allocation0 [shape = 'u32[]', space=smem, size = 0x4, offset = 0x4, fixed_abs, tag = 'smem constant byte address 0x4 - core index']
  #allocation1 [shape = 'u32[144,128]{1,0:T(1,128)}', space=vmem, size = 0x12000, scoped, tag = 'internal scratch']
  %s0 = inlined_call_operand.vmem [shape: f32[512,32], index: 0, kind: input, shape index: {}]
  %s1 = inlined_call_operand.vmem [shape: f32[1,32], index: 1, kind: input, shape index: {}]
  %s2 = inlined_call_operand.vmem [shape: f32[1,32], index: 2, kind: input, shape index: {}]
  %s3 = inlined_call_operand.vmem [shape: f32[32,128], index: 3, kind: input, shape index: {}]
  %s4 = inlined_call_operand.vmem [shape: f32[2,2,128], index: 4, kind: output, shape index: {}]
  %s5 = sld [smem:[#allocation0]]
  $region49: #{resbottleneck_forward.6} parent=0
    _
  %s7 = ssub.s32 1, %s5
  %s8 = scalar_select 0, %s7, %s5
  loop: start=0, step=1, limit=4
  $region2: #{resbottleneck_forward.6} parent=0 // loop_pre_header
    _
  $region3: #{resbottleneck_forward.6} parent=0 // loop_header
    %s10 = sphi 0, %s14
    %p11 = scmp.ge.s32.totalorder %s10, 4
    %s20 = sphi 0, %s22
    %s23 = sphi 0, %s20
    %s24 = sphi 0, %s23
    %s40 = sphi 0, %s24
    %s44 = sphi 0, %s44
    %s46 = sphi 0, %s44
    %s47 = sphi 0, %s46
    %s61 = sphi 0, %s47
    %s65 = sphi 0, %s65
    %s67 = sphi 0, %s65
    %s68 = sphi 0, %s67
    %s82 = sphi 0, %s68
    %s86 = sphi 0, %s86
    %s88 = sphi 0, %s86
    %s89 = sphi 0, %s88
    %s103 = sphi 0, %s89
    %s109 = sphi 0, %s111
    %s112 = sphi 0, %s109
    %s113 = sphi 0, %s112
    %s129 = sphi 0, %s113
  $region4: #{resbottleneck_forward.6} parent=0 // loop_header_branch
    %13 = sbr.rel (%p11) target = $region8
  $region5: #{resbottleneck_forward.6} parent=0 // loop_body
    %s15 = ssub.s32 %s10, 1
    %s16 = ssub.s32 %s10, 2
    %s17 = sadd.s32 %s10, 1
    %s18 = ssub.s32 %s10, %s17
    %p19 = scmp.eq.s32.totalorder %s18, 0
    %s21 = sadd.s32 %s20, 1
    %s22 = scalar_select %p19, %s20, %s21
    %p25 = pneg %p19
    %p26 = scmp.eq.s32.totalorder %s10, 1
    %p27 = por %p25, %p26
    %p28 = scmp.ne.s32.totalorder %s20, %s23
    %p29 = scmp.eq.s32.totalorder %s10, 0
    %p30 = por %p28, %p29
    %p31 = scmp.ne.s32.totalorder %s20, %s23
    %p32 = scmp.eq.s32.totalorder %s15, 1
    %p33 = por %p31, %p32
    %p34 = scmp.ne.s32.totalorder %s23, %s24
    %p35 = scmp.eq.s32.totalorder %s15, 0
    %p36 = por %p34, %p35
    %p37 = scmp.ne.s32.totalorder %s23, %s24
    %p38 = scmp.eq.s32.totalorder %s16, 1
    %p39 = por %p37, %p38
    %p41 = scmp.ne.s32.totalorder %s24, %s40
    %p42 = scmp.eq.s32.totalorder %s16, 0
    %p43 = por %p41, %p42
    %s45 = sadd.s32 %s44, 1
    %p48 = scmp.eq.s32.totalorder %s10, 1
    %p49 = scmp.ne.s32.totalorder %s44, %s46
    %p50 = scmp.eq.s32.totalorder %s10, 0
    %p51 = por %p49, %p50
    %p52 = scmp.ne.s32.totalorder %s44, %s46
    %p53 = scmp.eq.s32.totalorder %s15, 1
    %p54 = por %p52, %p53
    %p55 = scmp.ne.s32.totalorder %s46, %s47
    %p56 = scmp.eq.s32.totalorder %s15, 0
    %p57 = por %p55, %p56
    %p58 = scmp.ne.s32.totalorder %s46, %s47
    %p59 = scmp.eq.s32.totalorder %s16, 1
    %p60 = por %p58, %p59
    %p62 = scmp.ne.s32.totalorder %s47, %s61
    %p63 = scmp.eq.s32.totalorder %s16, 0
    %p64 = por %p62, %p63
    %s66 = sadd.s32 %s65, 1
    %p69 = scmp.eq.s32.totalorder %s10, 1
    %p70 = scmp.ne.s32.totalorder %s65, %s67
    %p71 = scmp.eq.s32.totalorder %s10, 0
    %p72 = por %p70, %p71
    %p73 = scmp.ne.s32.totalorder %s65, %s67
    %p74 = scmp.eq.s32.totalorder %s15, 1
    %p75 = por %p73, %p74
    %p76 = scmp.ne.s32.totalorder %s67, %s68
    %p77 = scmp.eq.s32.totalorder %s15, 0
    %p78 = por %p76, %p77
    %p79 = scmp.ne.s32.totalorder %s67, %s68
    %p80 = scmp.eq.s32.totalorder %s16, 1
    %p81 = por %p79, %p80
    %p83 = scmp.ne.s32.totalorder %s68, %s82
    %p84 = scmp.eq.s32.totalorder %s16, 0
    %p85 = por %p83, %p84
    %s87 = sadd.s32 %s86, 1
    %p90 = scmp.eq.s32.totalorder %s10, 1
    %p91 = scmp.ne.s32.totalorder %s86, %s88
    %p92 = scmp.eq.s32.totalorder %s10, 0
    %p93 = por %p91, %p92
    %p94 = scmp.ne.s32.totalorder %s86, %s88
    %p95 = scmp.eq.s32.totalorder %s15, 1
    %p96 = por %p94, %p95
    %p97 = scmp.ne.s32.totalorder %s88, %s89
    %p98 = scmp.eq.s32.totalorder %s15, 0
    %p99 = por %p97, %p98
    %p100 = scmp.ne.s32.totalorder %s88, %s89
    %p101 = scmp.eq.s32.totalorder %s16, 1
    %p102 = por %p100, %p101
    %p104 = scmp.ne.s32.totalorder %s89, %s103
    %p105 = scmp.eq.s32.totalorder %s16, 0
    %p106 = por %p104, %p105
    %s107 = ssub.s32 %s10, %s17
    %p108 = scmp.eq.s32.totalorder %s107, 0
    %s110 = sadd.s32 %s109, 1
    %s111 = scalar_select %p108, %s109, %s110
    %p114 = pneg %p108
    %p115 = scmp.eq.s32.totalorder %s10, 1
    %p116 = por %p114, %p115
    %p117 = scmp.ne.s32.totalorder %s109, %s112
    %p118 = scmp.eq.s32.totalorder %s10, 0
    %p119 = por %p117, %p118
    %p120 = scmp.ne.s32.totalorder %s109, %s112
    %p121 = scmp.eq.s32.totalorder %s15, 1
    %p122 = por %p120, %p121
    %p123 = scmp.ne.s32.totalorder %s112, %s113
    %p124 = scmp.eq.s32.totalorder %s15, 0
    %p125 = por %p123, %p124
    %p126 = scmp.ne.s32.totalorder %s112, %s113
    %p127 = scmp.eq.s32.totalorder %s16, 1
    %p128 = por %p126, %p127
    %p130 = scmp.ne.s32.totalorder %s113, %s129
    %p131 = scmp.eq.s32.totalorder %s16, 0
    %p132 = por %p130, %p131
    %p133 = scmp.le.s32.totalorder 1, %s10
    %p134 = scmp.lt.s32.totalorder %s10, 3
    %p135 = pnand %p133, %p134
    %p136 = pneg %p135
    // Predicated region
    $region9: #{resbottleneck_forward.6} parent=5 // pred_check
      _
    $region10: #{resbottleneck_forward.6} parent=5 // pred_check_branch
      %138 = sbr.rel (%p135) target = $region12
    $region11: #{resbottleneck_forward.6} parent=5 // pred_region
      %s139 = ssub.s32 %s10, 1
      // Predicated region
      $region13: #{resbottleneck_forward.6} parent=11 // pred_check
        %p140 = pneg %p57
      $region14: #{resbottleneck_forward.6} parent=11 // pred_check_branch
        %142 = sbr.rel (%p140) target = $region16
      $region15: #{resbottleneck_forward.6} parent=11 // pred_region
        _
      $region16: #{resbottleneck_forward.6} parent=11 // pred_fallthru
        _
      // Predicated region
      $region17: #{resbottleneck_forward.6} parent=11 // pred_check
        %p143 = pneg %p78
      $region18: #{resbottleneck_forward.6} parent=11 // pred_check_branch
        %145 = sbr.rel (%p143) target = $region20
      $region19: #{resbottleneck_forward.6} parent=11 // pred_region
        _
      $region20: #{resbottleneck_forward.6} parent=11 // pred_fallthru
        _
      // Predicated region
      $region21: #{resbottleneck_forward.6} parent=11 // pred_check
        %p146 = pneg %p99
      $region22: #{resbottleneck_forward.6} parent=11 // pred_check_branch
        %148 = sbr.rel (%p146) target = $region24
      $region23: #{resbottleneck_forward.6} parent=11 // pred_region
        _
      $region24: #{resbottleneck_forward.6} parent=11 // pred_fallthru
        _
    $region12: #{resbottleneck_forward.6} parent=5 // pred_fallthru
      _
    %p149 = scmp.lt.s32.totalorder %s10, 2
    // Predicated region
    $region25: #{resbottleneck_forward.6} parent=5 // pred_check
      %p150 = pneg %p149
    $region26: #{resbottleneck_forward.6} parent=5 // pred_check_branch
      %152 = sbr.rel (%p150) target = $region28
    $region27: #{resbottleneck_forward.6} parent=5 // pred_region
      // Predicated region
      $region29: #{resbottleneck_forward.6} parent=27 // pred_check
        %p153 = pneg %p30
      $region30: #{resbottleneck_forward.6} parent=27 // pred_check_branch
        %155 = sbr.rel (%p153) target = $region32
      $region31: #{resbottleneck_forward.6} parent=27 // pred_region
        %s156 = smul.u32 32, %s10
        %p157 = scmp.lt.s32.totalorder %s156, 63
        %s158 = scalar_select %p157, %s156, 63
        %s159 = smul.addr %s158, 8
        %s160 = scalar_lea.vmem %s0, %s159
        %s161 = smul.u32 32, %s10
      $region32: #{resbottleneck_forward.6} parent=27 // pred_fallthru
        _
    $region28: #{resbottleneck_forward.6} parent=5 // pred_fallthru
      _
    %p162 = scmp.le.s32.totalorder 1, %s10
    %p163 = scmp.lt.s32.totalorder %s10, 3
    %p164 = pnand %p162, %p163
    %p165 = pneg %p164
    // Predicated region
    $region33: #{resbottleneck_forward.6} parent=5 // pred_check
      _
    $region34: #{resbottleneck_forward.6} parent=5 // pred_check_branch
      %167 = sbr.rel (%p164) target = $region36
    $region35: #{resbottleneck_forward.6} parent=5 // pred_region
      %s168 = ssub.s32 %s10, 1
      %s169 = smul.u32 32, %s15
      %p170 = scmp.lt.s32.totalorder %s169, 63
      %s171 = scalar_select %p170, %s169, 63
      %s172 = smul.addr %s171, 8
      %s173 = scalar_lea.vmem %s0, %s172
      %p174 = pneg %p36
      %p175 = pneg %p33
      %p176 = pneg %p57
      %p177 = pneg %p54
      %p178 = pneg %p78
      %p179 = pneg %p75
      %p180 = pneg %p99
      %p181 = pneg %p96
      %p182 = pneg %p125
      %p183 = pneg %p122
      %p184 = scmp.lt.s32.totalorder %s15, 1
      %s185 = scalar_select %p184, %s15, 1
      %s186 = smul.addr %s185, 2
      %s187 = scalar_lea.vmem %s4, %s186
      %s188 = smul.u32 32, %s15
      %p189 = scmp.lt.s32.totalorder %s188, 63
      %s190 = scalar_select %p189, %s188, 63
      %s191 = smul.addr %s190, 8
      %s192 = scalar_lea.vmem %s0, %s191
      %s193 = smul.u32 32, %s15
      %p194 = scmp.lt.s32.totalorder %s15, 1
      %s195 = scalar_select %p194, %s15, 1
      %s196 = smul.addr %s195, 2
      %s197 = scalar_lea.vmem %s4, %s196
      %v198 = vld [vmem:[%s192] sm:$0xff]
      %v199 = vld [vmem:[%s192 + $0x8] sm:$0xff]
      %v200 = vld [vmem:[%s192 + $0x10] sm:$0xff]
      %v201 = vld [vmem:[%s192 + $0x18] sm:$0xff]
      %v202 = vld [vmem:[%s192 + $0x20] sm:$0xff]
      %v203 = vld [vmem:[%s192 + $0x28] sm:$0xff]
      %v204 = vld [vmem:[%s192 + $0x30] sm:$0xff]
      %v205 = vld [vmem:[%s192 + $0x38] sm:$0xff]
      %v206 = vld [vmem:[%s192 + $0x40] sm:$0xff]
      %v207 = vld [vmem:[%s192 + $0x48] sm:$0xff]
      %v208 = vld [vmem:[%s192 + $0x50] sm:$0xff]
      %v209 = vld [vmem:[%s192 + $0x58] sm:$0xff]
      %v210 = vld [vmem:[%s192 + $0x60] sm:$0xff]
      %v211 = vld [vmem:[%s192 + $0x68] sm:$0xff]
      %v212 = vld [vmem:[%s192 + $0x70] sm:$0xff]
      %v213 = vld [vmem:[%s192 + $0x78] sm:$0xff]
      %v214 = vld [vmem:[%s192 + $0x80] sm:$0xff]
      %v215 = vld [vmem:[%s192 + $0x88] sm:$0xff]
      %v216 = vld [vmem:[%s192 + $0x90] sm:$0xff]
      %v217 = vld [vmem:[%s192 + $0x98] sm:$0xff]
      %v218 = vld [vmem:[%s192 + $0xa0] sm:$0xff]
      %v219 = vld [vmem:[%s192 + $0xa8] sm:$0xff]
      %v220 = vld [vmem:[%s192 + $0xb0] sm:$0xff]
      %v221 = vld [vmem:[%s192 + $0xb8] sm:$0xff]
      %v222 = vld [vmem:[%s192 + $0xc0] sm:$0xff]
      %v223 = vld [vmem:[%s192 + $0xc8] sm:$0xff]
      %v224 = vld [vmem:[%s192 + $0xd0] sm:$0xff]
      %v225 = vld [vmem:[%s192 + $0xd8] sm:$0xff]
      %v226 = vld [vmem:[%s192 + $0xe0] sm:$0xff]
      %v227 = vld [vmem:[%s192 + $0xe8] sm:$0xff]
      %v228 = vld [vmem:[%s192 + $0xf0] sm:$0xff]
      %v229 = vld [vmem:[%s192 + $0xf8] sm:$0xff]
      %v230 = vld [vmem:[%s1] sm:$0x1]
      %v232 = vlaneseq
      %v233 = vshrl.u32 %v232, 7
      %v234 = vsub.s32 0, %v233
      %v235 = vrot.slane %v230, %v234
      %v237 = vmul.f32 %v198, %v235
      %v238 = vmul.f32 %v199, %v235
      %v239 = vmul.f32 %v200, %v235
      %v240 = vmul.f32 %v201, %v235
      %v241 = vmul.f32 %v202, %v235
      %v242 = vmul.f32 %v203, %v235
      %v243 = vmul.f32 %v204, %v235
      %v244 = vmul.f32 %v205, %v235
      %v245 = vmul.f32 %v206, %v235
      %v246 = vmul.f32 %v207, %v235
      %v247 = vmul.f32 %v208, %v235
      %v248 = vmul.f32 %v209, %v235
      %v249 = vmul.f32 %v210, %v235
      %v250 = vmul.f32 %v211, %v235
      %v251 = vmul.f32 %v212, %v235
      %v252 = vmul.f32 %v213, %v235
      %v253 = vmul.f32 %v214, %v235
      %v254 = vmul.f32 %v215, %v235
      %v255 = vmul.f32 %v216, %v235
      %v256 = vmul.f32 %v217, %v235
      %v257 = vmul.f32 %v218, %v235
      %v258 = vmul.f32 %v219, %v235
      %v259 = vmul.f32 %v220, %v235
      %v260 = vmul.f32 %v221, %v235
      %v261 = vmul.f32 %v222, %v235
      %v262 = vmul.f32 %v223, %v235
      %v263 = vmul.f32 %v224, %v235
      %v264 = vmul.f32 %v225, %v235
      %v265 = vmul.f32 %v226, %v235
      %v266 = vmul.f32 %v227, %v235
      %v267 = vmul.f32 %v228, %v235
      %v268 = vmul.f32 %v229, %v235
      %v269 = vld [vmem:[%s2] sm:$0x1]
      %v271 = vlaneseq
      %v272 = vshrl.u32 %v271, 7
      %v273 = vsub.s32 0, %v272
      %v274 = vrot.slane %v269, %v273
      %v276 = vadd.f32 %v237, %v274
      %v277 = vadd.f32 %v238, %v274
      %v278 = vadd.f32 %v239, %v274
      %v279 = vadd.f32 %v240, %v274
      %v280 = vadd.f32 %v241, %v274
      %v281 = vadd.f32 %v242, %v274
      %v282 = vadd.f32 %v243, %v274
      %v283 = vadd.f32 %v244, %v274
      %v284 = vadd.f32 %v245, %v274
      %v285 = vadd.f32 %v246, %v274
      %v286 = vadd.f32 %v247, %v274
      %v287 = vadd.f32 %v248, %v274
      %v288 = vadd.f32 %v249, %v274
      %v289 = vadd.f32 %v250, %v274
      %v290 = vadd.f32 %v251, %v274
      %v291 = vadd.f32 %v252, %v274
      %v292 = vadd.f32 %v253, %v274
      %v293 = vadd.f32 %v254, %v274
      %v294 = vadd.f32 %v255, %v274
      %v295 = vadd.f32 %v256, %v274
      %v296 = vadd.f32 %v257, %v274
      %v297 = vadd.f32 %v258, %v274
      %v298 = vadd.f32 %v259, %v274
      %v299 = vadd.f32 %v260, %v274
      %v300 = vadd.f32 %v261, %v274
      %v301 = vadd.f32 %v262, %v274
      %v302 = vadd.f32 %v263, %v274
      %v303 = vadd.f32 %v264, %v274
      %v304 = vadd.f32 %v265, %v274
      %v305 = vadd.f32 %v266, %v274
      %v306 = vadd.f32 %v267, %v274
      %v307 = vadd.f32 %v268, %v274
      %v308 = vmax.f32 %v276, 0.0
      %v309 = vmax.f32 %v277, 0.0
      %v310 = vmax.f32 %v278, 0.0
      %v311 = vmax.f32 %v279, 0.0
      %v312 = vmax.f32 %v280, 0.0
      %v313 = vmax.f32 %v281, 0.0
      %v314 = vmax.f32 %v282, 0.0
      %v315 = vmax.f32 %v283, 0.0
      %v316 = vmax.f32 %v284, 0.0
      %v317 = vmax.f32 %v285, 0.0
      %v318 = vmax.f32 %v286, 0.0
      %v319 = vmax.f32 %v287, 0.0
      %v320 = vmax.f32 %v288, 0.0
      %v321 = vmax.f32 %v289, 0.0
      %v322 = vmax.f32 %v290, 0.0
      %v323 = vmax.f32 %v291, 0.0
      %v324 = vmax.f32 %v292, 0.0
      %v325 = vmax.f32 %v293, 0.0
      %v326 = vmax.f32 %v294, 0.0
      %v327 = vmax.f32 %v295, 0.0
      %v328 = vmax.f32 %v296, 0.0
      %v329 = vmax.f32 %v297, 0.0
      %v330 = vmax.f32 %v298, 0.0
      %v331 = vmax.f32 %v299, 0.0
      %v332 = vmax.f32 %v300, 0.0
      %v333 = vmax.f32 %v301, 0.0
      %v334 = vmax.f32 %v302, 0.0
      %v335 = vmax.f32 %v303, 0.0
      %v336 = vmax.f32 %v304, 0.0
      %v337 = vmax.f32 %v305, 0.0
      %v338 = vmax.f32 %v306, 0.0
      %v339 = vmax.f32 %v307, 0.0
      %v340 = vld [vmem:[%s3] sm:$0xff]
      %v341 = vld [vmem:[%s3 + $0x8] sm:$0xff]
      %v342 = vld [vmem:[%s3 + $0x10] sm:$0xff]
      %v343 = vld [vmem:[%s3 + $0x18] sm:$0xff]
      %vm344 = vcmask 261120
      %v346 = vsel %vm344, %v308, 0
      %v349 = vsel %vm344, %v309, 0
      %v352 = vsel %vm344, %v310, 0
      %v355 = vsel %vm344, %v311, 0
      %v358 = vsel %vm344, %v312, 0
      %v361 = vsel %vm344, %v313, 0
      %v364 = vsel %vm344, %v314, 0
      %v367 = vsel %vm344, %v315, 0
      %v370 = vsel %vm344, %v316, 0
      %v373 = vsel %vm344, %v317, 0
      %v376 = vsel %vm344, %v318, 0
      %v379 = vsel %vm344, %v319, 0
      %v382 = vsel %vm344, %v320, 0
      %v385 = vsel %vm344, %v321, 0
      %v388 = vsel %vm344, %v322, 0
      %v391 = vsel %vm344, %v323, 0
      %v394 = vsel %vm344, %v324, 0
      %v397 = vsel %vm344, %v325, 0
      %v400 = vsel %vm344, %v326, 0
      %v403 = vsel %vm344, %v327, 0
      %v406 = vsel %vm344, %v328, 0
      %v409 = vsel %vm344, %v329, 0
      %v412 = vsel %vm344, %v330, 0
      %v415 = vsel %vm344, %v331, 0
      %v418 = vsel %vm344, %v332, 0
      %v421 = vsel %vm344, %v333, 0
      %v424 = vsel %vm344, %v334, 0
      %v427 = vsel %vm344, %v335, 0
      %v430 = vsel %vm344, %v336, 0
      %v433 = vsel %vm344, %v337, 0
      %v436 = vsel %vm344, %v338, 0
      %v439 = vsel %vm344, %v339, 0
      %441 = vmatprep.subr.mxu0 0.0
      %442 = vmatpush1.msra.mxu0 %v340
      %443 = vmatprep.subr.mxu0 0.0
      %444 = vmatpush1.msra.mxu0 %v341
      %445 = vmatprep.subr.mxu0 0.0
      %446 = vmatpush1.msra.mxu0 %v342
      %447 = vmatprep.subr.mxu0 0.0
      %448 = vmatpush1.msra.mxu0 %v343
      %449 = vmatprep.subr.mxu0 0.0
      %450 = vmatpush1.msra.mxu0 0.0
      %451 = vmatprep.subr.mxu0 0.0
      %452 = vmatpush1.msra.mxu0 0.0
      %453 = vmatprep.subr.mxu0 0.0
      %454 = vmatpush1.msra.mxu0 0.0
      %455 = vmatprep.subr.mxu0 0.0
      %456 = vmatpush1.msra.mxu0 0.0
      %457 = vmatprep.subr.mxu0 0.0
      %458 = vmatpush1.msra.mxu0 0.0
      %459 = vmatprep.subr.mxu0 0.0
      %460 = vmatpush1.msra.mxu0 0.0
      %461 = vmatprep.subr.mxu0 0.0
      %462 = vmatpush1.msra.mxu0 0.0
      %463 = vmatprep.subr.mxu0 0.0
      %464 = vmatpush1.msra.mxu0 0.0
      %465 = vmatprep.subr.mxu0 0.0
      %466 = vmatpush1.msra.mxu0 0.0
      %467 = vmatprep.subr.mxu0 0.0
      %468 = vmatpush1.msra.mxu0 0.0
      %469 = vmatprep.subr.mxu0 0.0
      %470 = vmatpush1.msra.mxu0 0.0
      %471 = vmatprep.subr.mxu0 0.0
      %472 = vmatpush1.msra.mxu0 0.0
      %473 = vmatprep.subr.mxu0 0.0
      %474 = vmatpush1.msra.mxu0 0.0
      %475 = vmatprep.subr.mxu0 0.0
      %476 = vmatpush1.msra.mxu0 0.0
      %477 = vmatprep.subr.mxu0 0.0
      %478 = vmatpush1.msra.mxu0 0.0
      %479 = vmatprep.subr.mxu0 0.0
      %480 = vmatpush1.msra.mxu0 0.0
      %481 = vmatprep.subr.mxu0 0.0
      %482 = vmatpush1.msra.mxu0 0.0
      %483 = vmatprep.subr.mxu0 0.0
      %484 = vmatpush1.msra.mxu0 0.0
      %485 = vmatprep.subr.mxu0 0.0
      %486 = vmatpush1.msra.mxu0 0.0
      %487 = vmatprep.subr.mxu0 0.0
      %488 = vmatpush1.msra.mxu0 0.0
      %489 = vmatprep.subr.mxu0 0.0
      %490 = vmatpush1.msra.mxu0 0.0
      %491 = vmatprep.subr.mxu0 0.0
      %492 = vmatpush1.msra.mxu0 0.0
      %493 = vmatprep.subr.mxu0 0.0
      %494 = vmatpush1.msra.mxu0 0.0
      %495 = vmatprep.subr.mxu0 0.0
      %496 = vmatpush1.msra.mxu0 0.0
      %497 = vmatprep.subr.mxu0 0.0
      %498 = vmatpush1.msra.mxu0 0.0
      %499 = vmatprep.subr.mxu0 0.0
      %500 = vmatpush1.msra.mxu0 0.0
      %501 = vmatprep.subr.mxu0 0.0
      %502 = vmatpush1.msra.mxu0 0.0
      %503 = vmatprep.subr.mxu0 0.0
      %504 = vmatpush1.msra.mxu0 0.0
      %505 = vmatprep.mubr.f32.mxu0 0.0
      %506 = vmatmul.mubr.f32.gmra.mrb[0].mxu0 %v346
      %v507 = vpop.f32.mrb[0].mxu0
      %v508 = vadd.f32 0.0, %v507
      %v509 = vpop.f32.mrb[0].mxu0
      %510 = vmatprep.mubr.f32.mxu0 0.0
      %511 = vmatmul.mubr.f32.gmra.mrb[0].mxu0 %v349
      %v512 = vpop.f32.mrb[0].mxu0
      %v513 = vadd.f32 0.0, %v512
      %v514 = vpop.f32.mrb[0].mxu0
      %515 = vmatprep.mubr.f32.mxu0 0.0
      %516 = vmatmul.mubr.f32.gmra.mrb[0].mxu0 %v352
      %v517 = vpop.f32.mrb[0].mxu0
      %v518 = vadd.f32 0.0, %v517
      %v519 = vpop.f32.mrb[0].mxu0
      %520 = vmatprep.mubr.f32.mxu0 0.0
      %521 = vmatmul.mubr.f32.gmra.mrb[0].mxu0 %v355
      %v522 = vpop.f32.mrb[0].mxu0
      %v523 = vadd.f32 0.0, %v522
      %v524 = vpop.f32.mrb[0].mxu0
      %525 = vmatprep.mubr.f32.mxu0 0.0
      %526 = vmatmul.mubr.f32.gmra.mrb[0].mxu0 %v358
      %v527 = vpop.f32.mrb[0].mxu0
      %v528 = vadd.f32 0.0, %v527
      %v529 = vpop.f32.mrb[0].mxu0
      %530 = vmatprep.mubr.f32.mxu0 0.0
      %531 = vmatmul.mubr.f32.gmra.mrb[0].mxu0 %v361
      %v532 = vpop.f32.mrb[0].mxu0
      %v533 = vadd.f32 0.0, %v532
      %v534 = vpop.f32.mrb[0].mxu0
      %535 = vmatprep.mubr.f32.mxu0 0.0
      %536 = vmatmul.mubr.f32.gmra.mrb[0].mxu0 %v364
      %v537 = vpop.f32.mrb[0].mxu0
      %v538 = vadd.f32 0.0, %v537
      %v539 = vpop.f32.mrb[0].mxu0
      %540 = vmatprep.mubr.f32.mxu0 0.0
      %541 = vmatmul.mubr.f32.gmra.mrb[0].mxu0 %v367
      %v542 = vpop.f32.mrb[0].mxu0
      %v543 = vadd.f32 0.0, %v542
      %v544 = vpop.f32.mrb[0].mxu0
      %545 = vmatprep.mubr.f32.mxu0 0.0
      %546 = vmatmul.mubr.f32.gmra.mrb[0].mxu0 %v370
      %v547 = vpop.f32.mrb[0].mxu0
      %v548 = vadd.f32 0.0, %v547
      %v549 = vpop.f32.mrb[0].mxu0
      %550 = vmatprep.mubr.f32.mxu0 0.0
      %551 = vmatmul.mubr.f32.gmra.mrb[0].mxu0 %v373
      %v552 = vpop.f32.mrb[0].mxu0
      %v553 = vadd.f32 0.0, %v552
      %v554 = vpop.f32.mrb[0].mxu0
      %555 = vmatprep.mubr.f32.mxu0 0.0
      %556 = vmatmul.mubr.f32.gmra.mrb[0].mxu0 %v376
      %v557 = vpop.f32.mrb[0].mxu0
      %v558 = vadd.f32 0.0, %v557
      %v559 = vpop.f32.mrb[0].mxu0
      %560 = vmatprep.mubr.f32.mxu0 0.0
      %561 = vmatmul.mubr.f32.gmra.mrb[0].mxu0 %v379
      %v562 = vpop.f32.mrb[0].mxu0
      %v563 = vadd.f32 0.0, %v562
      %v564 = vpop.f32.mrb[0].mxu0
      %565 = vmatprep.mubr.f32.mxu0 0.0
      %566 = vmatmul.mubr.f32.gmra.mrb[0].mxu0 %v382
      %v567 = vpop.f32.mrb[0].mxu0
      %v568 = vadd.f32 0.0, %v567
      %v569 = vpop.f32.mrb[0].mxu0
      %570 = vmatprep.mubr.f32.mxu0 0.0
      %571 = vmatmul.mubr.f32.gmra.mrb[0].mxu0 %v385
      %v572 = vpop.f32.mrb[0].mxu0
      %v573 = vadd.f32 0.0, %v572
      %v574 = vpop.f32.mrb[0].mxu0
      %575 = vmatprep.mubr.f32.mxu0 0.0
      %576 = vmatmul.mubr.f32.gmra.mrb[0].mxu0 %v388
      %v577 = vpop.f32.mrb[0].mxu0
      %v578 = vadd.f32 0.0, %v577
      %v579 = vpop.f32.mrb[0].mxu0
      %580 = vmatprep.mubr.f32.mxu0 0.0
      %581 = vmatmul.mubr.f32.gmra.mrb[0].mxu0 %v391
      %v582 = vpop.f32.mrb[0].mxu0
      %v583 = vadd.f32 0.0, %v582
      %v584 = vpop.f32.mrb[0].mxu0
      %585 = vmatprep.mubr.f32.mxu0 0.0
      %586 = vmatmul.mubr.f32.gmra.mrb[0].mxu0 %v394
      %v587 = vpop.f32.mrb[0].mxu0
      %v588 = vadd.f32 0.0, %v587
      %v589 = vpop.f32.mrb[0].mxu0
      %590 = vmatprep.mubr.f32.mxu0 0.0
      %591 = vmatmul.mubr.f32.gmra.mrb[0].mxu0 %v397
      %v592 = vpop.f32.mrb[0].mxu0
      %v593 = vadd.f32 0.0, %v592
      %v594 = vpop.f32.mrb[0].mxu0
      %595 = vmatprep.mubr.f32.mxu0 0.0
      %596 = vmatmul.mubr.f32.gmra.mrb[0].mxu0 %v400
      %v597 = vpop.f32.mrb[0].mxu0
      %v598 = vadd.f32 0.0, %v597
      %v599 = vpop.f32.mrb[0].mxu0
      %600 = vmatprep.mubr.f32.mxu0 0.0
      %601 = vmatmul.mubr.f32.gmra.mrb[0].mxu0 %v403
      %v602 = vpop.f32.mrb[0].mxu0
      %v603 = vadd.f32 0.0, %v602
      %v604 = vpop.f32.mrb[0].mxu0
      %605 = vmatprep.mubr.f32.mxu0 0.0
      %606 = vmatmul.mubr.f32.gmra.mrb[0].mxu0 %v406
      %v607 = vpop.f32.mrb[0].mxu0
      %v608 = vadd.f32 0.0, %v607
      %v609 = vpop.f32.mrb[0].mxu0
      %610 = vmatprep.mubr.f32.mxu0 0.0
      %611 = vmatmul.mubr.f32.gmra.mrb[0].mxu0 %v409
      %v612 = vpop.f32.mrb[0].mxu0
      %v613 = vadd.f32 0.0, %v612
      %v614 = vpop.f32.mrb[0].mxu0
      %615 = vmatprep.mubr.f32.mxu0 0.0
      %616 = vmatmul.mubr.f32.gmra.mrb[0].mxu0 %v412
      %v617 = vpop.f32.mrb[0].mxu0
      %v618 = vadd.f32 0.0, %v617
      %v619 = vpop.f32.mrb[0].mxu0
      %620 = vmatprep.mubr.f32.mxu0 0.0
      %621 = vmatmul.mubr.f32.gmra.mrb[0].mxu0 %v415
      %v622 = vpop.f32.mrb[0].mxu0
      %v623 = vadd.f32 0.0, %v622
      %v624 = vpop.f32.mrb[0].mxu0
      %625 = vmatprep.mubr.f32.mxu0 0.0
      %626 = vmatmul.mubr.f32.gmra.mrb[0].mxu0 %v418
      %v627 = vpop.f32.mrb[0].mxu0
      %v628 = vadd.f32 0.0, %v627
      %v629 = vpop.f32.mrb[0].mxu0
      %630 = vmatprep.mubr.f32.mxu0 0.0
      %631 = vmatmul.mubr.f32.gmra.mrb[0].mxu0 %v421
      %v632 = vpop.f32.mrb[0].mxu0
      %v633 = vadd.f32 0.0, %v632
      %v634 = vpop.f32.mrb[0].mxu0
      %635 = vmatprep.mubr.f32.mxu0 0.0
      %636 = vmatmul.mubr.f32.gmra.mrb[0].mxu0 %v424
      %v637 = vpop.f32.mrb[0].mxu0
      %v638 = vadd.f32 0.0, %v637
      %v639 = vpop.f32.mrb[0].mxu0
      %640 = vmatprep.mubr.f32.mxu0 0.0
      %641 = vmatmul.mubr.f32.gmra.mrb[0].mxu0 %v427
      %v642 = vpop.f32.mrb[0].mxu0
      %v643 = vadd.f32 0.0, %v642
      %v644 = vpop.f32.mrb[0].mxu0
      %645 = vmatprep.mubr.f32.mxu0 0.0
      %646 = vmatmul.mubr.f32.gmra.mrb[0].mxu0 %v430
      %v647 = vpop.f32.mrb[0].mxu0
      %v648 = vadd.f32 0.0, %v647
      %v649 = vpop.f32.mrb[0].mxu0
      %650 = vmatprep.mubr.f32.mxu0 0.0
      %651 = vmatmul.mubr.f32.gmra.mrb[0].mxu0 %v433
      %v652 = vpop.f32.mrb[0].mxu0
      %v653 = vadd.f32 0.0, %v652
      %v654 = vpop.f32.mrb[0].mxu0
      %655 = vmatprep.mubr.f32.mxu0 0.0
      %656 = vmatmul.mubr.f32.gmra.mrb[0].mxu0 %v436
      %v657 = vpop.f32.mrb[0].mxu0
      %v658 = vadd.f32 0.0, %v657
      %v659 = vpop.f32.mrb[0].mxu0
      %660 = vmatprep.mubr.f32.mxu0 0.0
      %661 = vmatmul.mubr.f32.gmra.mrb[0].mxu0 %v439
      %v662 = vpop.f32.mrb[0].mxu0
      %v663 = vadd.f32 0.0, %v662
      %v664 = vpop.f32.mrb[0].mxu0
      %665 = vdwg.mxu0
      %v666 = vadd.f32 %v508, %v513
      %v667 = vadd.f32 %v666, %v518
      %v668 = vadd.f32 %v667, %v523
      %v669 = vadd.f32 %v668, %v528
      %v670 = vadd.f32 %v669, %v533
      %v671 = vadd.f32 %v670, %v538
      %v672 = vadd.f32 %v671, %v543
      %v673 = vadd.f32 %v672, %v548
      %v674 = vadd.f32 %v673, %v553
      %v675 = vadd.f32 %v674, %v558
      %v676 = vadd.f32 %v675, %v563
      %v677 = vadd.f32 %v676, %v568
      %v678 = vadd.f32 %v677, %v573
      %v679 = vadd.f32 %v678, %v578
      %v680 = vadd.f32 %v679, %v583
      %v681 = vadd.f32 %v680, %v588
      %v682 = vadd.f32 %v681, %v593
      %v683 = vadd.f32 %v682, %v598
      %v684 = vadd.f32 %v683, %v603
      %v685 = vadd.f32 %v684, %v608
      %v686 = vadd.f32 %v685, %v613
      %v687 = vadd.f32 %v686, %v618
      %v688 = vadd.f32 %v687, %v623
      %v689 = vadd.f32 %v688, %v628
      %v690 = vadd.f32 %v689, %v633
      %v691 = vadd.f32 %v690, %v638
      %v692 = vadd.f32 %v691, %v643
      %v693 = vadd.f32 %v692, %v648
      %v694 = vadd.f32 %v693, %v653
      %v695 = vadd.f32 %v694, %v658
      %v696 = vadd.f32 %v695, %v663
      %v697 = vrot.slane %v696, 4
      %v698 = vadd.f32 %v696, %v697
      %v699 = vrot.slane %v698, 2
      %v700 = vadd.f32 %v698, %v699
      %v701 = vrot.slane %v700, 1
      %v702 = vadd.f32 %v700, %v701
      %v703 = vrcp.pop 256.0
      %v704 = vmul.f32 %v702, %v703
      %v705 = vsub.f32 %v508, %v704
      %v706 = vsub.f32 %v513, %v704
      %v707 = vsub.f32 %v518, %v704
      %v708 = vsub.f32 %v523, %v704
      %v709 = vsub.f32 %v528, %v704
      %v710 = vsub.f32 %v533, %v704
      %v711 = vsub.f32 %v538, %v704
      %v712 = vsub.f32 %v543, %v704
      %v713 = vsub.f32 %v548, %v704
      %v714 = vsub.f32 %v553, %v704
      %v715 = vsub.f32 %v558, %v704
      %v716 = vsub.f32 %v563, %v704
      %v717 = vsub.f32 %v568, %v704
      %v718 = vsub.f32 %v573, %v704
      %v719 = vsub.f32 %v578, %v704
      %v720 = vsub.f32 %v583, %v704
      %v721 = vsub.f32 %v588, %v704
      %v722 = vsub.f32 %v593, %v704
      %v723 = vsub.f32 %v598, %v704
      %v724 = vsub.f32 %v603, %v704
      %v725 = vsub.f32 %v608, %v704
      %v726 = vsub.f32 %v613, %v704
      %v727 = vsub.f32 %v618, %v704
      %v728 = vsub.f32 %v623, %v704
      %v729 = vsub.f32 %v628, %v704
      %v730 = vsub.f32 %v633, %v704
      %v731 = vsub.f32 %v638, %v704
      %v732 = vsub.f32 %v643, %v704
      %v733 = vsub.f32 %v648, %v704
      %v734 = vsub.f32 %v653, %v704
      %v735 = vsub.f32 %v658, %v704
      %v736 = vsub.f32 %v663, %v704
      %v737 = vmul.f32 %v705, %v705
      %v738 = vmul.f32 %v706, %v706
      %v739 = vmul.f32 %v707, %v707
      %v740 = vmul.f32 %v708, %v708
      %v741 = vmul.f32 %v709, %v709
      %v742 = vmul.f32 %v710, %v710
      %v743 = vmul.f32 %v711, %v711
      %v744 = vmul.f32 %v712, %v712
      %v745 = vmul.f32 %v713, %v713
      %v746 = vmul.f32 %v714, %v714
      %v747 = vmul.f32 %v715, %v715
      %v748 = vmul.f32 %v716, %v716
      %v749 = vmul.f32 %v717, %v717
      %v750 = vmul.f32 %v718, %v718
      %v751 = vmul.f32 %v719, %v719
      %v752 = vmul.f32 %v720, %v720
      %v753 = vmul.f32 %v721, %v721
      %v754 = vmul.f32 %v722, %v722
      %v755 = vmul.f32 %v723, %v723
      %v756 = vmul.f32 %v724, %v724
      %v757 = vmul.f32 %v725, %v725
      %v758 = vmul.f32 %v726, %v726
      %v759 = vmul.f32 %v727, %v727
      %v760 = vmul.f32 %v728, %v728
      %v761 = vmul.f32 %v729, %v729
      %v762 = vmul.f32 %v730, %v730
      %v763 = vmul.f32 %v731, %v731
      %v764 = vmul.f32 %v732, %v732
      %v765 = vmul.f32 %v733, %v733
      %v766 = vmul.f32 %v734, %v734
      %v767 = vmul.f32 %v735, %v735
      %v768 = vmul.f32 %v736, %v736
      %v769 = vadd.f32 %v737, %v738
      %v770 = vadd.f32 %v769, %v739
      %v771 = vadd.f32 %v770, %v740
      %v772 = vadd.f32 %v771, %v741
      %v773 = vadd.f32 %v772, %v742
      %v774 = vadd.f32 %v773, %v743
      %v775 = vadd.f32 %v774, %v744
      %v776 = vadd.f32 %v775, %v745
      %v777 = vadd.f32 %v776, %v746
      %v778 = vadd.f32 %v777, %v747
      %v779 = vadd.f32 %v778, %v748
      %v780 = vadd.f32 %v779, %v749
      %v781 = vadd.f32 %v780, %v750
      %v782 = vadd.f32 %v781, %v751
      %v783 = vadd.f32 %v782, %v752
      %v784 = vadd.f32 %v783, %v753
      %v785 = vadd.f32 %v784, %v754
      %v786 = vadd.f32 %v785, %v755
      %v787 = vadd.f32 %v786, %v756
      %v788 = vadd.f32 %v787, %v757
      %v789 = vadd.f32 %v788, %v758
      %v790 = vadd.f32 %v789, %v759
      %v791 = vadd.f32 %v790, %v760
      %v792 = vadd.f32 %v791, %v761
      %v793 = vadd.f32 %v792, %v762
      %v794 = vadd.f32 %v793, %v763
      %v795 = vadd.f32 %v794, %v764
      %v796 = vadd.f32 %v795, %v765
      %v797 = vadd.f32 %v796, %v766
      %v798 = vadd.f32 %v797, %v767
      %v799 = vadd.f32 %v798, %v768
      %v800 = vrot.slane %v799, 4
      %v801 = vadd.f32 %v799, %v800
      %v802 = vrot.slane %v801, 2
      %v803 = vadd.f32 %v801, %v802
      %v804 = vrot.slane %v803, 1
      %v805 = vadd.f32 %v803, %v804
      %vm806 = vcmask 1040384
      %v807 = vsel %vm806, %v702, %v805
      %808 = vst [vmem:[%s197] sm:$0x3] %v807
      %p809 = scmp.lt.s32.totalorder %s15, 1
      %s810 = scalar_select %p809, %s15, 1
      %s811 = smul.addr %s810, 2
      %s812 = scalar_lea.vmem %s4, %s811
      // Predicated region
      $region37: #{resbottleneck_forward.6} parent=35 // pred_check
        %p813 = pneg %p122
      $region38: #{resbottleneck_forward.6} parent=35 // pred_check_branch
        %815 = sbr.rel (%p813) target = $region40
      $region39: #{resbottleneck_forward.6} parent=35 // pred_region
        _
      $region40: #{resbottleneck_forward.6} parent=35 // pred_fallthru
        _
    $region36: #{resbottleneck_forward.6} parent=5 // pred_fallthru
      _
    %p816 = scmp.le.s32.totalorder 2, %s10
    // Predicated region
    $region41: #{resbottleneck_forward.6} parent=5 // pred_check
      %p817 = pneg %p816
    $region42: #{resbottleneck_forward.6} parent=5 // pred_check_branch
      %819 = sbr.rel (%p817) target = $region44
    $region43: #{resbottleneck_forward.6} parent=5 // pred_region
      %s820 = ssub.s32 %s10, 2
      // Predicated region
      $region45: #{resbottleneck_forward.6} parent=43 // pred_check
        %p821 = pneg %p128
      $region46: #{resbottleneck_forward.6} parent=43 // pred_check_branch
        %823 = sbr.rel (%p821) target = $region48
      $region47: #{resbottleneck_forward.6} parent=43 // pred_region
        %p824 = scmp.lt.s32.totalorder %s16, 1
        %s825 = scalar_select %p824, %s16, 1
        %s826 = smul.addr %s825, 2
        %s827 = scalar_lea.vmem %s4, %s826
      $region48: #{resbottleneck_forward.6} parent=43 // pred_fallthru
        _
    $region44: #{resbottleneck_forward.6} parent=5 // pred_fallthru
      _
  $region6: #{resbottleneck_forward.6} parent=0 // loop_footer
    %s14 = sadd.s32 1, %s10
  $region7: #{resbottleneck_forward.6} parent=0 // loop_footer_branch
    %9 = sbr.rel target = $region3
  $region8: #{resbottleneck_forward.6} parent=0 // loop_exit
    _

// kernel: resbottleneck_forward.5
$region0: #{resbottleneck_forward.5}
  #allocation0 [shape = 'u32[]', space=smem, size = 0x4, offset = 0x4, fixed_abs, tag = 'smem constant byte address 0x4 - core index']
  #allocation1 [shape = 'u32[144,128]{1,0:T(1,128)}', space=vmem, size = 0x12000, scoped, tag = 'internal scratch']
  %s0 = inlined_call_operand.vmem [shape: f32[2,16,16,32], index: 0, kind: input, shape index: {}]
  %s1 = inlined_call_operand.vmem [shape: f32[1,32], index: 1, kind: input, shape index: {}]
  %s2 = inlined_call_operand.vmem [shape: f32[1,32], index: 2, kind: input, shape index: {}]
  %s3 = inlined_call_operand.vmem [shape: f32[288,32], index: 3, kind: input, shape index: {}]
  %s4 = inlined_call_operand.vmem [shape: f32[512,32], index: 4, kind: output, shape index: {0}]
  %s5 = inlined_call_operand.vmem [shape: f32[2,2,32], index: 5, kind: output, shape index: {1}]
  %6 = xla_tuple %s4, %s5
  %s7 = sld [smem:[#allocation0]]
  $region57: #{resbottleneck_forward.5} parent=0
    _
  %s9 = ssub.s32 1, %s7
  %s10 = scalar_select 0, %s9, %s7
  loop: start=0, step=1, limit=4
  $region2: #{resbottleneck_forward.5} parent=0 // loop_pre_header
    _
  $region3: #{resbottleneck_forward.5} parent=0 // loop_header
    %s12 = sphi 0, %s16
    %p13 = scmp.ge.s32.totalorder %s12, 4
    %s22 = sphi 0, %s24
    %s25 = sphi 0, %s22
    %s26 = sphi 0, %s25
    %s42 = sphi 0, %s26
    %s46 = sphi 0, %s46
    %s48 = sphi 0, %s46
    %s49 = sphi 0, %s48
    %s63 = sphi 0, %s49
    %s67 = sphi 0, %s67
    %s69 = sphi 0, %s67
    %s70 = sphi 0, %s69
    %s84 = sphi 0, %s70
    %s88 = sphi 0, %s88
    %s90 = sphi 0, %s88
    %s91 = sphi 0, %s90
    %s105 = sphi 0, %s91
    %s111 = sphi 0, %s113
    %s114 = sphi 0, %s111
    %s115 = sphi 0, %s114
    %s131 = sphi 0, %s115
    %s137 = sphi 0, %s139
    %s140 = sphi 0, %s137
    %s141 = sphi 0, %s140
    %s157 = sphi 0, %s141
  $region4: #{resbottleneck_forward.5} parent=0 // loop_header_branch
    %15 = sbr.rel (%p13) target = $region8
  $region5: #{resbottleneck_forward.5} parent=0 // loop_body
    %s17 = ssub.s32 %s12, 1
    %s18 = ssub.s32 %s12, 2
    %s19 = sadd.s32 %s12, 1
    %s20 = ssub.s32 %s12, %s19
    %p21 = scmp.eq.s32.totalorder %s20, 0
    %s23 = sadd.s32 %s22, 1
    %s24 = scalar_select %p21, %s22, %s23
    %p27 = pneg %p21
    %p28 = scmp.eq.s32.totalorder %s12, 1
    %p29 = por %p27, %p28
    %p30 = scmp.ne.s32.totalorder %s22, %s25
    %p31 = scmp.eq.s32.totalorder %s12, 0
    %p32 = por %p30, %p31
    %p33 = scmp.ne.s32.totalorder %s22, %s25
    %p34 = scmp.eq.s32.totalorder %s17, 1
    %p35 = por %p33, %p34
    %p36 = scmp.ne.s32.totalorder %s25, %s26
    %p37 = scmp.eq.s32.totalorder %s17, 0
    %p38 = por %p36, %p37
    %p39 = scmp.ne.s32.totalorder %s25, %s26
    %p40 = scmp.eq.s32.totalorder %s18, 1
    %p41 = por %p39, %p40
    %p43 = scmp.ne.s32.totalorder %s26, %s42
    %p44 = scmp.eq.s32.totalorder %s18, 0
    %p45 = por %p43, %p44
    %s47 = sadd.s32 %s46, 1
    %p50 = scmp.eq.s32.totalorder %s12, 1
    %p51 = scmp.ne.s32.totalorder %s46, %s48
    %p52 = scmp.eq.s32.totalorder %s12, 0
    %p53 = por %p51, %p52
    %p54 = scmp.ne.s32.totalorder %s46, %s48
    %p55 = scmp.eq.s32.totalorder %s17, 1
    %p56 = por %p54, %p55
    %p57 = scmp.ne.s32.totalorder %s48, %s49
    %p58 = scmp.eq.s32.totalorder %s17, 0
    %p59 = por %p57, %p58
    %p60 = scmp.ne.s32.totalorder %s48, %s49
    %p61 = scmp.eq.s32.totalorder %s18, 1
    %p62 = por %p60, %p61
    %p64 = scmp.ne.s32.totalorder %s49, %s63
    %p65 = scmp.eq.s32.totalorder %s18, 0
    %p66 = por %p64, %p65
    %s68 = sadd.s32 %s67, 1
    %p71 = scmp.eq.s32.totalorder %s12, 1
    %p72 = scmp.ne.s32.totalorder %s67, %s69
    %p73 = scmp.eq.s32.totalorder %s12, 0
    %p74 = por %p72, %p73
    %p75 = scmp.ne.s32.totalorder %s67, %s69
    %p76 = scmp.eq.s32.totalorder %s17, 1
    %p77 = por %p75, %p76
    %p78 = scmp.ne.s32.totalorder %s69, %s70
    %p79 = scmp.eq.s32.totalorder %s17, 0
    %p80 = por %p78, %p79
    %p81 = scmp.ne.s32.totalorder %s69, %s70
    %p82 = scmp.eq.s32.totalorder %s18, 1
    %p83 = por %p81, %p82
    %p85 = scmp.ne.s32.totalorder %s70, %s84
    %p86 = scmp.eq.s32.totalorder %s18, 0
    %p87 = por %p85, %p86
    %s89 = sadd.s32 %s88, 1
    %p92 = scmp.eq.s32.totalorder %s12, 1
    %p93 = scmp.ne.s32.totalorder %s88, %s90
    %p94 = scmp.eq.s32.totalorder %s12, 0
    %p95 = por %p93, %p94
    %p96 = scmp.ne.s32.totalorder %s88, %s90
    %p97 = scmp.eq.s32.totalorder %s17, 1
    %p98 = por %p96, %p97
    %p99 = scmp.ne.s32.totalorder %s90, %s91
    %p100 = scmp.eq.s32.totalorder %s17, 0
    %p101 = por %p99, %p100
    %p102 = scmp.ne.s32.totalorder %s90, %s91
    %p103 = scmp.eq.s32.totalorder %s18, 1
    %p104 = por %p102, %p103
    %p106 = scmp.ne.s32.totalorder %s91, %s105
    %p107 = scmp.eq.s32.totalorder %s18, 0
    %p108 = por %p106, %p107
    %s109 = ssub.s32 %s12, %s19
    %p110 = scmp.eq.s32.totalorder %s109, 0
    %s112 = sadd.s32 %s111, 1
    %s113 = scalar_select %p110, %s111, %s112
    %p116 = pneg %p110
    %p117 = scmp.eq.s32.totalorder %s12, 1
    %p118 = por %p116, %p117
    %p119 = scmp.ne.s32.totalorder %s111, %s114
    %p120 = scmp.eq.s32.totalorder %s12, 0
    %p121 = por %p119, %p120
    %p122 = scmp.ne.s32.totalorder %s111, %s114
    %p123 = scmp.eq.s32.totalorder %s17, 1
    %p124 = por %p122, %p123
    %p125 = scmp.ne.s32.totalorder %s114, %s115
    %p126 = scmp.eq.s32.totalorder %s17, 0
    %p127 = por %p125, %p126
    %p128 = scmp.ne.s32.totalorder %s114, %s115
    %p129 = scmp.eq.s32.totalorder %s18, 1
    %p130 = por %p128, %p129
    %p132 = scmp.ne.s32.totalorder %s115, %s131
    %p133 = scmp.eq.s32.totalorder %s18, 0
    %p134 = por %p132, %p133
    %s135 = ssub.s32 %s12, %s19
    %p136 = scmp.eq.s32.totalorder %s135, 0
    %s138 = sadd.s32 %s137, 1
    %s139 = scalar_select %p136, %s137, %s138
    %p142 = pneg %p136
    %p143 = scmp.eq.s32.totalorder %s12, 1
    %p144 = por %p142, %p143
    %p145 = scmp.ne.s32.totalorder %s137, %s140
    %p146 = scmp.eq.s32.totalorder %s12, 0
    %p147 = por %p145, %p146
    %p148 = scmp.ne.s32.totalorder %s137, %s140
    %p149 = scmp.eq.s32.totalorder %s17, 1
    %p150 = por %p148, %p149
    %p151 = scmp.ne.s32.totalorder %s140, %s141
    %p152 = scmp.eq.s32.totalorder %s17, 0
    %p153 = por %p151, %p152
    %p154 = scmp.ne.s32.totalorder %s140, %s141
    %p155 = scmp.eq.s32.totalorder %s18, 1
    %p156 = por %p154, %p155
    %p158 = scmp.ne.s32.totalorder %s141, %s157
    %p159 = scmp.eq.s32.totalorder %s18, 0
    %p160 = por %p158, %p159
    %p161 = scmp.le.s32.totalorder 1, %s12
    %p162 = scmp.lt.s32.totalorder %s12, 3
    %p163 = pnand %p161, %p162
    %p164 = pneg %p163
    // Predicated region
    $region9: #{resbottleneck_forward.5} parent=5 // pred_check
      _
    $region10: #{resbottleneck_forward.5} parent=5 // pred_check_branch
      %166 = sbr.rel (%p163) target = $region12
    $region11: #{resbottleneck_forward.5} parent=5 // pred_region
      %s167 = ssub.s32 %s12, 1
      // Predicated region
      $region13: #{resbottleneck_forward.5} parent=11 // pred_check
        %p168 = pneg %p59
      $region14: #{resbottleneck_forward.5} parent=11 // pred_check_branch
        %170 = sbr.rel (%p168) target = $region16
      $region15: #{resbottleneck_forward.5} parent=11 // pred_region
        _
      $region16: #{resbottleneck_forward.5} parent=11 // pred_fallthru
        _
      // Predicated region
      $region17: #{resbottleneck_forward.5} parent=11 // pred_check
        %p171 = pneg %p80
      $region18: #{resbottleneck_forward.5} parent=11 // pred_check_branch
        %173 = sbr.rel (%p171) target = $region20
      $region19: #{resbottleneck_forward.5} parent=11 // pred_region
        _
      $region20: #{resbottleneck_forward.5} parent=11 // pred_fallthru
        _
      // Predicated region
      $region21: #{resbottleneck_forward.5} parent=11 // pred_check
        %p174 = pneg %p101
      $region22: #{resbottleneck_forward.5} parent=11 // pred_check_branch
        %176 = sbr.rel (%p174) target = $region24
      $region23: #{resbottleneck_forward.5} parent=11 // pred_region
        _
      $region24: #{resbottleneck_forward.5} parent=11 // pred_fallthru
        _
    $region12: #{resbottleneck_forward.5} parent=5 // pred_fallthru
      _
    %p177 = scmp.lt.s32.totalorder %s12, 2
    // Predicated region
    $region25: #{resbottleneck_forward.5} parent=5 // pred_check
      %p178 = pneg %p177
    $region26: #{resbottleneck_forward.5} parent=5 // pred_check_branch
      %180 = sbr.rel (%p178) target = $region28
    $region27: #{resbottleneck_forward.5} parent=5 // pred_region
      // Predicated region
      $region29: #{resbottleneck_forward.5} parent=27 // pred_check
        %p181 = pneg %p32
      $region30: #{resbottleneck_forward.5} parent=27 // pred_check_branch
        %183 = sbr.rel (%p181) target = $region32
      $region31: #{resbottleneck_forward.5} parent=27 // pred_region
        %p184 = scmp.lt.s32.totalorder %s12, 1
        %s185 = scalar_select %p184, %s12, 1
        %s186 = smul.addr %s185, 32
        %s187 = smul.addr %s186, 8
        %s188 = scalar_lea.vmem %s0, %s187
      $region32: #{resbottleneck_forward.5} parent=27 // pred_fallthru
        _
    $region28: #{resbottleneck_forward.5} parent=5 // pred_fallthru
      _
    %p189 = scmp.le.s32.totalorder 1, %s12
    %p190 = scmp.lt.s32.totalorder %s12, 3
    %p191 = pnand %p189, %p190
    %p192 = pneg %p191
    // Predicated region
    $region33: #{resbottleneck_forward.5} parent=5 // pred_check
      _
    $region34: #{resbottleneck_forward.5} parent=5 // pred_check_branch
      %194 = sbr.rel (%p191) target = $region36
    $region35: #{resbottleneck_forward.5} parent=5 // pred_region
      %s195 = ssub.s32 %s12, 1
      %p196 = scmp.lt.s32.totalorder %s17, 1
      %s197 = scalar_select %p196, %s17, 1
      %s198 = smul.addr %s197, 32
      %s199 = smul.addr %s198, 8
      %s200 = scalar_lea.vmem %s0, %s199
      %p201 = pneg %p38
      %p202 = pneg %p35
      %p203 = pneg %p59
      %p204 = pneg %p56
      %p205 = pneg %p80
      %p206 = pneg %p77
      %p207 = pneg %p101
      %p208 = pneg %p98
      %p209 = pneg %p127
      %p210 = pneg %p124
      %s211 = smul.u32 32, %s17
      %p212 = scmp.lt.s32.totalorder %s211, 63
      %s213 = scalar_select %p212, %s211, 63
      %s214 = smul.addr %s213, 8
      %s215 = scalar_lea.vmem %s4, %s214
      %p216 = pneg %p153
      %p217 = pneg %p150
      %p218 = scmp.lt.s32.totalorder %s17, 1
      %s219 = scalar_select %p218, %s17, 1
      %s220 = smul.addr %s219, 2
      %s221 = scalar_lea.vmem %s5, %s220
      %p222 = scmp.lt.s32.totalorder %s17, 1
      %s223 = scalar_select %p222, %s17, 1
      %s224 = smul.addr %s223, 32
      %s225 = smul.addr %s224, 8
      %s226 = scalar_lea.vmem %s0, %s225
      %s227 = smul.u32 32, %s17
      %p228 = scmp.lt.s32.totalorder %s227, 63
      %s229 = scalar_select %p228, %s227, 63
      %s230 = smul.addr %s229, 8
      %s231 = scalar_lea.vmem %s4, %s230
      %s232 = smul.u32 32, %s17
      %p233 = scmp.lt.s32.totalorder %s17, 1
      %s234 = scalar_select %p233, %s17, 1
      %s235 = smul.addr %s234, 2
      %s236 = scalar_lea.vmem %s5, %s235
      %v237 = vld [vmem:[%s226] sm:$0xff]
      %v238 = vld [vmem:[%s226 + $0x8] sm:$0xff]
      %v239 = vld [vmem:[%s226 + $0x10] sm:$0xff]
      %v240 = vld [vmem:[%s226 + $0x18] sm:$0xff]
      %v241 = vld [vmem:[%s226 + $0x20] sm:$0xff]
      %v242 = vld [vmem:[%s226 + $0x28] sm:$0xff]
      %v243 = vld [vmem:[%s226 + $0x30] sm:$0xff]
      %v244 = vld [vmem:[%s226 + $0x38] sm:$0xff]
      %v245 = vld [vmem:[%s226 + $0x40] sm:$0xff]
      %v246 = vld [vmem:[%s226 + $0x48] sm:$0xff]
      %v247 = vld [vmem:[%s226 + $0x50] sm:$0xff]
      %v248 = vld [vmem:[%s226 + $0x58] sm:$0xff]
      %v249 = vld [vmem:[%s226 + $0x60] sm:$0xff]
      %v250 = vld [vmem:[%s226 + $0x68] sm:$0xff]
      %v251 = vld [vmem:[%s226 + $0x70] sm:$0xff]
      %v252 = vld [vmem:[%s226 + $0x78] sm:$0xff]
      %v253 = vld [vmem:[%s226 + $0x80] sm:$0xff]
      %v254 = vld [vmem:[%s226 + $0x88] sm:$0xff]
      %v255 = vld [vmem:[%s226 + $0x90] sm:$0xff]
      %v256 = vld [vmem:[%s226 + $0x98] sm:$0xff]
      %v257 = vld [vmem:[%s226 + $0xa0] sm:$0xff]
      %v258 = vld [vmem:[%s226 + $0xa8] sm:$0xff]
      %v259 = vld [vmem:[%s226 + $0xb0] sm:$0xff]
      %v260 = vld [vmem:[%s226 + $0xb8] sm:$0xff]
      %v261 = vld [vmem:[%s226 + $0xc0] sm:$0xff]
      %v262 = vld [vmem:[%s226 + $0xc8] sm:$0xff]
      %v263 = vld [vmem:[%s226 + $0xd0] sm:$0xff]
      %v264 = vld [vmem:[%s226 + $0xd8] sm:$0xff]
      %v265 = vld [vmem:[%s226 + $0xe0] sm:$0xff]
      %v266 = vld [vmem:[%s226 + $0xe8] sm:$0xff]
      %v267 = vld [vmem:[%s226 + $0xf0] sm:$0xff]
      %v268 = vld [vmem:[%s226 + $0xf8] sm:$0xff]
      %v269 = vld [vmem:[%s1] sm:$0x1]
      %v271 = vlaneseq
      %v272 = vshrl.u32 %v271, 7
      %v273 = vsub.s32 0, %v272
      %v274 = vrot.slane %v269, %v273
      %v276 = vmul.f32 %v237, %v274
      %v277 = vmul.f32 %v238, %v274
      %v278 = vmul.f32 %v239, %v274
      %v279 = vmul.f32 %v240, %v274
      %v280 = vmul.f32 %v241, %v274
      %v281 = vmul.f32 %v242, %v274
      %v282 = vmul.f32 %v243, %v274
      %v283 = vmul.f32 %v244, %v274
      %v284 = vmul.f32 %v245, %v274
      %v285 = vmul.f32 %v246, %v274
      %v286 = vmul.f32 %v247, %v274
      %v287 = vmul.f32 %v248, %v274
      %v288 = vmul.f32 %v249, %v274
      %v289 = vmul.f32 %v250, %v274
      %v290 = vmul.f32 %v251, %v274
      %v291 = vmul.f32 %v252, %v274
      %v292 = vmul.f32 %v253, %v274
      %v293 = vmul.f32 %v254, %v274
      %v294 = vmul.f32 %v255, %v274
      %v295 = vmul.f32 %v256, %v274
      %v296 = vmul.f32 %v257, %v274
      %v297 = vmul.f32 %v258, %v274
      %v298 = vmul.f32 %v259, %v274
      %v299 = vmul.f32 %v260, %v274
      %v300 = vmul.f32 %v261, %v274
      %v301 = vmul.f32 %v262, %v274
      %v302 = vmul.f32 %v263, %v274
      %v303 = vmul.f32 %v264, %v274
      %v304 = vmul.f32 %v265, %v274
      %v305 = vmul.f32 %v266, %v274
      %v306 = vmul.f32 %v267, %v274
      %v307 = vmul.f32 %v268, %v274
      %v308 = vld [vmem:[%s2] sm:$0x1]
      %v310 = vlaneseq
      %v311 = vshrl.u32 %v310, 7
      %v312 = vsub.s32 0, %v311
      %v313 = vrot.slane %v308, %v312
      %v315 = vadd.f32 %v276, %v313
      %v316 = vadd.f32 %v277, %v313
      %v317 = vadd.f32 %v278, %v313
      %v318 = vadd.f32 %v279, %v313
      %v319 = vadd.f32 %v280, %v313
      %v320 = vadd.f32 %v281, %v313
      %v321 = vadd.f32 %v282, %v313
      %v322 = vadd.f32 %v283, %v313
      %v323 = vadd.f32 %v284, %v313
      %v324 = vadd.f32 %v285, %v313
      %v325 = vadd.f32 %v286, %v313
      %v326 = vadd.f32 %v287, %v313
      %v327 = vadd.f32 %v288, %v313
      %v328 = vadd.f32 %v289, %v313
      %v329 = vadd.f32 %v290, %v313
      %v330 = vadd.f32 %v291, %v313
      %v331 = vadd.f32 %v292, %v313
      %v332 = vadd.f32 %v293, %v313
      %v333 = vadd.f32 %v294, %v313
      %v334 = vadd.f32 %v295, %v313
      %v335 = vadd.f32 %v296, %v313
      %v336 = vadd.f32 %v297, %v313
      %v337 = vadd.f32 %v298, %v313
      %v338 = vadd.f32 %v299, %v313
      %v339 = vadd.f32 %v300, %v313
      %v340 = vadd.f32 %v301, %v313
      %v341 = vadd.f32 %v302, %v313
      %v342 = vadd.f32 %v303, %v313
      %v343 = vadd.f32 %v304, %v313
      %v344 = vadd.f32 %v305, %v313
      %v345 = vadd.f32 %v306, %v313
      %v346 = vadd.f32 %v307, %v313
      %v347 = vmax.f32 %v315, 0.0
      %v348 = vmax.f32 %v316, 0.0
      %v349 = vmax.f32 %v317, 0.0
      %v350 = vmax.f32 %v318, 0.0
      %v351 = vmax.f32 %v319, 0.0
      %v352 = vmax.f32 %v320, 0.0
      %v353 = vmax.f32 %v321, 0.0
      %v354 = vmax.f32 %v322, 0.0
      %v355 = vmax.f32 %v323, 0.0
      %v356 = vmax.f32 %v324, 0.0
      %v357 = vmax.f32 %v325, 0.0
      %v358 = vmax.f32 %v326, 0.0
      %v359 = vmax.f32 %v327, 0.0
      %v360 = vmax.f32 %v328, 0.0
      %v361 = vmax.f32 %v329, 0.0
      %v362 = vmax.f32 %v330, 0.0
      %v363 = vmax.f32 %v331, 0.0
      %v364 = vmax.f32 %v332, 0.0
      %v365 = vmax.f32 %v333, 0.0
      %v366 = vmax.f32 %v334, 0.0
      %v367 = vmax.f32 %v335, 0.0
      %v368 = vmax.f32 %v336, 0.0
      %v369 = vmax.f32 %v337, 0.0
      %v370 = vmax.f32 %v338, 0.0
      %v371 = vmax.f32 %v339, 0.0
      %v372 = vmax.f32 %v340, 0.0
      %v373 = vmax.f32 %v341, 0.0
      %v374 = vmax.f32 %v342, 0.0
      %v375 = vmax.f32 %v343, 0.0
      %v376 = vmax.f32 %v344, 0.0
      %v377 = vmax.f32 %v345, 0.0
      %v378 = vmax.f32 %v346, 0.0
      %vm411 = vcmask 1040384
      %v412 = vrot.slane %v347, 7
      %v413 = vrot.slane %v348, 7
      %v414 = vsel %vm411, %v412, %v413
      %v415 = vrot.slane %v349, 7
      %v416 = vrot.slane %v350, 7
      %v417 = vsel %vm411, %v415, %v416
      %v418 = vrot.slane %v351, 7
      %v419 = vrot.slane %v352, 7
      %v420 = vsel %vm411, %v418, %v419
      %v421 = vrot.slane %v353, 7
      %v422 = vrot.slane %v354, 7
      %v423 = vsel %vm411, %v421, %v422
      %v424 = vrot.slane %v355, 7
      %v425 = vrot.slane %v356, 7
      %v426 = vsel %vm411, %v424, %v425
      %v427 = vrot.slane %v357, 7
      %v428 = vrot.slane %v358, 7
      %v429 = vsel %vm411, %v427, %v428
      %v430 = vrot.slane %v359, 7
      %v431 = vrot.slane %v360, 7
      %v432 = vsel %vm411, %v430, %v431
      %v433 = vrot.slane %v361, 7
      %v434 = vrot.slane %v362, 7
      %v435 = vsel %vm411, %v433, %v434
      %v436 = vrot.slane %v363, 7
      %v437 = vrot.slane %v364, 7
      %v438 = vsel %vm411, %v436, %v437
      %v439 = vrot.slane %v365, 7
      %v440 = vrot.slane %v366, 7
      %v441 = vsel %vm411, %v439, %v440
      %v442 = vrot.slane %v367, 7
      %v443 = vrot.slane %v368, 7
      %v444 = vsel %vm411, %v442, %v443
      %v445 = vrot.slane %v369, 7
      %v446 = vrot.slane %v370, 7
      %v447 = vsel %vm411, %v445, %v446
      %v448 = vrot.slane %v371, 7
      %v449 = vrot.slane %v372, 7
      %v450 = vsel %vm411, %v448, %v449
      %v451 = vrot.slane %v373, 7
      %v452 = vrot.slane %v374, 7
      %v453 = vsel %vm411, %v451, %v452
      %v454 = vrot.slane %v375, 7
      %v455 = vrot.slane %v376, 7
      %v456 = vsel %vm411, %v454, %v455
      %v457 = vrot.slane %v377, 7
      %v458 = vrot.slane %v378, 7
      %v459 = vsel %vm411, %v457, %v458
      %v507 = vsel %vm411, 0.0, %v412
      %v508 = vsel %vm411, 0.0, %v415
      %v509 = vsel %vm411, 0.0, %v418
      %v510 = vsel %vm411, 0.0, %v421
      %v511 = vsel %vm411, 0.0, %v424
      %v512 = vsel %vm411, 0.0, %v427
      %v513 = vsel %vm411, 0.0, %v430
      %v514 = vsel %vm411, 0.0, %v433
      %v515 = vsel %vm411, 0.0, %v436
      %v516 = vsel %vm411, 0.0, %v439
      %v517 = vsel %vm411, 0.0, %v442
      %v518 = vsel %vm411, 0.0, %v445
      %v519 = vsel %vm411, 0.0, %v448
      %v520 = vsel %vm411, 0.0, %v451
      %v521 = vsel %vm411, 0.0, %v454
      %v522 = vsel %vm411, 0.0, %v457
      %v523 = vsel %vm411, %v413, 0.0
      %v524 = vsel %vm411, %v416, 0.0
      %v525 = vsel %vm411, %v419, 0.0
      %v526 = vsel %vm411, %v422, 0.0
      %v527 = vsel %vm411, %v425, 0.0
      %v528 = vsel %vm411, %v428, 0.0
      %v529 = vsel %vm411, %v431, 0.0
      %v530 = vsel %vm411, %v434, 0.0
      %v531 = vsel %vm411, %v437, 0.0
      %v532 = vsel %vm411, %v440, 0.0
      %v533 = vsel %vm411, %v443, 0.0
      %v534 = vsel %vm411, %v446, 0.0
      %v535 = vsel %vm411, %v449, 0.0
      %v536 = vsel %vm411, %v452, 0.0
      %v537 = vsel %vm411, %v455, 0.0
      %v538 = vsel %vm411, %v458, 0.0
      %vm570 = vcmask 1046528
      %v571 = vrot.slane 0.0, 1
      %v572 = vsel %vm570, %v571, %v571
      %v573 = vrot.slane %v507, 1
      %v574 = vrot.slane %v414, 1
      %v575 = vsel %vm570, %v573, %v574
      %v576 = vrot.slane %v523, 1
      %v577 = vsel %vm570, %v574, %v576
      %v578 = vrot.slane %v508, 1
      %v579 = vrot.slane %v417, 1
      %v580 = vsel %vm570, %v578, %v579
      %v581 = vrot.slane %v524, 1
      %v582 = vsel %vm570, %v579, %v581
      %v583 = vrot.slane %v509, 1
      %v584 = vrot.slane %v420, 1
      %v585 = vsel %vm570, %v583, %v584
      %v586 = vrot.slane %v525, 1
      %v587 = vsel %vm570, %v584, %v586
      %v588 = vrot.slane %v510, 1
      %v589 = vrot.slane %v423, 1
      %v590 = vsel %vm570, %v588, %v589
      %v591 = vrot.slane %v526, 1
      %v592 = vsel %vm570, %v589, %v591
      %v593 = vrot.slane %v511, 1
      %v594 = vrot.slane %v426, 1
      %v595 = vsel %vm570, %v593, %v594
      %v596 = vrot.slane %v527, 1
      %v597 = vsel %vm570, %v594, %v596
      %v598 = vrot.slane %v512, 1
      %v599 = vrot.slane %v429, 1
      %v600 = vsel %vm570, %v598, %v599
      %v601 = vrot.slane %v528, 1
      %v602 = vsel %vm570, %v599, %v601
      %v603 = vrot.slane %v513, 1
      %v604 = vrot.slane %v432, 1
      %v605 = vsel %vm570, %v603, %v604
      %v606 = vrot.slane %v529, 1
      %v607 = vsel %vm570, %v604, %v606
      %v608 = vrot.slane %v514, 1
      %v609 = vrot.slane %v435, 1
      %v610 = vsel %vm570, %v608, %v609
      %v611 = vrot.slane %v530, 1
      %v612 = vsel %vm570, %v609, %v611
      %v613 = vrot.slane %v515, 1
      %v614 = vrot.slane %v438, 1
      %v615 = vsel %vm570, %v613, %v614
      %v616 = vrot.slane %v531, 1
      %v617 = vsel %vm570, %v614, %v616
      %v618 = vrot.slane %v516, 1
      %v619 = vrot.slane %v441, 1
      %v620 = vsel %vm570, %v618, %v619
      %v621 = vrot.slane %v532, 1
      %v622 = vsel %vm570, %v619, %v621
      %v623 = vrot.slane %v517, 1
      %v624 = vrot.slane %v444, 1
      %v625 = vsel %vm570, %v623, %v624
      %v626 = vrot.slane %v533, 1
      %v627 = vsel %vm570, %v624, %v626
      %v628 = vrot.slane %v518, 1
      %v629 = vrot.slane %v447, 1
      %v630 = vsel %vm570, %v628, %v629
      %v631 = vrot.slane %v534, 1
      %v632 = vsel %vm570, %v629, %v631
      %v633 = vrot.slane %v519, 1
      %v634 = vrot.slane %v450, 1
      %v635 = vsel %vm570, %v633, %v634
      %v636 = vrot.slane %v535, 1
      %v637 = vsel %vm570, %v634, %v636
      %v638 = vrot.slane %v520, 1
      %v639 = vrot.slane %v453, 1
      %v640 = vsel %vm570, %v638, %v639
      %v641 = vrot.slane %v536, 1
      %v642 = vsel %vm570, %v639, %v641
      %v643 = vrot.slane %v521, 1
      %v644 = vrot.slane %v456, 1
      %v645 = vsel %vm570, %v643, %v644
      %v646 = vrot.slane %v537, 1
      %v647 = vsel %vm570, %v644, %v646
      %648 = vrot.lane.b32.xlu0 %v572, 32
      %v649 = vpop.permute.xlu0 %648
      %650 = vrot.lane.b32.xlu0 %v575, 32
      %v651 = vpop.permute.xlu0 %650
      %652 = vrot.lane.b32.xlu0 %v577, 32
      %v653 = vpop.permute.xlu0 %652
      %654 = vrot.lane.b32.xlu0 %v580, 32
      %v655 = vpop.permute.xlu0 %654
      %656 = vrot.lane.b32.xlu0 %v582, 32
      %v657 = vpop.permute.xlu0 %656
      %658 = vrot.lane.b32.xlu0 %v585, 32
      %v659 = vpop.permute.xlu0 %658
      %660 = vrot.lane.b32.xlu0 %v587, 32
      %v661 = vpop.permute.xlu0 %660
      %662 = vrot.lane.b32.xlu0 %v590, 32
      %v663 = vpop.permute.xlu0 %662
      %664 = vrot.lane.b32.xlu0 %v592, 32
      %v665 = vpop.permute.xlu0 %664
      %666 = vrot.lane.b32.xlu0 %v595, 32
      %v667 = vpop.permute.xlu0 %666
      %668 = vrot.lane.b32.xlu0 %v597, 32
      %v669 = vpop.permute.xlu0 %668
      %670 = vrot.lane.b32.xlu0 %v600, 32
      %v671 = vpop.permute.xlu0 %670
      %672 = vrot.lane.b32.xlu0 %v602, 32
      %v673 = vpop.permute.xlu0 %672
      %674 = vrot.lane.b32.xlu0 %v605, 32
      %v675 = vpop.permute.xlu0 %674
      %676 = vrot.lane.b32.xlu0 %v607, 32
      %v677 = vpop.permute.xlu0 %676
      %678 = vrot.lane.b32.xlu0 %v610, 32
      %v679 = vpop.permute.xlu0 %678
      %680 = vrot.lane.b32.xlu0 %v612, 32
      %v681 = vpop.permute.xlu0 %680
      %682 = vrot.lane.b32.xlu0 %v615, 32
      %v683 = vpop.permute.xlu0 %682
      %684 = vrot.lane.b32.xlu0 %v617, 32
      %v685 = vpop.permute.xlu0 %684
      %686 = vrot.lane.b32.xlu0 %v620, 32
      %v687 = vpop.permute.xlu0 %686
      %688 = vrot.lane.b32.xlu0 %v622, 32
      %v689 = vpop.permute.xlu0 %688
      %690 = vrot.lane.b32.xlu0 %v625, 32
      %v691 = vpop.permute.xlu0 %690
      %692 = vrot.lane.b32.xlu0 %v627, 32
      %v693 = vpop.permute.xlu0 %692
      %694 = vrot.lane.b32.xlu0 %v630, 32
      %v695 = vpop.permute.xlu0 %694
      %696 = vrot.lane.b32.xlu0 %v632, 32
      %v697 = vpop.permute.xlu0 %696
      %698 = vrot.lane.b32.xlu0 %v635, 32
      %v699 = vpop.permute.xlu0 %698
      %700 = vrot.lane.b32.xlu0 %v637, 32
      %v701 = vpop.permute.xlu0 %700
      %702 = vrot.lane.b32.xlu0 %v640, 32
      %v703 = vpop.permute.xlu0 %702
      %704 = vrot.lane.b32.xlu0 %v642, 32
      %v705 = vpop.permute.xlu0 %704
      %706 = vrot.lane.b32.xlu0 %v645, 32
      %v707 = vpop.permute.xlu0 %706
      %708 = vrot.lane.b32.xlu0 %v647, 32
      %v709 = vpop.permute.xlu0 %708
      %vm741 = vcmask 1045504
      %v742 = vrot.slane 0.0, 2
      %v743 = vsel %vm741, %v742, %v742
      %v744 = vrot.slane %v507, 2
      %v745 = vrot.slane %v414, 2
      %v746 = vsel %vm741, %v744, %v745
      %v747 = vrot.slane %v523, 2
      %v748 = vsel %vm741, %v745, %v747
      %v749 = vrot.slane %v508, 2
      %v750 = vrot.slane %v417, 2
      %v751 = vsel %vm741, %v749, %v750
      %v752 = vrot.slane %v524, 2
      %v753 = vsel %vm741, %v750, %v752
      %v754 = vrot.slane %v509, 2
      %v755 = vrot.slane %v420, 2
      %v756 = vsel %vm741, %v754, %v755
      %v757 = vrot.slane %v525, 2
      %v758 = vsel %vm741, %v755, %v757
      %v759 = vrot.slane %v510, 2
      %v760 = vrot.slane %v423, 2
      %v761 = vsel %vm741, %v759, %v760
      %v762 = vrot.slane %v526, 2
      %v763 = vsel %vm741, %v760, %v762
      %v764 = vrot.slane %v511, 2
      %v765 = vrot.slane %v426, 2
      %v766 = vsel %vm741, %v764, %v765
      %v767 = vrot.slane %v527, 2
      %v768 = vsel %vm741, %v765, %v767
      %v769 = vrot.slane %v512, 2
      %v770 = vrot.slane %v429, 2
      %v771 = vsel %vm741, %v769, %v770
      %v772 = vrot.slane %v528, 2
      %v773 = vsel %vm741, %v770, %v772
      %v774 = vrot.slane %v513, 2
      %v775 = vrot.slane %v432, 2
      %v776 = vsel %vm741, %v774, %v775
      %v777 = vrot.slane %v529, 2
      %v778 = vsel %vm741, %v775, %v777
      %v779 = vrot.slane %v514, 2
      %v780 = vrot.slane %v435, 2
      %v781 = vsel %vm741, %v779, %v780
      %v782 = vrot.slane %v530, 2
      %v783 = vsel %vm741, %v780, %v782
      %v784 = vrot.slane %v515, 2
      %v785 = vrot.slane %v438, 2
      %v786 = vsel %vm741, %v784, %v785
      %v787 = vrot.slane %v531, 2
      %v788 = vsel %vm741, %v785, %v787
      %v789 = vrot.slane %v516, 2
      %v790 = vrot.slane %v441, 2
      %v791 = vsel %vm741, %v789, %v790
      %v792 = vrot.slane %v532, 2
      %v793 = vsel %vm741, %v790, %v792
      %v794 = vrot.slane %v517, 2
      %v795 = vrot.slane %v444, 2
      %v796 = vsel %vm741, %v794, %v795
      %v797 = vrot.slane %v533, 2
      %v798 = vsel %vm741, %v795, %v797
      %v799 = vrot.slane %v518, 2
      %v800 = vrot.slane %v447, 2
      %v801 = vsel %vm741, %v799, %v800
      %v802 = vrot.slane %v534, 2
      %v803 = vsel %vm741, %v800, %v802
      %v804 = vrot.slane %v519, 2
      %v805 = vrot.slane %v450, 2
      %v806 = vsel %vm741, %v804, %v805
      %v807 = vrot.slane %v535, 2
      %v808 = vsel %vm741, %v805, %v807
      %v809 = vrot.slane %v520, 2
      %v810 = vrot.slane %v453, 2
      %v811 = vsel %vm741, %v809, %v810
      %v812 = vrot.slane %v536, 2
      %v813 = vsel %vm741, %v810, %v812
      %v814 = vrot.slane %v521, 2
      %v815 = vrot.slane %v456, 2
      %v816 = vsel %vm741, %v814, %v815
      %v817 = vrot.slane %v537, 2
      %v818 = vsel %vm741, %v815, %v817
      %819 = vrot.lane.b32.xlu0 %v743, 64
      %v820 = vpop.permute.xlu0 %819
      %821 = vrot.lane.b32.xlu0 %v746, 64
      %v822 = vpop.permute.xlu0 %821
      %823 = vrot.lane.b32.xlu0 %v748, 64
      %v824 = vpop.permute.xlu0 %823
      %825 = vrot.lane.b32.xlu0 %v751, 64
      %v826 = vpop.permute.xlu0 %825
      %827 = vrot.lane.b32.xlu0 %v753, 64
      %v828 = vpop.permute.xlu0 %827
      %829 = vrot.lane.b32.xlu0 %v756, 64
      %v830 = vpop.permute.xlu0 %829
      %831 = vrot.lane.b32.xlu0 %v758, 64
      %v832 = vpop.permute.xlu0 %831
      %833 = vrot.lane.b32.xlu0 %v761, 64
      %v834 = vpop.permute.xlu0 %833
      %835 = vrot.lane.b32.xlu0 %v763, 64
      %v836 = vpop.permute.xlu0 %835
      %837 = vrot.lane.b32.xlu0 %v766, 64
      %v838 = vpop.permute.xlu0 %837
      %839 = vrot.lane.b32.xlu0 %v768, 64
      %v840 = vpop.permute.xlu0 %839
      %841 = vrot.lane.b32.xlu0 %v771, 64
      %v842 = vpop.permute.xlu0 %841
      %843 = vrot.lane.b32.xlu0 %v773, 64
      %v844 = vpop.permute.xlu0 %843
      %845 = vrot.lane.b32.xlu0 %v776, 64
      %v846 = vpop.permute.xlu0 %845
      %847 = vrot.lane.b32.xlu0 %v778, 64
      %v848 = vpop.permute.xlu0 %847
      %849 = vrot.lane.b32.xlu0 %v781, 64
      %v850 = vpop.permute.xlu0 %849
      %851 = vrot.lane.b32.xlu0 %v783, 64
      %v852 = vpop.permute.xlu0 %851
      %853 = vrot.lane.b32.xlu0 %v786, 64
      %v854 = vpop.permute.xlu0 %853
      %855 = vrot.lane.b32.xlu0 %v788, 64
      %v856 = vpop.permute.xlu0 %855
      %857 = vrot.lane.b32.xlu0 %v791, 64
      %v858 = vpop.permute.xlu0 %857
      %859 = vrot.lane.b32.xlu0 %v793, 64
      %v860 = vpop.permute.xlu0 %859
      %861 = vrot.lane.b32.xlu0 %v796, 64
      %v862 = vpop.permute.xlu0 %861
      %863 = vrot.lane.b32.xlu0 %v798, 64
      %v864 = vpop.permute.xlu0 %863
      %865 = vrot.lane.b32.xlu0 %v801, 64
      %v866 = vpop.permute.xlu0 %865
      %867 = vrot.lane.b32.xlu0 %v803, 64
      %v868 = vpop.permute.xlu0 %867
      %869 = vrot.lane.b32.xlu0 %v806, 64
      %v870 = vpop.permute.xlu0 %869
      %871 = vrot.lane.b32.xlu0 %v808, 64
      %v872 = vpop.permute.xlu0 %871
      %873 = vrot.lane.b32.xlu0 %v811, 64
      %v874 = vpop.permute.xlu0 %873
      %875 = vrot.lane.b32.xlu0 %v813, 64
      %v876 = vpop.permute.xlu0 %875
      %877 = vrot.lane.b32.xlu0 %v816, 64
      %v878 = vpop.permute.xlu0 %877
      %879 = vrot.lane.b32.xlu0 %v818, 64
      %v880 = vpop.permute.xlu0 %879
      %913 = vrot.lane.b32.xlu0 %v507, 96
      %v914 = vpop.permute.xlu0 %913
      %915 = vrot.lane.b32.xlu0 %v414, 96
      %v916 = vpop.permute.xlu0 %915
      %917 = vrot.lane.b32.xlu0 %v508, 96
      %v918 = vpop.permute.xlu0 %917
      %919 = vrot.lane.b32.xlu0 %v417, 96
      %v920 = vpop.permute.xlu0 %919
      %921 = vrot.lane.b32.xlu0 %v509, 96
      %v922 = vpop.permute.xlu0 %921
      %923 = vrot.lane.b32.xlu0 %v420, 96
      %v924 = vpop.permute.xlu0 %923
      %925 = vrot.lane.b32.xlu0 %v510, 96
      %v926 = vpop.permute.xlu0 %925
      %927 = vrot.lane.b32.xlu0 %v423, 96
      %v928 = vpop.permute.xlu0 %927
      %929 = vrot.lane.b32.xlu0 %v511, 96
      %v930 = vpop.permute.xlu0 %929
      %931 = vrot.lane.b32.xlu0 %v426, 96
      %v932 = vpop.permute.xlu0 %931
      %933 = vrot.lane.b32.xlu0 %v512, 96
      %v934 = vpop.permute.xlu0 %933
      %935 = vrot.lane.b32.xlu0 %v429, 96
      %v936 = vpop.permute.xlu0 %935
      %937 = vrot.lane.b32.xlu0 %v513, 96
      %v938 = vpop.permute.xlu0 %937
      %939 = vrot.lane.b32.xlu0 %v432, 96
      %v940 = vpop.permute.xlu0 %939
      %941 = vrot.lane.b32.xlu0 %v514, 96
      %v942 = vpop.permute.xlu0 %941
      %943 = vrot.lane.b32.xlu0 %v435, 96
      %v944 = vpop.permute.xlu0 %943
      %945 = vrot.lane.b32.xlu0 %v515, 96
      %v946 = vpop.permute.xlu0 %945
      %947 = vrot.lane.b32.xlu0 %v438, 96
      %v948 = vpop.permute.xlu0 %947
      %949 = vrot.lane.b32.xlu0 %v516, 96
      %v950 = vpop.permute.xlu0 %949
      %951 = vrot.lane.b32.xlu0 %v441, 96
      %v952 = vpop.permute.xlu0 %951
      %953 = vrot.lane.b32.xlu0 %v517, 96
      %v954 = vpop.permute.xlu0 %953
      %955 = vrot.lane.b32.xlu0 %v444, 96
      %v956 = vpop.permute.xlu0 %955
      %957 = vrot.lane.b32.xlu0 %v518, 96
      %v958 = vpop.permute.xlu0 %957
      %959 = vrot.lane.b32.xlu0 %v447, 96
      %v960 = vpop.permute.xlu0 %959
      %961 = vrot.lane.b32.xlu0 %v519, 96
      %v962 = vpop.permute.xlu0 %961
      %963 = vrot.lane.b32.xlu0 %v450, 96
      %v964 = vpop.permute.xlu0 %963
      %965 = vrot.lane.b32.xlu0 %v520, 96
      %v966 = vpop.permute.xlu0 %965
      %967 = vrot.lane.b32.xlu0 %v453, 96
      %v968 = vpop.permute.xlu0 %967
      %969 = vrot.lane.b32.xlu0 %v521, 96
      %v970 = vpop.permute.xlu0 %969
      %971 = vrot.lane.b32.xlu0 %v456, 96
      %v972 = vpop.permute.xlu0 %971
      %973 = vrot.lane.b32.xlu0 %v522, 96
      %v974 = vpop.permute.xlu0 %973
      %975 = vrot.lane.b32.xlu0 %v459, 96
      %v976 = vpop.permute.xlu0 %975
      %v1010 = vrot.slane %v522, 1
      %v1011 = vrot.slane %v459, 1
      %v1012 = vsel %vm570, %v1010, %v1011
      %v1013 = vrot.slane %v538, 1
      %v1014 = vsel %vm570, %v1011, %v1013
      %v1047 = vrot.slane %v522, 2
      %v1048 = vrot.slane %v459, 2
      %v1049 = vsel %vm741, %v1047, %v1048
      %v1050 = vrot.slane %v538, 2
      %v1051 = vsel %vm741, %v1048, %v1050
      %1052 = vrot.lane.b32.xlu0 %v746, 32
      %v1053 = vpop.permute.xlu0 %1052
      %1054 = vrot.lane.b32.xlu0 %v748, 32
      %v1055 = vpop.permute.xlu0 %1054
      %1056 = vrot.lane.b32.xlu0 %v751, 32
      %v1057 = vpop.permute.xlu0 %1056
      %1058 = vrot.lane.b32.xlu0 %v753, 32
      %v1059 = vpop.permute.xlu0 %1058
      %1060 = vrot.lane.b32.xlu0 %v756, 32
      %v1061 = vpop.permute.xlu0 %1060
      %1062 = vrot.lane.b32.xlu0 %v758, 32
      %v1063 = vpop.permute.xlu0 %1062
      %1064 = vrot.lane.b32.xlu0 %v761, 32
      %v1065 = vpop.permute.xlu0 %1064
      %1066 = vrot.lane.b32.xlu0 %v763, 32
      %v1067 = vpop.permute.xlu0 %1066
      %1068 = vrot.lane.b32.xlu0 %v766, 32
      %v1069 = vpop.permute.xlu0 %1068
      %1070 = vrot.lane.b32.xlu0 %v768, 32
      %v1071 = vpop.permute.xlu0 %1070
      %1072 = vrot.lane.b32.xlu0 %v771, 32
      %v1073 = vpop.permute.xlu0 %1072
      %1074 = vrot.lane.b32.xlu0 %v773, 32
      %v1075 = vpop.permute.xlu0 %1074
      %1076 = vrot.lane.b32.xlu0 %v776, 32
      %v1077 = vpop.permute.xlu0 %1076
      %1078 = vrot.lane.b32.xlu0 %v778, 32
      %v1079 = vpop.permute.xlu0 %1078
      %1080 = vrot.lane.b32.xlu0 %v781, 32
      %v1081 = vpop.permute.xlu0 %1080
      %1082 = vrot.lane.b32.xlu0 %v783, 32
      %v1083 = vpop.permute.xlu0 %1082
      %1084 = vrot.lane.b32.xlu0 %v786, 32
      %v1085 = vpop.permute.xlu0 %1084
      %1086 = vrot.lane.b32.xlu0 %v788, 32
      %v1087 = vpop.permute.xlu0 %1086
      %1088 = vrot.lane.b32.xlu0 %v791, 32
      %v1089 = vpop.permute.xlu0 %1088
      %1090 = vrot.lane.b32.xlu0 %v793, 32
      %v1091 = vpop.permute.xlu0 %1090
      %1092 = vrot.lane.b32.xlu0 %v796, 32
      %v1093 = vpop.permute.xlu0 %1092
      %1094 = vrot.lane.b32.xlu0 %v798, 32
      %v1095 = vpop.permute.xlu0 %1094
      %1096 = vrot.lane.b32.xlu0 %v801, 32
      %v1097 = vpop.permute.xlu0 %1096
      %1098 = vrot.lane.b32.xlu0 %v803, 32
      %v1099 = vpop.permute.xlu0 %1098
      %1100 = vrot.lane.b32.xlu0 %v806, 32
      %v1101 = vpop.permute.xlu0 %1100
      %1102 = vrot.lane.b32.xlu0 %v808, 32
      %v1103 = vpop.permute.xlu0 %1102
      %1104 = vrot.lane.b32.xlu0 %v811, 32
      %v1105 = vpop.permute.xlu0 %1104
      %1106 = vrot.lane.b32.xlu0 %v813, 32
      %v1107 = vpop.permute.xlu0 %1106
      %1108 = vrot.lane.b32.xlu0 %v816, 32
      %v1109 = vpop.permute.xlu0 %1108
      %1110 = vrot.lane.b32.xlu0 %v818, 32
      %v1111 = vpop.permute.xlu0 %1110
      %1112 = vrot.lane.b32.xlu0 %v1049, 32
      %v1113 = vpop.permute.xlu0 %1112
      %1114 = vrot.lane.b32.xlu0 %v1051, 32
      %v1115 = vpop.permute.xlu0 %1114
      %1148 = vrot.lane.b32.xlu0 %v508, 64
      %v1149 = vpop.permute.xlu0 %1148
      %1150 = vrot.lane.b32.xlu0 %v417, 64
      %v1151 = vpop.permute.xlu0 %1150
      %1152 = vrot.lane.b32.xlu0 %v509, 64
      %v1153 = vpop.permute.xlu0 %1152
      %1154 = vrot.lane.b32.xlu0 %v420, 64
      %v1155 = vpop.permute.xlu0 %1154
      %1156 = vrot.lane.b32.xlu0 %v510, 64
      %v1157 = vpop.permute.xlu0 %1156
      %1158 = vrot.lane.b32.xlu0 %v423, 64
      %v1159 = vpop.permute.xlu0 %1158
      %1160 = vrot.lane.b32.xlu0 %v511, 64
      %v1161 = vpop.permute.xlu0 %1160
      %1162 = vrot.lane.b32.xlu0 %v426, 64
      %v1163 = vpop.permute.xlu0 %1162
      %1164 = vrot.lane.b32.xlu0 %v512, 64
      %v1165 = vpop.permute.xlu0 %1164
      %1166 = vrot.lane.b32.xlu0 %v429, 64
      %v1167 = vpop.permute.xlu0 %1166
      %1168 = vrot.lane.b32.xlu0 %v513, 64
      %v1169 = vpop.permute.xlu0 %1168
      %1170 = vrot.lane.b32.xlu0 %v432, 64
      %v1171 = vpop.permute.xlu0 %1170
      %1172 = vrot.lane.b32.xlu0 %v514, 64
      %v1173 = vpop.permute.xlu0 %1172
      %1174 = vrot.lane.b32.xlu0 %v435, 64
      %v1175 = vpop.permute.xlu0 %1174
      %1176 = vrot.lane.b32.xlu0 %v515, 64
      %v1177 = vpop.permute.xlu0 %1176
      %1178 = vrot.lane.b32.xlu0 %v438, 64
      %v1179 = vpop.permute.xlu0 %1178
      %1180 = vrot.lane.b32.xlu0 %v516, 64
      %v1181 = vpop.permute.xlu0 %1180
      %1182 = vrot.lane.b32.xlu0 %v441, 64
      %v1183 = vpop.permute.xlu0 %1182
      %1184 = vrot.lane.b32.xlu0 %v517, 64
      %v1185 = vpop.permute.xlu0 %1184
      %1186 = vrot.lane.b32.xlu0 %v444, 64
      %v1187 = vpop.permute.xlu0 %1186
      %1188 = vrot.lane.b32.xlu0 %v518, 64
      %v1189 = vpop.permute.xlu0 %1188
      %1190 = vrot.lane.b32.xlu0 %v447, 64
      %v1191 = vpop.permute.xlu0 %1190
      %1192 = vrot.lane.b32.xlu0 %v519, 64
      %v1193 = vpop.permute.xlu0 %1192
      %1194 = vrot.lane.b32.xlu0 %v450, 64
      %v1195 = vpop.permute.xlu0 %1194
      %1196 = vrot.lane.b32.xlu0 %v520, 64
      %v1197 = vpop.permute.xlu0 %1196
      %1198 = vrot.lane.b32.xlu0 %v453, 64
      %v1199 = vpop.permute.xlu0 %1198
      %1200 = vrot.lane.b32.xlu0 %v521, 64
      %v1201 = vpop.permute.xlu0 %1200
      %1202 = vrot.lane.b32.xlu0 %v456, 64
      %v1203 = vpop.permute.xlu0 %1202
      %1204 = vrot.lane.b32.xlu0 %v522, 64
      %v1205 = vpop.permute.xlu0 %1204
      %1206 = vrot.lane.b32.xlu0 %v459, 64
      %v1207 = vpop.permute.xlu0 %1206
      %1208 = vrot.lane.b32.xlu0 0.0, 64
      %v1209 = vpop.permute.xlu0 %1208
      %1241 = vrot.lane.b32.xlu0 %v580, 96
      %v1242 = vpop.permute.xlu0 %1241
      %1243 = vrot.lane.b32.xlu0 %v582, 96
      %v1244 = vpop.permute.xlu0 %1243
      %1245 = vrot.lane.b32.xlu0 %v585, 96
      %v1246 = vpop.permute.xlu0 %1245
      %1247 = vrot.lane.b32.xlu0 %v587, 96
      %v1248 = vpop.permute.xlu0 %1247
      %1249 = vrot.lane.b32.xlu0 %v590, 96
      %v1250 = vpop.permute.xlu0 %1249
      %1251 = vrot.lane.b32.xlu0 %v592, 96
      %v1252 = vpop.permute.xlu0 %1251
      %1253 = vrot.lane.b32.xlu0 %v595, 96
      %v1254 = vpop.permute.xlu0 %1253
      %1255 = vrot.lane.b32.xlu0 %v597, 96
      %v1256 = vpop.permute.xlu0 %1255
      %1257 = vrot.lane.b32.xlu0 %v600, 96
      %v1258 = vpop.permute.xlu0 %1257
      %1259 = vrot.lane.b32.xlu0 %v602, 96
      %v1260 = vpop.permute.xlu0 %1259
      %1261 = vrot.lane.b32.xlu0 %v605, 96
      %v1262 = vpop.permute.xlu0 %1261
      %1263 = vrot.lane.b32.xlu0 %v607, 96
      %v1264 = vpop.permute.xlu0 %1263
      %1265 = vrot.lane.b32.xlu0 %v610, 96
      %v1266 = vpop.permute.xlu0 %1265
      %1267 = vrot.lane.b32.xlu0 %v612, 96
      %v1268 = vpop.permute.xlu0 %1267
      %1269 = vrot.lane.b32.xlu0 %v615, 96
      %v1270 = vpop.permute.xlu0 %1269
      %1271 = vrot.lane.b32.xlu0 %v617, 96
      %v1272 = vpop.permute.xlu0 %1271
      %1273 = vrot.lane.b32.xlu0 %v620, 96
      %v1274 = vpop.permute.xlu0 %1273
      %1275 = vrot.lane.b32.xlu0 %v622, 96
      %v1276 = vpop.permute.xlu0 %1275
      %1277 = vrot.lane.b32.xlu0 %v625, 96
      %v1278 = vpop.permute.xlu0 %1277
      %1279 = vrot.lane.b32.xlu0 %v627, 96
      %v1280 = vpop.permute.xlu0 %1279
      %1281 = vrot.lane.b32.xlu0 %v630, 96
      %v1282 = vpop.permute.xlu0 %1281
      %1283 = vrot.lane.b32.xlu0 %v632, 96
      %v1284 = vpop.permute.xlu0 %1283
      %1285 = vrot.lane.b32.xlu0 %v635, 96
      %v1286 = vpop.permute.xlu0 %1285
      %1287 = vrot.lane.b32.xlu0 %v637, 96
      %v1288 = vpop.permute.xlu0 %1287
      %1289 = vrot.lane.b32.xlu0 %v640, 96
      %v1290 = vpop.permute.xlu0 %1289
      %1291 = vrot.lane.b32.xlu0 %v642, 96
      %v1292 = vpop.permute.xlu0 %1291
      %1293 = vrot.lane.b32.xlu0 %v645, 96
      %v1294 = vpop.permute.xlu0 %1293
      %1295 = vrot.lane.b32.xlu0 %v647, 96
      %v1296 = vpop.permute.xlu0 %1295
      %1297 = vrot.lane.b32.xlu0 %v1012, 96
      %v1298 = vpop.permute.xlu0 %1297
      %1299 = vrot.lane.b32.xlu0 %v1014, 96
      %v1300 = vpop.permute.xlu0 %1299
      %1301 = vrot.lane.b32.xlu0 %v572, 96
      %v1302 = vpop.permute.xlu0 %1301
      %vm1334 = vcmask 261120
      %v1335 = vsel %vm1334, 0.0, %v649
      %v1336 = vsel %vm1334, %v507, %v651
      %v1337 = vsel %vm1334, %v414, %v653
      %v1338 = vsel %vm1334, %v508, %v655
      %v1339 = vsel %vm1334, %v417, %v657
      %v1340 = vsel %vm1334, %v509, %v659
      %v1341 = vsel %vm1334, %v420, %v661
      %v1342 = vsel %vm1334, %v510, %v663
      %v1343 = vsel %vm1334, %v423, %v665
      %v1344 = vsel %vm1334, %v511, %v667
      %v1345 = vsel %vm1334, %v426, %v669
      %v1346 = vsel %vm1334, %v512, %v671
      %v1347 = vsel %vm1334, %v429, %v673
      %v1348 = vsel %vm1334, %v513, %v675
      %v1349 = vsel %vm1334, %v432, %v677
      %v1350 = vsel %vm1334, %v514, %v679
      %v1351 = vsel %vm1334, %v435, %v681
      %v1352 = vsel %vm1334, %v515, %v683
      %v1353 = vsel %vm1334, %v438, %v685
      %v1354 = vsel %vm1334, %v516, %v687
      %v1355 = vsel %vm1334, %v441, %v689
      %v1356 = vsel %vm1334, %v517, %v691
      %v1357 = vsel %vm1334, %v444, %v693
      %v1358 = vsel %vm1334, %v518, %v695
      %v1359 = vsel %vm1334, %v447, %v697
      %v1360 = vsel %vm1334, %v519, %v699
      %v1361 = vsel %vm1334, %v450, %v701
      %v1362 = vsel %vm1334, %v520, %v703
      %v1363 = vsel %vm1334, %v453, %v705
      %v1364 = vsel %vm1334, %v521, %v707
      %v1365 = vsel %vm1334, %v456, %v709
      %vm1366 = vcmask 523264
      %v1367 = vsel %vm1366, %v1335, %v820
      %v1368 = vsel %vm1366, %v1336, %v822
      %v1369 = vsel %vm1366, %v1337, %v824
      %v1370 = vsel %vm1366, %v1338, %v826
      %v1371 = vsel %vm1366, %v1339, %v828
      %v1372 = vsel %vm1366, %v1340, %v830
      %v1373 = vsel %vm1366, %v1341, %v832
      %v1374 = vsel %vm1366, %v1342, %v834
      %v1375 = vsel %vm1366, %v1343, %v836
      %v1376 = vsel %vm1366, %v1344, %v838
      %v1377 = vsel %vm1366, %v1345, %v840
      %v1378 = vsel %vm1366, %v1346, %v842
      %v1379 = vsel %vm1366, %v1347, %v844
      %v1380 = vsel %vm1366, %v1348, %v846
      %v1381 = vsel %vm1366, %v1349, %v848
      %v1382 = vsel %vm1366, %v1350, %v850
      %v1383 = vsel %vm1366, %v1351, %v852
      %v1384 = vsel %vm1366, %v1352, %v854
      %v1385 = vsel %vm1366, %v1353, %v856
      %v1386 = vsel %vm1366, %v1354, %v858
      %v1387 = vsel %vm1366, %v1355, %v860
      %v1388 = vsel %vm1366, %v1356, %v862
      %v1389 = vsel %vm1366, %v1357, %v864
      %v1390 = vsel %vm1366, %v1358, %v866
      %v1391 = vsel %vm1366, %v1359, %v868
      %v1392 = vsel %vm1366, %v1360, %v870
      %v1393 = vsel %vm1366, %v1361, %v872
      %v1394 = vsel %vm1366, %v1362, %v874
      %v1395 = vsel %vm1366, %v1363, %v876
      %v1396 = vsel %vm1366, %v1364, %v878
      %v1397 = vsel %vm1366, %v1365, %v880
      %vm1398 = vcmask 785408
      %v1399 = vsel %vm1398, %v1367, %v914
      %v1400 = vsel %vm1398, %v1367, %v916
      %v1401 = vsel %vm1398, %v1368, %v918
      %v1402 = vsel %vm1398, %v1369, %v920
      %v1403 = vsel %vm1398, %v1370, %v922
      %v1404 = vsel %vm1398, %v1371, %v924
      %v1405 = vsel %vm1398, %v1372, %v926
      %v1406 = vsel %vm1398, %v1373, %v928
      %v1407 = vsel %vm1398, %v1374, %v930
      %v1408 = vsel %vm1398, %v1375, %v932
      %v1409 = vsel %vm1398, %v1376, %v934
      %v1410 = vsel %vm1398, %v1377, %v936
      %v1411 = vsel %vm1398, %v1378, %v938
      %v1412 = vsel %vm1398, %v1379, %v940
      %v1413 = vsel %vm1398, %v1380, %v942
      %v1414 = vsel %vm1398, %v1381, %v944
      %v1415 = vsel %vm1398, %v1382, %v946
      %v1416 = vsel %vm1398, %v1383, %v948
      %v1417 = vsel %vm1398, %v1384, %v950
      %v1418 = vsel %vm1398, %v1385, %v952
      %v1419 = vsel %vm1398, %v1386, %v954
      %v1420 = vsel %vm1398, %v1387, %v956
      %v1421 = vsel %vm1398, %v1388, %v958
      %v1422 = vsel %vm1398, %v1389, %v960
      %v1423 = vsel %vm1398, %v1390, %v962
      %v1424 = vsel %vm1398, %v1391, %v964
      %v1425 = vsel %vm1398, %v1392, %v966
      %v1426 = vsel %vm1398, %v1393, %v968
      %v1427 = vsel %vm1398, %v1394, %v970
      %v1428 = vsel %vm1398, %v1395, %v972
      %v1429 = vsel %vm1398, %v1396, %v974
      %v1430 = vsel %vm1398, %v1397, %v976
      %v1431 = vsel %vm1334, %v575, %v1053
      %v1432 = vsel %vm1334, %v577, %v1055
      %v1433 = vsel %vm1334, %v580, %v1057
      %v1434 = vsel %vm1334, %v582, %v1059
      %v1435 = vsel %vm1334, %v585, %v1061
      %v1436 = vsel %vm1334, %v587, %v1063
      %v1437 = vsel %vm1334, %v590, %v1065
      %v1438 = vsel %vm1334, %v592, %v1067
      %v1439 = vsel %vm1334, %v595, %v1069
      %v1440 = vsel %vm1334, %v597, %v1071
      %v1441 = vsel %vm1334, %v600, %v1073
      %v1442 = vsel %vm1334, %v602, %v1075
      %v1443 = vsel %vm1334, %v605, %v1077
      %v1444 = vsel %vm1334, %v607, %v1079
      %v1445 = vsel %vm1334, %v610, %v1081
      %v1446 = vsel %vm1334, %v612, %v1083
      %v1447 = vsel %vm1334, %v615, %v1085
      %v1448 = vsel %vm1334, %v617, %v1087
      %v1449 = vsel %vm1334, %v620, %v1089
      %v1450 = vsel %vm1334, %v622, %v1091
      %v1451 = vsel %vm1334, %v625, %v1093
      %v1452 = vsel %vm1334, %v627, %v1095
      %v1453 = vsel %vm1334, %v630, %v1097
      %v1454 = vsel %vm1334, %v632, %v1099
      %v1455 = vsel %vm1334, %v635, %v1101
      %v1456 = vsel %vm1334, %v637, %v1103
      %v1457 = vsel %vm1334, %v640, %v1105
      %v1458 = vsel %vm1334, %v642, %v1107
      %v1459 = vsel %vm1334, %v645, %v1109
      %v1460 = vsel %vm1334, %v647, %v1111
      %v1461 = vsel %vm1334, %v1012, %v1113
      %v1462 = vsel %vm1334, %v1014, %v1115
      %v1463 = vsel %vm1366, %v1431, %v1149
      %v1464 = vsel %vm1366, %v1432, %v1151
      %v1465 = vsel %vm1366, %v1433, %v1153
      %v1466 = vsel %vm1366, %v1434, %v1155
      %v1467 = vsel %vm1366, %v1435, %v1157
      %v1468 = vsel %vm1366, %v1436, %v1159
      %v1469 = vsel %vm1366, %v1437, %v1161
      %v1470 = vsel %vm1366, %v1438, %v1163
      %v1471 = vsel %vm1366, %v1439, %v1165
      %v1472 = vsel %vm1366, %v1440, %v1167
      %v1473 = vsel %vm1366, %v1441, %v1169
      %v1474 = vsel %vm1366, %v1442, %v1171
      %v1475 = vsel %vm1366, %v1443, %v1173
      %v1476 = vsel %vm1366, %v1444, %v1175
      %v1477 = vsel %vm1366, %v1445, %v1177
      %v1478 = vsel %vm1366, %v1446, %v1179
      %v1479 = vsel %vm1366, %v1447, %v1181
      %v1480 = vsel %vm1366, %v1448, %v1183
      %v1481 = vsel %vm1366, %v1449, %v1185
      %v1482 = vsel %vm1366, %v1450, %v1187
      %v1483 = vsel %vm1366, %v1451, %v1189
      %v1484 = vsel %vm1366, %v1452, %v1191
      %v1485 = vsel %vm1366, %v1453, %v1193
      %v1486 = vsel %vm1366, %v1454, %v1195
      %v1487 = vsel %vm1366, %v1455, %v1197
      %v1488 = vsel %vm1366, %v1456, %v1199
      %v1489 = vsel %vm1366, %v1457, %v1201
      %v1490 = vsel %vm1366, %v1458, %v1203
      %v1491 = vsel %vm1366, %v1459, %v1205
      %v1492 = vsel %vm1366, %v1460, %v1207
      %v1493 = vsel %vm1366, %v1461, %v1209
      %v1494 = vsel %vm1366, %v1462, %v1209
      %v1495 = vsel %vm1398, %v1463, %v1242
      %v1496 = vsel %vm1398, %v1464, %v1244
      %v1497 = vsel %vm1398, %v1465, %v1246
      %v1498 = vsel %vm1398, %v1466, %v1248
      %v1499 = vsel %vm1398, %v1467, %v1250
      %v1500 = vsel %vm1398, %v1468, %v1252
      %v1501 = vsel %vm1398, %v1469, %v1254
      %v1502 = vsel %vm1398, %v1470, %v1256
      %v1503 = vsel %vm1398, %v1471, %v1258
      %v1504 = vsel %vm1398, %v1472, %v1260
      %v1505 = vsel %vm1398, %v1473, %v1262
      %v1506 = vsel %vm1398, %v1474, %v1264
      %v1507 = vsel %vm1398, %v1475, %v1266
      %v1508 = vsel %vm1398, %v1476, %v1268
      %v1509 = vsel %vm1398, %v1477, %v1270
      %v1510 = vsel %vm1398, %v1478, %v1272
      %v1511 = vsel %vm1398, %v1479, %v1274
      %v1512 = vsel %vm1398, %v1480, %v1276
      %v1513 = vsel %vm1398, %v1481, %v1278
      %v1514 = vsel %vm1398, %v1482, %v1280
      %v1515 = vsel %vm1398, %v1483, %v1282
      %v1516 = vsel %vm1398, %v1484, %v1284
      %v1517 = vsel %vm1398, %v1485, %v1286
      %v1518 = vsel %vm1398, %v1486, %v1288
      %v1519 = vsel %vm1398, %v1487, %v1290
      %v1520 = vsel %vm1398, %v1488, %v1292
      %v1521 = vsel %vm1398, %v1489, %v1294
      %v1522 = vsel %vm1398, %v1490, %v1296
      %v1523 = vsel %vm1398, %v1491, %v1298
      %v1524 = vsel %vm1398, %v1492, %v1300
      %v1525 = vsel %vm1398, %v1493, %v1302
      %v1526 = vsel %vm1398, %v1494, %v1302
      %v1527 = vld [vmem:[%s3] sm:$0xff]
      %v1528 = vld [vmem:[%s3 + $0x8] sm:$0xff]
      %v1529 = vld [vmem:[%s3 + $0x10] sm:$0xff]
      %v1530 = vld [vmem:[%s3 + $0x18] sm:$0xff]
      %v1531 = vld [vmem:[%s3 + $0x20] sm:$0xff]
      %v1532 = vld [vmem:[%s3 + $0x28] sm:$0xff]
      %v1533 = vld [vmem:[%s3 + $0x30] sm:$0xff]
      %v1534 = vld [vmem:[%s3 + $0x38] sm:$0xff]
      %v1535 = vld [vmem:[%s3 + $0x40] sm:$0xff]
      %v1536 = vld [vmem:[%s3 + $0x48] sm:$0xff]
      %v1537 = vld [vmem:[%s3 + $0x50] sm:$0xff]
      %v1538 = vld [vmem:[%s3 + $0x58] sm:$0xff]
      %v1539 = vld [vmem:[%s3 + $0x60] sm:$0xff]
      %v1540 = vld [vmem:[%s3 + $0x68] sm:$0xff]
      %v1541 = vld [vmem:[%s3 + $0x70] sm:$0xff]
      %v1542 = vld [vmem:[%s3 + $0x78] sm:$0xff]
      %v1543 = vld [vmem:[%s3 + $0x80] sm:$0xff]
      %v1544 = vld [vmem:[%s3 + $0x88] sm:$0xff]
      %v1545 = vld [vmem:[%s3 + $0x90] sm:$0xff]
      %v1546 = vld [vmem:[%s3 + $0x98] sm:$0xff]
      %v1547 = vld [vmem:[%s3 + $0xa0] sm:$0xff]
      %v1548 = vld [vmem:[%s3 + $0xa8] sm:$0xff]
      %v1549 = vld [vmem:[%s3 + $0xb0] sm:$0xff]
      %v1550 = vld [vmem:[%s3 + $0xb8] sm:$0xff]
      %v1551 = vld [vmem:[%s3 + $0xc0] sm:$0xff]
      %v1552 = vld [vmem:[%s3 + $0xc8] sm:$0xff]
      %v1553 = vld [vmem:[%s3 + $0xd0] sm:$0xff]
      %v1554 = vld [vmem:[%s3 + $0xd8] sm:$0xff]
      %v1555 = vld [vmem:[%s3 + $0xe0] sm:$0xff]
      %v1556 = vld [vmem:[%s3 + $0xe8] sm:$0xff]
      %v1557 = vld [vmem:[%s3 + $0xf0] sm:$0xff]
      %v1558 = vld [vmem:[%s3 + $0xf8] sm:$0xff]
      %v1559 = vld [vmem:[%s3 + $0x100] sm:$0xff]
      %v1560 = vld [vmem:[%s3 + $0x108] sm:$0xff]
      %v1561 = vld [vmem:[%s3 + $0x110] sm:$0xff]
      %v1562 = vld [vmem:[%s3 + $0x118] sm:$0xff]
      %v1563 = vsel %vm1334, %v751, 0
      %v1565 = vsel %vm1334, %v753, 0
      %v1567 = vsel %vm1334, %v756, 0
      %v1569 = vsel %vm1334, %v758, 0
      %v1571 = vsel %vm1334, %v761, 0
      %v1573 = vsel %vm1334, %v763, 0
      %v1575 = vsel %vm1334, %v766, 0
      %v1577 = vsel %vm1334, %v768, 0
      %v1579 = vsel %vm1334, %v771, 0
      %v1581 = vsel %vm1334, %v773, 0
      %v1583 = vsel %vm1334, %v776, 0
      %v1585 = vsel %vm1334, %v778, 0
      %v1587 = vsel %vm1334, %v781, 0
      %v1589 = vsel %vm1334, %v783, 0
      %v1591 = vsel %vm1334, %v786, 0
      %v1593 = vsel %vm1334, %v788, 0
      %v1595 = vsel %vm1334, %v791, 0
      %v1597 = vsel %vm1334, %v793, 0
      %v1599 = vsel %vm1334, %v796, 0
      %v1601 = vsel %vm1334, %v798, 0
      %v1603 = vsel %vm1334, %v801, 0
      %v1605 = vsel %vm1334, %v803, 0
      %v1607 = vsel %vm1334, %v806, 0
      %v1609 = vsel %vm1334, %v808, 0
      %v1611 = vsel %vm1334, %v811, 0
      %v1613 = vsel %vm1334, %v813, 0
      %v1615 = vsel %vm1334, %v816, 0
      %v1617 = vsel %vm1334, %v818, 0
      %v1619 = vsel %vm1334, %v1049, 0
      %v1621 = vsel %vm1334, %v1051, 0
      %v1623 = vsel %vm1334, %v743, 0
      %1625 = vmatprep.subr.mxu0 0.0
      %1626 = vmatpush1.msra.mxu0 %v1527
      %1627 = vmatprep.subr.mxu0 0.0
      %1628 = vmatpush1.msra.mxu0 %v1528
      %1629 = vmatprep.subr.mxu0 0.0
      %1630 = vmatpush1.msra.mxu0 %v1529
      %1631 = vmatprep.subr.mxu0 0.0
      %1632 = vmatpush1.msra.mxu0 %v1530
      %1633 = vmatprep.subr.mxu0 0.0
      %1634 = vmatpush1.msra.mxu0 %v1531
      %1635 = vmatprep.subr.mxu0 0.0
      %1636 = vmatpush1.msra.mxu0 %v1532
      %1637 = vmatprep.subr.mxu0 0.0
      %1638 = vmatpush1.msra.mxu0 %v1533
      %1639 = vmatprep.subr.mxu0 0.0
      %1640 = vmatpush1.msra.mxu0 %v1534
      %1641 = vmatprep.subr.mxu0 0.0
      %1642 = vmatpush1.msra.mxu0 %v1535
      %1643 = vmatprep.subr.mxu0 0.0
      %1644 = vmatpush1.msra.mxu0 %v1536
      %1645 = vmatprep.subr.mxu0 0.0
      %1646 = vmatpush1.msra.mxu0 %v1537
      %1647 = vmatprep.subr.mxu0 0.0
      %1648 = vmatpush1.msra.mxu0 %v1538
      %1649 = vmatprep.subr.mxu0 0.0
      %1650 = vmatpush1.msra.mxu0 %v1539
      %1651 = vmatprep.subr.mxu0 0.0
      %1652 = vmatpush1.msra.mxu0 %v1540
      %1653 = vmatprep.subr.mxu0 0.0
      %1654 = vmatpush1.msra.mxu0 %v1541
      %1655 = vmatprep.subr.mxu0 0.0
      %1656 = vmatpush1.msra.mxu0 %v1542
      %1657 = vmatprep.subr.mxu0 0.0
      %1658 = vmatpush1.msra.mxu0 %v1543
      %1659 = vmatprep.subr.mxu0 0.0
      %1660 = vmatpush1.msra.mxu0 %v1544
      %1661 = vmatprep.subr.mxu0 0.0
      %1662 = vmatpush1.msra.mxu0 %v1545
      %1663 = vmatprep.subr.mxu0 0.0
      %1664 = vmatpush1.msra.mxu0 %v1546
      %1665 = vmatprep.subr.mxu0 0.0
      %1666 = vmatpush1.msra.mxu0 %v1547
      %1667 = vmatprep.subr.mxu0 0.0
      %1668 = vmatpush1.msra.mxu0 %v1548
      %1669 = vmatprep.subr.mxu0 0.0
      %1670 = vmatpush1.msra.mxu0 %v1549
      %1671 = vmatprep.subr.mxu0 0.0
      %1672 = vmatpush1.msra.mxu0 %v1550
      %1673 = vmatprep.subr.mxu0 0.0
      %1674 = vmatpush1.msra.mxu0 %v1551
      %1675 = vmatprep.subr.mxu0 0.0
      %1676 = vmatpush1.msra.mxu0 %v1552
      %1677 = vmatprep.subr.mxu0 0.0
      %1678 = vmatpush1.msra.mxu0 %v1553
      %1679 = vmatprep.subr.mxu0 0.0
      %1680 = vmatpush1.msra.mxu0 %v1554
      %1681 = vmatprep.subr.mxu0 0.0
      %1682 = vmatpush1.msra.mxu0 %v1555
      %1683 = vmatprep.subr.mxu0 0.0
      %1684 = vmatpush1.msra.mxu0 %v1556
      %1685 = vmatprep.subr.mxu0 0.0
      %1686 = vmatpush1.msra.mxu0 %v1557
      %1687 = vmatprep.subr.mxu0 0.0
      %1688 = vmatpush1.msra.mxu0 %v1558
      %1689 = vmatprep.mubr.f32.mxu0 %v1495
      %1690 = vmatmul.mubr.f32.gmra.mrb[0].mxu0 %v1399
      %v1691 = vpop.f32.mrb[0].mxu0
      %v1692 = vadd.f32 0.0, %v1691
      %v1693 = vpop.f32.mrb[0].mxu0
      %1694 = vmatprep.mubr.f32.mxu0 %v1496
      %1695 = vmatmul.mubr.f32.gmra.mrb[0].mxu0 %v1400
      %v1696 = vpop.f32.mrb[0].mxu0
      %v1697 = vadd.f32 0.0, %v1696
      %v1698 = vpop.f32.mrb[0].mxu0
      %1699 = vmatprep.mubr.f32.mxu0 %v1497
      %1700 = vmatmul.mubr.f32.gmra.mrb[0].mxu0 %v1401
      %v1701 = vpop.f32.mrb[0].mxu0
      %v1702 = vadd.f32 0.0, %v1701
      %v1703 = vpop.f32.mrb[0].mxu0
      %1704 = vmatprep.mubr.f32.mxu0 %v1498
      %1705 = vmatmul.mubr.f32.gmra.mrb[0].mxu0 %v1402
      %v1706 = vpop.f32.mrb[0].mxu0
      %v1707 = vadd.f32 0.0, %v1706
      %v1708 = vpop.f32.mrb[0].mxu0
      %1709 = vmatprep.mubr.f32.mxu0 %v1499
      %1710 = vmatmul.mubr.f32.gmra.mrb[0].mxu0 %v1403
      %v1711 = vpop.f32.mrb[0].mxu0
      %v1712 = vadd.f32 0.0, %v1711
      %v1713 = vpop.f32.mrb[0].mxu0
      %1714 = vmatprep.mubr.f32.mxu0 %v1500
      %1715 = vmatmul.mubr.f32.gmra.mrb[0].mxu0 %v1404
      %v1716 = vpop.f32.mrb[0].mxu0
      %v1717 = vadd.f32 0.0, %v1716
      %v1718 = vpop.f32.mrb[0].mxu0
      %1719 = vmatprep.mubr.f32.mxu0 %v1501
      %1720 = vmatmul.mubr.f32.gmra.mrb[0].mxu0 %v1405
      %v1721 = vpop.f32.mrb[0].mxu0
      %v1722 = vadd.f32 0.0, %v1721
      %v1723 = vpop.f32.mrb[0].mxu0
      %1724 = vmatprep.mubr.f32.mxu0 %v1502
      %1725 = vmatmul.mubr.f32.gmra.mrb[0].mxu0 %v1406
      %v1726 = vpop.f32.mrb[0].mxu0
      %v1727 = vadd.f32 0.0, %v1726
      %v1728 = vpop.f32.mrb[0].mxu0
      %1729 = vmatprep.mubr.f32.mxu0 %v1503
      %1730 = vmatmul.mubr.f32.gmra.mrb[0].mxu0 %v1407
      %v1731 = vpop.f32.mrb[0].mxu0
      %v1732 = vadd.f32 0.0, %v1731
      %v1733 = vpop.f32.mrb[0].mxu0
      %1734 = vmatprep.mubr.f32.mxu0 %v1504
      %1735 = vmatmul.mubr.f32.gmra.mrb[0].mxu0 %v1408
      %v1736 = vpop.f32.mrb[0].mxu0
      %v1737 = vadd.f32 0.0, %v1736
      %v1738 = vpop.f32.mrb[0].mxu0
      %1739 = vmatprep.mubr.f32.mxu0 %v1505
      %1740 = vmatmul.mubr.f32.gmra.mrb[0].mxu0 %v1409
      %v1741 = vpop.f32.mrb[0].mxu0
      %v1742 = vadd.f32 0.0, %v1741
      %v1743 = vpop.f32.mrb[0].mxu0
      %1744 = vmatprep.mubr.f32.mxu0 %v1506
      %1745 = vmatmul.mubr.f32.gmra.mrb[0].mxu0 %v1410
      %v1746 = vpop.f32.mrb[0].mxu0
      %v1747 = vadd.f32 0.0, %v1746
      %v1748 = vpop.f32.mrb[0].mxu0
      %1749 = vmatprep.mubr.f32.mxu0 %v1507
      %1750 = vmatmul.mubr.f32.gmra.mrb[0].mxu0 %v1411
      %v1751 = vpop.f32.mrb[0].mxu0
      %v1752 = vadd.f32 0.0, %v1751
      %v1753 = vpop.f32.mrb[0].mxu0
      %1754 = vmatprep.mubr.f32.mxu0 %v1508
      %1755 = vmatmul.mubr.f32.gmra.mrb[0].mxu0 %v1412
      %v1756 = vpop.f32.mrb[0].mxu0
      %v1757 = vadd.f32 0.0, %v1756
      %v1758 = vpop.f32.mrb[0].mxu0
      %1759 = vmatprep.mubr.f32.mxu0 %v1509
      %1760 = vmatmul.mubr.f32.gmra.mrb[0].mxu0 %v1413
      %v1761 = vpop.f32.mrb[0].mxu0
      %v1762 = vadd.f32 0.0, %v1761
      %v1763 = vpop.f32.mrb[0].mxu0
      %1764 = vmatprep.mubr.f32.mxu0 %v1510
      %1765 = vmatmul.mubr.f32.gmra.mrb[0].mxu0 %v1414
      %v1766 = vpop.f32.mrb[0].mxu0
      %v1767 = vadd.f32 0.0, %v1766
      %v1768 = vpop.f32.mrb[0].mxu0
      %1769 = vmatprep.mubr.f32.mxu0 %v1511
      %1770 = vmatmul.mubr.f32.gmra.mrb[0].mxu0 %v1415
      %v1771 = vpop.f32.mrb[0].mxu0
      %v1772 = vadd.f32 0.0, %v1771
      %v1773 = vpop.f32.mrb[0].mxu0
      %1774 = vmatprep.mubr.f32.mxu0 %v1512
      %1775 = vmatmul.mubr.f32.gmra.mrb[0].mxu0 %v1416
      %v1776 = vpop.f32.mrb[0].mxu0
      %v1777 = vadd.f32 0.0, %v1776
      %v1778 = vpop.f32.mrb[0].mxu0
      %1779 = vmatprep.mubr.f32.mxu0 %v1513
      %1780 = vmatmul.mubr.f32.gmra.mrb[0].mxu0 %v1417
      %v1781 = vpop.f32.mrb[0].mxu0
      %v1782 = vadd.f32 0.0, %v1781
      %v1783 = vpop.f32.mrb[0].mxu0
      %1784 = vmatprep.mubr.f32.mxu0 %v1514
      %1785 = vmatmul.mubr.f32.gmra.mrb[0].mxu0 %v1418
      %v1786 = vpop.f32.mrb[0].mxu0
      %v1787 = vadd.f32 0.0, %v1786
      %v1788 = vpop.f32.mrb[0].mxu0
      %1789 = vmatprep.mubr.f32.mxu0 %v1515
      %1790 = vmatmul.mubr.f32.gmra.mrb[0].mxu0 %v1419
      %v1791 = vpop.f32.mrb[0].mxu0
      %v1792 = vadd.f32 0.0, %v1791
      %v1793 = vpop.f32.mrb[0].mxu0
      %1794 = vmatprep.mubr.f32.mxu0 %v1516
      %1795 = vmatmul.mubr.f32.gmra.mrb[0].mxu0 %v1420
      %v1796 = vpop.f32.mrb[0].mxu0
      %v1797 = vadd.f32 0.0, %v1796
      %v1798 = vpop.f32.mrb[0].mxu0
      %1799 = vmatprep.mubr.f32.mxu0 %v1517
      %1800 = vmatmul.mubr.f32.gmra.mrb[0].mxu0 %v1421
      %v1801 = vpop.f32.mrb[0].mxu0
      %v1802 = vadd.f32 0.0, %v1801
      %v1803 = vpop.f32.mrb[0].mxu0
      %1804 = vmatprep.mubr.f32.mxu0 %v1518
      %1805 = vmatmul.mubr.f32.gmra.mrb[0].mxu0 %v1422
      %v1806 = vpop.f32.mrb[0].mxu0
      %v1807 = vadd.f32 0.0, %v1806
      %v1808 = vpop.f32.mrb[0].mxu0
      %1809 = vmatprep.mubr.f32.mxu0 %v1519
      %1810 = vmatmul.mubr.f32.gmra.mrb[0].mxu0 %v1423
      %v1811 = vpop.f32.mrb[0].mxu0
      %v1812 = vadd.f32 0.0, %v1811
      %v1813 = vpop.f32.mrb[0].mxu0
      %1814 = vmatprep.mubr.f32.mxu0 %v1520
      %1815 = vmatmul.mubr.f32.gmra.mrb[0].mxu0 %v1424
      %v1816 = vpop.f32.mrb[0].mxu0
      %v1817 = vadd.f32 0.0, %v1816
      %v1818 = vpop.f32.mrb[0].mxu0
      %1819 = vmatprep.mubr.f32.mxu0 %v1521
      %1820 = vmatmul.mubr.f32.gmra.mrb[0].mxu0 %v1425
      %v1821 = vpop.f32.mrb[0].mxu0
      %v1822 = vadd.f32 0.0, %v1821
      %v1823 = vpop.f32.mrb[0].mxu0
      %1824 = vmatprep.mubr.f32.mxu0 %v1522
      %1825 = vmatmul.mubr.f32.gmra.mrb[0].mxu0 %v1426
      %v1826 = vpop.f32.mrb[0].mxu0
      %v1827 = vadd.f32 0.0, %v1826
      %v1828 = vpop.f32.mrb[0].mxu0
      %1829 = vmatprep.mubr.f32.mxu0 %v1523
      %1830 = vmatmul.mubr.f32.gmra.mrb[0].mxu0 %v1427
      %v1831 = vpop.f32.mrb[0].mxu0
      %v1832 = vadd.f32 0.0, %v1831
      %v1833 = vpop.f32.mrb[0].mxu0
      %1834 = vmatprep.mubr.f32.mxu0 %v1524
      %1835 = vmatmul.mubr.f32.gmra.mrb[0].mxu0 %v1428
      %v1836 = vpop.f32.mrb[0].mxu0
      %v1837 = vadd.f32 0.0, %v1836
      %v1838 = vpop.f32.mrb[0].mxu0
      %1839 = vmatprep.mubr.f32.mxu0 %v1525
      %1840 = vmatmul.mubr.f32.gmra.mrb[0].mxu0 %v1429
      %v1841 = vpop.f32.mrb[0].mxu0
      %v1842 = vadd.f32 0.0, %v1841
      %v1843 = vpop.f32.mrb[0].mxu0
      %1844 = vmatprep.mubr.f32.mxu0 %v1526
      %1845 = vmatmul.mubr.f32.gmra.mrb[0].mxu0 %v1430
      %v1846 = vpop.f32.mrb[0].mxu0
      %v1847 = vadd.f32 0.0, %v1846
      %v1848 = vpop.f32.mrb[0].mxu0
      %1849 = vdwg.mxu0
      %1850 = vmatprep.subr.mxu0 0.0
      %1851 = vmatpush1.msra.mxu0 %v1559
      %1852 = vmatprep.subr.mxu0 0.0
      %1853 = vmatpush1.msra.mxu0 %v1560
      %1854 = vmatprep.subr.mxu0 0.0
      %1855 = vmatpush1.msra.mxu0 %v1561
      %1856 = vmatprep.subr.mxu0 0.0
      %1857 = vmatpush1.msra.mxu0 %v1562
      %1858 = vmatprep.subr.mxu0 0.0
      %1859 = vmatpush1.msra.mxu0 0.0
      %1860 = vmatprep.subr.mxu0 0.0
      %1861 = vmatpush1.msra.mxu0 0.0
      %1862 = vmatprep.subr.mxu0 0.0
      %1863 = vmatpush1.msra.mxu0 0.0
      %1864 = vmatprep.subr.mxu0 0.0
      %1865 = vmatpush1.msra.mxu0 0.0
      %1866 = vmatprep.subr.mxu0 0.0
      %1867 = vmatpush1.msra.mxu0 0.0
      %1868 = vmatprep.subr.mxu0 0.0
      %1869 = vmatpush1.msra.mxu0 0.0
      %1870 = vmatprep.subr.mxu0 0.0
      %1871 = vmatpush1.msra.mxu0 0.0
      %1872 = vmatprep.subr.mxu0 0.0
      %1873 = vmatpush1.msra.mxu0 0.0
      %1874 = vmatprep.subr.mxu0 0.0
      %1875 = vmatpush1.msra.mxu0 0.0
      %1876 = vmatprep.subr.mxu0 0.0
      %1877 = vmatpush1.msra.mxu0 0.0
      %1878 = vmatprep.subr.mxu0 0.0
      %1879 = vmatpush1.msra.mxu0 0.0
      %1880 = vmatprep.subr.mxu0 0.0
      %1881 = vmatpush1.msra.mxu0 0.0
      %1882 = vmatprep.subr.mxu0 0.0
      %1883 = vmatpush1.msra.mxu0 0.0
      %1884 = vmatprep.subr.mxu0 0.0
      %1885 = vmatpush1.msra.mxu0 0.0
      %1886 = vmatprep.subr.mxu0 0.0
      %1887 = vmatpush1.msra.mxu0 0.0
      %1888 = vmatprep.subr.mxu0 0.0
      %1889 = vmatpush1.msra.mxu0 0.0
      %1890 = vmatprep.subr.mxu0 0.0
      %1891 = vmatpush1.msra.mxu0 0.0
      %1892 = vmatprep.subr.mxu0 0.0
      %1893 = vmatpush1.msra.mxu0 0.0
      %1894 = vmatprep.subr.mxu0 0.0
      %1895 = vmatpush1.msra.mxu0 0.0
      %1896 = vmatprep.subr.mxu0 0.0
      %1897 = vmatpush1.msra.mxu0 0.0
      %1898 = vmatprep.subr.mxu0 0.0
      %1899 = vmatpush1.msra.mxu0 0.0
      %1900 = vmatprep.subr.mxu0 0.0
      %1901 = vmatpush1.msra.mxu0 0.0
      %1902 = vmatprep.subr.mxu0 0.0
      %1903 = vmatpush1.msra.mxu0 0.0
      %1904 = vmatprep.subr.mxu0 0.0
      %1905 = vmatpush1.msra.mxu0 0.0
      %1906 = vmatprep.subr.mxu0 0.0
      %1907 = vmatpush1.msra.mxu0 0.0
      %1908 = vmatprep.subr.mxu0 0.0
      %1909 = vmatpush1.msra.mxu0 0.0
      %1910 = vmatprep.subr.mxu0 0.0
      %1911 = vmatpush1.msra.mxu0 0.0
      %1912 = vmatprep.subr.mxu0 0.0
      %1913 = vmatpush1.msra.mxu0 0.0
      %1914 = vmatprep.mubr.f32.mxu0 0.0
      %1915 = vmatmul.mubr.f32.gmra.mrb[0].mxu0 %v1563
      %v1916 = vpop.f32.mrb[0].mxu0
      %v1917 = vadd.f32 %v1692, %v1916
      %v1918 = vpop.f32.mrb[0].mxu0
      %1919 = vmatprep.mubr.f32.mxu0 0.0
      %1920 = vmatmul.mubr.f32.gmra.mrb[0].mxu0 %v1565
      %v1921 = vpop.f32.mrb[0].mxu0
      %v1922 = vadd.f32 %v1697, %v1921
      %v1923 = vpop.f32.mrb[0].mxu0
      %1924 = vmatprep.mubr.f32.mxu0 0.0
      %1925 = vmatmul.mubr.f32.gmra.mrb[0].mxu0 %v1567
      %v1926 = vpop.f32.mrb[0].mxu0
      %v1927 = vadd.f32 %v1702, %v1926
      %v1928 = vpop.f32.mrb[0].mxu0
      %1929 = vmatprep.mubr.f32.mxu0 0.0
      %1930 = vmatmul.mubr.f32.gmra.mrb[0].mxu0 %v1569
      %v1931 = vpop.f32.mrb[0].mxu0
      %v1932 = vadd.f32 %v1707, %v1931
      %v1933 = vpop.f32.mrb[0].mxu0
      %1934 = vmatprep.mubr.f32.mxu0 0.0
      %1935 = vmatmul.mubr.f32.gmra.mrb[0].mxu0 %v1571
      %v1936 = vpop.f32.mrb[0].mxu0
      %v1937 = vadd.f32 %v1712, %v1936
      %v1938 = vpop.f32.mrb[0].mxu0
      %1939 = vmatprep.mubr.f32.mxu0 0.0
      %1940 = vmatmul.mubr.f32.gmra.mrb[0].mxu0 %v1573
      %v1941 = vpop.f32.mrb[0].mxu0
      %v1942 = vadd.f32 %v1717, %v1941
      %v1943 = vpop.f32.mrb[0].mxu0
      %1944 = vmatprep.mubr.f32.mxu0 0.0
      %1945 = vmatmul.mubr.f32.gmra.mrb[0].mxu0 %v1575
      %v1946 = vpop.f32.mrb[0].mxu0
      %v1947 = vadd.f32 %v1722, %v1946
      %v1948 = vpop.f32.mrb[0].mxu0
      %1949 = vmatprep.mubr.f32.mxu0 0.0
      %1950 = vmatmul.mubr.f32.gmra.mrb[0].mxu0 %v1577
      %v1951 = vpop.f32.mrb[0].mxu0
      %v1952 = vadd.f32 %v1727, %v1951
      %v1953 = vpop.f32.mrb[0].mxu0
      %1954 = vmatprep.mubr.f32.mxu0 0.0
      %1955 = vmatmul.mubr.f32.gmra.mrb[0].mxu0 %v1579
      %v1956 = vpop.f32.mrb[0].mxu0
      %v1957 = vadd.f32 %v1732, %v1956
      %v1958 = vpop.f32.mrb[0].mxu0
      %1959 = vmatprep.mubr.f32.mxu0 0.0
      %1960 = vmatmul.mubr.f32.gmra.mrb[0].mxu0 %v1581
      %v1961 = vpop.f32.mrb[0].mxu0
      %v1962 = vadd.f32 %v1737, %v1961
      %v1963 = vpop.f32.mrb[0].mxu0
      %1964 = vmatprep.mubr.f32.mxu0 0.0
      %1965 = vmatmul.mubr.f32.gmra.mrb[0].mxu0 %v1583
      %v1966 = vpop.f32.mrb[0].mxu0
      %v1967 = vadd.f32 %v1742, %v1966
      %v1968 = vpop.f32.mrb[0].mxu0
      %1969 = vmatprep.mubr.f32.mxu0 0.0
      %1970 = vmatmul.mubr.f32.gmra.mrb[0].mxu0 %v1585
      %v1971 = vpop.f32.mrb[0].mxu0
      %v1972 = vadd.f32 %v1747, %v1971
      %v1973 = vpop.f32.mrb[0].mxu0
      %1974 = vmatprep.mubr.f32.mxu0 0.0
      %1975 = vmatmul.mubr.f32.gmra.mrb[0].mxu0 %v1587
      %v1976 = vpop.f32.mrb[0].mxu0
      %v1977 = vadd.f32 %v1752, %v1976
      %v1978 = vpop.f32.mrb[0].mxu0
      %1979 = vmatprep.mubr.f32.mxu0 0.0
      %1980 = vmatmul.mubr.f32.gmra.mrb[0].mxu0 %v1589
      %v1981 = vpop.f32.mrb[0].mxu0
      %v1982 = vadd.f32 %v1757, %v1981
      %v1983 = vpop.f32.mrb[0].mxu0
      %1984 = vmatprep.mubr.f32.mxu0 0.0
      %1985 = vmatmul.mubr.f32.gmra.mrb[0].mxu0 %v1591
      %v1986 = vpop.f32.mrb[0].mxu0
      %v1987 = vadd.f32 %v1762, %v1986
      %v1988 = vpop.f32.mrb[0].mxu0
      %1989 = vmatprep.mubr.f32.mxu0 0.0
      %1990 = vmatmul.mubr.f32.gmra.mrb[0].mxu0 %v1593
      %v1991 = vpop.f32.mrb[0].mxu0
      %v1992 = vadd.f32 %v1767, %v1991
      %v1993 = vpop.f32.mrb[0].mxu0
      %1994 = vmatprep.mubr.f32.mxu0 0.0
      %1995 = vmatmul.mubr.f32.gmra.mrb[0].mxu0 %v1595
      %v1996 = vpop.f32.mrb[0].mxu0
      %v1997 = vadd.f32 %v1772, %v1996
      %v1998 = vpop.f32.mrb[0].mxu0
      %1999 = vmatprep.mubr.f32.mxu0 0.0
      %2000 = vmatmul.mubr.f32.gmra.mrb[0].mxu0 %v1597
      %v2001 = vpop.f32.mrb[0].mxu0
      %v2002 = vadd.f32 %v1777, %v2001
      %v2003 = vpop.f32.mrb[0].mxu0
      %2004 = vmatprep.mubr.f32.mxu0 0.0
      %2005 = vmatmul.mubr.f32.gmra.mrb[0].mxu0 %v1599
      %v2006 = vpop.f32.mrb[0].mxu0
      %v2007 = vadd.f32 %v1782, %v2006
      %v2008 = vpop.f32.mrb[0].mxu0
      %2009 = vmatprep.mubr.f32.mxu0 0.0
      %2010 = vmatmul.mubr.f32.gmra.mrb[0].mxu0 %v1601
      %v2011 = vpop.f32.mrb[0].mxu0
      %v2012 = vadd.f32 %v1787, %v2011
      %v2013 = vpop.f32.mrb[0].mxu0
      %2014 = vmatprep.mubr.f32.mxu0 0.0
      %2015 = vmatmul.mubr.f32.gmra.mrb[0].mxu0 %v1603
      %v2016 = vpop.f32.mrb[0].mxu0
      %v2017 = vadd.f32 %v1792, %v2016
      %v2018 = vpop.f32.mrb[0].mxu0
      %2019 = vmatprep.mubr.f32.mxu0 0.0
      %2020 = vmatmul.mubr.f32.gmra.mrb[0].mxu0 %v1605
      %v2021 = vpop.f32.mrb[0].mxu0
      %v2022 = vadd.f32 %v1797, %v2021
      %v2023 = vpop.f32.mrb[0].mxu0
      %2024 = vmatprep.mubr.f32.mxu0 0.0
      %2025 = vmatmul.mubr.f32.gmra.mrb[0].mxu0 %v1607
      %v2026 = vpop.f32.mrb[0].mxu0
      %v2027 = vadd.f32 %v1802, %v2026
      %v2028 = vpop.f32.mrb[0].mxu0
      %2029 = vmatprep.mubr.f32.mxu0 0.0
      %2030 = vmatmul.mubr.f32.gmra.mrb[0].mxu0 %v1609
      %v2031 = vpop.f32.mrb[0].mxu0
      %v2032 = vadd.f32 %v1807, %v2031
      %v2033 = vpop.f32.mrb[0].mxu0
      %2034 = vmatprep.mubr.f32.mxu0 0.0
      %2035 = vmatmul.mubr.f32.gmra.mrb[0].mxu0 %v1611
      %v2036 = vpop.f32.mrb[0].mxu0
      %v2037 = vadd.f32 %v1812, %v2036
      %v2038 = vpop.f32.mrb[0].mxu0
      %2039 = vmatprep.mubr.f32.mxu0 0.0
      %2040 = vmatmul.mubr.f32.gmra.mrb[0].mxu0 %v1613
      %v2041 = vpop.f32.mrb[0].mxu0
      %v2042 = vadd.f32 %v1817, %v2041
      %v2043 = vpop.f32.mrb[0].mxu0
      %2044 = vmatprep.mubr.f32.mxu0 0.0
      %2045 = vmatmul.mubr.f32.gmra.mrb[0].mxu0 %v1615
      %v2046 = vpop.f32.mrb[0].mxu0
      %v2047 = vadd.f32 %v1822, %v2046
      %v2048 = vpop.f32.mrb[0].mxu0
      %2049 = vmatprep.mubr.f32.mxu0 0.0
      %2050 = vmatmul.mubr.f32.gmra.mrb[0].mxu0 %v1617
      %v2051 = vpop.f32.mrb[0].mxu0
      %v2052 = vadd.f32 %v1827, %v2051
      %v2053 = vpop.f32.mrb[0].mxu0
      %2054 = vmatprep.mubr.f32.mxu0 0.0
      %2055 = vmatmul.mubr.f32.gmra.mrb[0].mxu0 %v1619
      %v2056 = vpop.f32.mrb[0].mxu0
      %v2057 = vadd.f32 %v1832, %v2056
      %v2058 = vpop.f32.mrb[0].mxu0
      %2059 = vmatprep.mubr.f32.mxu0 0.0
      %2060 = vmatmul.mubr.f32.gmra.mrb[0].mxu0 %v1621
      %v2061 = vpop.f32.mrb[0].mxu0
      %v2062 = vadd.f32 %v1837, %v2061
      %v2063 = vpop.f32.mrb[0].mxu0
      %2064 = vmatprep.mubr.f32.mxu0 0.0
      %2065 = vmatmul.mubr.f32.gmra.mrb[0].mxu0 %v1623
      %v2066 = vpop.f32.mrb[0].mxu0
      %v2067 = vadd.f32 %v1842, %v2066
      %v2068 = vpop.f32.mrb[0].mxu0
      %2069 = vmatprep.mubr.f32.mxu0 0.0
      %2070 = vmatmul.mubr.f32.gmra.mrb[0].mxu0 %v1623
      %v2071 = vpop.f32.mrb[0].mxu0
      %v2072 = vadd.f32 %v1847, %v2071
      %v2073 = vpop.f32.mrb[0].mxu0
      %2074 = vdwg.mxu0
      %2075 = vst.msk [vmem:[%s231] sm:$0xff] %vm1334, %v1917
      %2076 = vst.msk [vmem:[%s231 + $0x8] sm:$0xff] %vm1334, %v1922
      %2077 = vst.msk [vmem:[%s231 + $0x10] sm:$0xff] %vm1334, %v1927
      %2078 = vst.msk [vmem:[%s231 + $0x18] sm:$0xff] %vm1334, %v1932
      %2079 = vst.msk [vmem:[%s231 + $0x20] sm:$0xff] %vm1334, %v1937
      %2080 = vst.msk [vmem:[%s231 + $0x28] sm:$0xff] %vm1334, %v1942
      %2081 = vst.msk [vmem:[%s231 + $0x30] sm:$0xff] %vm1334, %v1947
      %2082 = vst.msk [vmem:[%s231 + $0x38] sm:$0xff] %vm1334, %v1952
      %2083 = vst.msk [vmem:[%s231 + $0x40] sm:$0xff] %vm1334, %v1957
      %2084 = vst.msk [vmem:[%s231 + $0x48] sm:$0xff] %vm1334, %v1962
      %2085 = vst.msk [vmem:[%s231 + $0x50] sm:$0xff] %vm1334, %v1967
      %2086 = vst.msk [vmem:[%s231 + $0x58] sm:$0xff] %vm1334, %v1972
      %2087 = vst.msk [vmem:[%s231 + $0x60] sm:$0xff] %vm1334, %v1977
      %2088 = vst.msk [vmem:[%s231 + $0x68] sm:$0xff] %vm1334, %v1982
      %2089 = vst.msk [vmem:[%s231 + $0x70] sm:$0xff] %vm1334, %v1987
      %2090 = vst.msk [vmem:[%s231 + $0x78] sm:$0xff] %vm1334, %v1992
      %2091 = vst.msk [vmem:[%s231 + $0x80] sm:$0xff] %vm1334, %v1997
      %2092 = vst.msk [vmem:[%s231 + $0x88] sm:$0xff] %vm1334, %v2002
      %2093 = vst.msk [vmem:[%s231 + $0x90] sm:$0xff] %vm1334, %v2007
      %2094 = vst.msk [vmem:[%s231 + $0x98] sm:$0xff] %vm1334, %v2012
      %2095 = vst.msk [vmem:[%s231 + $0xa0] sm:$0xff] %vm1334, %v2017
      %2096 = vst.msk [vmem:[%s231 + $0xa8] sm:$0xff] %vm1334, %v2022
      %2097 = vst.msk [vmem:[%s231 + $0xb0] sm:$0xff] %vm1334, %v2027
      %2098 = vst.msk [vmem:[%s231 + $0xb8] sm:$0xff] %vm1334, %v2032
      %2099 = vst.msk [vmem:[%s231 + $0xc0] sm:$0xff] %vm1334, %v2037
      %2100 = vst.msk [vmem:[%s231 + $0xc8] sm:$0xff] %vm1334, %v2042
      %2101 = vst.msk [vmem:[%s231 + $0xd0] sm:$0xff] %vm1334, %v2047
      %2102 = vst.msk [vmem:[%s231 + $0xd8] sm:$0xff] %vm1334, %v2052
      %2103 = vst.msk [vmem:[%s231 + $0xe0] sm:$0xff] %vm1334, %v2057
      %2104 = vst.msk [vmem:[%s231 + $0xe8] sm:$0xff] %vm1334, %v2062
      %2105 = vst.msk [vmem:[%s231 + $0xf0] sm:$0xff] %vm1334, %v2067
      %2106 = vst.msk [vmem:[%s231 + $0xf8] sm:$0xff] %vm1334, %v2072
      %v2107 = vsel %vm1334, %v1917, 0.0
      %v2108 = vsel %vm1334, %v1922, 0.0
      %v2109 = vadd.f32 %v2107, %v2108
      %v2110 = vsel %vm1334, %v1927, 0.0
      %v2111 = vadd.f32 %v2109, %v2110
      %v2112 = vsel %vm1334, %v1932, 0.0
      %v2113 = vadd.f32 %v2111, %v2112
      %v2114 = vsel %vm1334, %v1937, 0.0
      %v2115 = vadd.f32 %v2113, %v2114
      %v2116 = vsel %vm1334, %v1942, 0.0
      %v2117 = vadd.f32 %v2115, %v2116
      %v2118 = vsel %vm1334, %v1947, 0.0
      %v2119 = vadd.f32 %v2117, %v2118
      %v2120 = vsel %vm1334, %v1952, 0.0
      %v2121 = vadd.f32 %v2119, %v2120
      %v2122 = vsel %vm1334, %v1957, 0.0
      %v2123 = vadd.f32 %v2121, %v2122
      %v2124 = vsel %vm1334, %v1962, 0.0
      %v2125 = vadd.f32 %v2123, %v2124
      %v2126 = vsel %vm1334, %v1967, 0.0
      %v2127 = vadd.f32 %v2125, %v2126
      %v2128 = vsel %vm1334, %v1972, 0.0
      %v2129 = vadd.f32 %v2127, %v2128
      %v2130 = vsel %vm1334, %v1977, 0.0
      %v2131 = vadd.f32 %v2129, %v2130
      %v2132 = vsel %vm1334, %v1982, 0.0
      %v2133 = vadd.f32 %v2131, %v2132
      %v2134 = vsel %vm1334, %v1987, 0.0
      %v2135 = vadd.f32 %v2133, %v2134
      %v2136 = vsel %vm1334, %v1992, 0.0
      %v2137 = vadd.f32 %v2135, %v2136
      %v2138 = vsel %vm1334, %v1997, 0.0
      %v2139 = vadd.f32 %v2137, %v2138
      %v2140 = vsel %vm1334, %v2002, 0.0
      %v2141 = vadd.f32 %v2139, %v2140
      %v2142 = vsel %vm1334, %v2007, 0.0
      %v2143 = vadd.f32 %v2141, %v2142
      %v2144 = vsel %vm1334, %v2012, 0.0
      %v2145 = vadd.f32 %v2143, %v2144
      %v2146 = vsel %vm1334, %v2017, 0.0
      %v2147 = vadd.f32 %v2145, %v2146
      %v2148 = vsel %vm1334, %v2022, 0.0
      %v2149 = vadd.f32 %v2147, %v2148
      %v2150 = vsel %vm1334, %v2027, 0.0
      %v2151 = vadd.f32 %v2149, %v2150
      %v2152 = vsel %vm1334, %v2032, 0.0
      %v2153 = vadd.f32 %v2151, %v2152
      %v2154 = vsel %vm1334, %v2037, 0.0
      %v2155 = vadd.f32 %v2153, %v2154
      %v2156 = vsel %vm1334, %v2042, 0.0
      %v2157 = vadd.f32 %v2155, %v2156
      %v2158 = vsel %vm1334, %v2047, 0.0
      %v2159 = vadd.f32 %v2157, %v2158
      %v2160 = vsel %vm1334, %v2052, 0.0
      %v2161 = vadd.f32 %v2159, %v2160
      %v2162 = vsel %vm1334, %v2057, 0.0
      %v2163 = vadd.f32 %v2161, %v2162
      %v2164 = vsel %vm1334, %v2062, 0.0
      %v2165 = vadd.f32 %v2163, %v2164
      %v2166 = vsel %vm1334, %v2067, 0.0
      %v2167 = vadd.f32 %v2165, %v2166
      %v2168 = vsel %vm1334, %v2072, 0.0
      %v2169 = vadd.f32 %v2167, %v2168
      %v2170 = vrot.slane %v2169, 4
      %v2171 = vadd.f32 %v2169, %v2170
      %v2172 = vrot.slane %v2171, 2
      %v2173 = vadd.f32 %v2171, %v2172
      %v2174 = vrot.slane %v2173, 1
      %v2175 = vadd.f32 %v2173, %v2174
      %v2176 = vrcp.pop 256.0
      %v2177 = vmul.f32 %v2175, %v2176
      %v2178 = vsub.f32 %v1917, %v2177
      %v2179 = vsub.f32 %v1922, %v2177
      %v2180 = vsub.f32 %v1927, %v2177
      %v2181 = vsub.f32 %v1932, %v2177
      %v2182 = vsub.f32 %v1937, %v2177
      %v2183 = vsub.f32 %v1942, %v2177
      %v2184 = vsub.f32 %v1947, %v2177
      %v2185 = vsub.f32 %v1952, %v2177
      %v2186 = vsub.f32 %v1957, %v2177
      %v2187 = vsub.f32 %v1962, %v2177
      %v2188 = vsub.f32 %v1967, %v2177
      %v2189 = vsub.f32 %v1972, %v2177
      %v2190 = vsub.f32 %v1977, %v2177
      %v2191 = vsub.f32 %v1982, %v2177
      %v2192 = vsub.f32 %v1987, %v2177
      %v2193 = vsub.f32 %v1992, %v2177
      %v2194 = vsub.f32 %v1997, %v2177
      %v2195 = vsub.f32 %v2002, %v2177
      %v2196 = vsub.f32 %v2007, %v2177
      %v2197 = vsub.f32 %v2012, %v2177
      %v2198 = vsub.f32 %v2017, %v2177
      %v2199 = vsub.f32 %v2022, %v2177
      %v2200 = vsub.f32 %v2027, %v2177
      %v2201 = vsub.f32 %v2032, %v2177
      %v2202 = vsub.f32 %v2037, %v2177
      %v2203 = vsub.f32 %v2042, %v2177
      %v2204 = vsub.f32 %v2047, %v2177
      %v2205 = vsub.f32 %v2052, %v2177
      %v2206 = vsub.f32 %v2057, %v2177
      %v2207 = vsub.f32 %v2062, %v2177
      %v2208 = vsub.f32 %v2067, %v2177
      %v2209 = vsub.f32 %v2072, %v2177
      %v2210 = vmul.f32 %v2178, %v2178
      %v2211 = vmul.f32 %v2179, %v2179
      %v2212 = vmul.f32 %v2180, %v2180
      %v2213 = vmul.f32 %v2181, %v2181
      %v2214 = vmul.f32 %v2182, %v2182
      %v2215 = vmul.f32 %v2183, %v2183
      %v2216 = vmul.f32 %v2184, %v2184
      %v2217 = vmul.f32 %v2185, %v2185
      %v2218 = vmul.f32 %v2186, %v2186
      %v2219 = vmul.f32 %v2187, %v2187
      %v2220 = vmul.f32 %v2188, %v2188
      %v2221 = vmul.f32 %v2189, %v2189
      %v2222 = vmul.f32 %v2190, %v2190
      %v2223 = vmul.f32 %v2191, %v2191
      %v2224 = vmul.f32 %v2192, %v2192
      %v2225 = vmul.f32 %v2193, %v2193
      %v2226 = vmul.f32 %v2194, %v2194
      %v2227 = vmul.f32 %v2195, %v2195
      %v2228 = vmul.f32 %v2196, %v2196
      %v2229 = vmul.f32 %v2197, %v2197
      %v2230 = vmul.f32 %v2198, %v2198
      %v2231 = vmul.f32 %v2199, %v2199
      %v2232 = vmul.f32 %v2200, %v2200
      %v2233 = vmul.f32 %v2201, %v2201
      %v2234 = vmul.f32 %v2202, %v2202
      %v2235 = vmul.f32 %v2203, %v2203
      %v2236 = vmul.f32 %v2204, %v2204
      %v2237 = vmul.f32 %v2205, %v2205
      %v2238 = vmul.f32 %v2206, %v2206
      %v2239 = vmul.f32 %v2207, %v2207
      %v2240 = vmul.f32 %v2208, %v2208
      %v2241 = vmul.f32 %v2209, %v2209
      %v2242 = vsel %vm1334, %v2210, 0.0
      %v2243 = vsel %vm1334, %v2211, 0.0
      %v2244 = vadd.f32 %v2242, %v2243
      %v2245 = vsel %vm1334, %v2212, 0.0
      %v2246 = vadd.f32 %v2244, %v2245
      %v2247 = vsel %vm1334, %v2213, 0.0
      %v2248 = vadd.f32 %v2246, %v2247
      %v2249 = vsel %vm1334, %v2214, 0.0
      %v2250 = vadd.f32 %v2248, %v2249
      %v2251 = vsel %vm1334, %v2215, 0.0
      %v2252 = vadd.f32 %v2250, %v2251
      %v2253 = vsel %vm1334, %v2216, 0.0
      %v2254 = vadd.f32 %v2252, %v2253
      %v2255 = vsel %vm1334, %v2217, 0.0
      %v2256 = vadd.f32 %v2254, %v2255
      %v2257 = vsel %vm1334, %v2218, 0.0
      %v2258 = vadd.f32 %v2256, %v2257
      %v2259 = vsel %vm1334, %v2219, 0.0
      %v2260 = vadd.f32 %v2258, %v2259
      %v2261 = vsel %vm1334, %v2220, 0.0
      %v2262 = vadd.f32 %v2260, %v2261
      %v2263 = vsel %vm1334, %v2221, 0.0
      %v2264 = vadd.f32 %v2262, %v2263
      %v2265 = vsel %vm1334, %v2222, 0.0
      %v2266 = vadd.f32 %v2264, %v2265
      %v2267 = vsel %vm1334, %v2223, 0.0
      %v2268 = vadd.f32 %v2266, %v2267
      %v2269 = vsel %vm1334, %v2224, 0.0
      %v2270 = vadd.f32 %v2268, %v2269
      %v2271 = vsel %vm1334, %v2225, 0.0
      %v2272 = vadd.f32 %v2270, %v2271
      %v2273 = vsel %vm1334, %v2226, 0.0
      %v2274 = vadd.f32 %v2272, %v2273
      %v2275 = vsel %vm1334, %v2227, 0.0
      %v2276 = vadd.f32 %v2274, %v2275
      %v2277 = vsel %vm1334, %v2228, 0.0
      %v2278 = vadd.f32 %v2276, %v2277
      %v2279 = vsel %vm1334, %v2229, 0.0
      %v2280 = vadd.f32 %v2278, %v2279
      %v2281 = vsel %vm1334, %v2230, 0.0
      %v2282 = vadd.f32 %v2280, %v2281
      %v2283 = vsel %vm1334, %v2231, 0.0
      %v2284 = vadd.f32 %v2282, %v2283
      %v2285 = vsel %vm1334, %v2232, 0.0
      %v2286 = vadd.f32 %v2284, %v2285
      %v2287 = vsel %vm1334, %v2233, 0.0
      %v2288 = vadd.f32 %v2286, %v2287
      %v2289 = vsel %vm1334, %v2234, 0.0
      %v2290 = vadd.f32 %v2288, %v2289
      %v2291 = vsel %vm1334, %v2235, 0.0
      %v2292 = vadd.f32 %v2290, %v2291
      %v2293 = vsel %vm1334, %v2236, 0.0
      %v2294 = vadd.f32 %v2292, %v2293
      %v2295 = vsel %vm1334, %v2237, 0.0
      %v2296 = vadd.f32 %v2294, %v2295
      %v2297 = vsel %vm1334, %v2238, 0.0
      %v2298 = vadd.f32 %v2296, %v2297
      %v2299 = vsel %vm1334, %v2239, 0.0
      %v2300 = vadd.f32 %v2298, %v2299
      %v2301 = vsel %vm1334, %v2240, 0.0
      %v2302 = vadd.f32 %v2300, %v2301
      %v2303 = vsel %vm1334, %v2241, 0.0
      %v2304 = vadd.f32 %v2302, %v2303
      %v2305 = vrot.slane %v2304, 4
      %v2306 = vadd.f32 %v2304, %v2305
      %v2307 = vrot.slane %v2306, 2
      %v2308 = vadd.f32 %v2306, %v2307
      %v2309 = vrot.slane %v2308, 1
      %v2310 = vadd.f32 %v2308, %v2309
      %v2311 = vsel %vm411, %v2175, %v2310
      %vm2312 = vcmask 254976
      %2313 = vst.msk [vmem:[%s236] sm:$0x3] %vm2312, %v2311
      %s2314 = smul.u32 32, %s17
      %p2315 = scmp.lt.s32.totalorder %s2314, 63
      %s2316 = scalar_select %p2315, %s2314, 63
      %s2317 = smul.addr %s2316, 8
      %s2318 = scalar_lea.vmem %s4, %s2317
      %p2319 = scmp.lt.s32.totalorder %s17, 1
      %s2320 = scalar_select %p2319, %s17, 1
      %s2321 = smul.addr %s2320, 2
      %s2322 = scalar_lea.vmem %s5, %s2321
      // Predicated region
      $region37: #{resbottleneck_forward.5} parent=35 // pred_check
        %p2323 = pneg %p124
      $region38: #{resbottleneck_forward.5} parent=35 // pred_check_branch
        %2325 = sbr.rel (%p2323) target = $region40
      $region39: #{resbottleneck_forward.5} parent=35 // pred_region
        %s2326 = smul.u32 32, %s17
      $region40: #{resbottleneck_forward.5} parent=35 // pred_fallthru
        _
      // Predicated region
      $region41: #{resbottleneck_forward.5} parent=35 // pred_check
        %p2327 = pneg %p150
      $region42: #{resbottleneck_forward.5} parent=35 // pred_check_branch
        %2329 = sbr.rel (%p2327) target = $region44
      $region43: #{resbottleneck_forward.5} parent=35 // pred_region
        _
      $region44: #{resbottleneck_forward.5} parent=35 // pred_fallthru
        _
    $region36: #{resbottleneck_forward.5} parent=5 // pred_fallthru
      _
    %p2330 = scmp.le.s32.totalorder 2, %s12
    // Predicated region
    $region45: #{resbottleneck_forward.5} parent=5 // pred_check
      %p2331 = pneg %p2330
    $region46: #{resbottleneck_forward.5} parent=5 // pred_check_branch
      %2333 = sbr.rel (%p2331) target = $region48
    $region47: #{resbottleneck_forward.5} parent=5 // pred_region
      %s2334 = ssub.s32 %s12, 2
      // Predicated region
      $region49: #{resbottleneck_forward.5} parent=47 // pred_check
        %p2335 = pneg %p130
      $region50: #{resbottleneck_forward.5} parent=47 // pred_check_branch
        %2337 = sbr.rel (%p2335) target = $region52
      $region51: #{resbottleneck_forward.5} parent=47 // pred_region
        %s2338 = smul.u32 32, %s18
        %p2339 = scmp.lt.s32.totalorder %s2338, 63
        %s2340 = scalar_select %p2339, %s2338, 63
        %s2341 = smul.addr %s2340, 8
        %s2342 = scalar_lea.vmem %s4, %s2341
      $region52: #{resbottleneck_forward.5} parent=47 // pred_fallthru
        _
      // Predicated region
      $region53: #{resbottleneck_forward.5} parent=47 // pred_check
        %p2343 = pneg %p156
      $region54: #{resbottleneck_forward.5} parent=47 // pred_check_branch
        %2345 = sbr.rel (%p2343) target = $region56
      $region55: #{resbottleneck_forward.5} parent=47 // pred_region
        %p2346 = scmp.lt.s32.totalorder %s18, 1
        %s2347 = scalar_select %p2346, %s18, 1
        %s2348 = smul.addr %s2347, 2
        %s2349 = scalar_lea.vmem %s5, %s2348
      $region56: #{resbottleneck_forward.5} parent=47 // pred_fallthru
        _
    $region48: #{resbottleneck_forward.5} parent=5 // pred_fallthru
      _
  $region6: #{resbottleneck_forward.5} parent=0 // loop_footer
    %s16 = sadd.s32 1, %s12
  $region7: #{resbottleneck_forward.5} parent=0 // loop_footer_branch
    %11 = sbr.rel target = $region3
  $region8: #{resbottleneck_forward.5} parent=0 // loop_exit
    _

// kernel: resbottleneck_forward.7
$region0: #{resbottleneck_forward.7}
  #allocation0 [shape = 'u32[]', space=smem, size = 0x4, offset = 0x4, fixed_abs, tag = 'smem constant byte address 0x4 - core index']
  #allocation1 [shape = 'u32[144,128]{1,0:T(1,128)}', space=vmem, size = 0x12000, scoped, tag = 'internal scratch']
  %s0 = inlined_call_operand.vmem [shape: f32[512,32], index: 0, kind: input, shape index: {}]
  %s1 = inlined_call_operand.vmem [shape: f32[1,32], index: 1, kind: input, shape index: {}]
  %s2 = inlined_call_operand.vmem [shape: f32[1,32], index: 2, kind: input, shape index: {}]
  %s3 = inlined_call_operand.vmem [shape: f32[32,128], index: 3, kind: input, shape index: {}]
  %s4 = inlined_call_operand.vmem [shape: f32[128,1], index: 4, kind: input, shape index: {}]
  %s5 = inlined_call_operand.vmem [shape: f32[2,128,1], index: 5, kind: input, shape index: {}]
  %s6 = inlined_call_operand.vmem [shape: f32[2,128,256], index: 6, kind: input, shape index: {}]
  %s7 = inlined_call_operand.vmem [shape: f32[2,128,256], index: 7, kind: output, shape index: {}]
  %s8 = sld [smem:[#allocation0]]
  $region61: #{resbottleneck_forward.7} parent=0
    _
  %s10 = ssub.s32 1, %s8
  %s11 = scalar_select 0, %s10, %s8
  loop: start=0, step=1, limit=4
  $region2: #{resbottleneck_forward.7} parent=0 // loop_pre_header
    _
  $region3: #{resbottleneck_forward.7} parent=0 // loop_header
    %s13 = sphi 0, %s17
    %p14 = scmp.ge.s32.totalorder %s13, 4
    %s23 = sphi 0, %s25
    %s26 = sphi 0, %s23
    %s27 = sphi 0, %s26
    %s43 = sphi 0, %s27
    %s47 = sphi 0, %s47
    %s49 = sphi 0, %s47
    %s50 = sphi 0, %s49
    %s64 = sphi 0, %s50
    %s68 = sphi 0, %s68
    %s70 = sphi 0, %s68
    %s71 = sphi 0, %s70
    %s85 = sphi 0, %s71
    %s89 = sphi 0, %s89
    %s91 = sphi 0, %s89
    %s92 = sphi 0, %s91
    %s106 = sphi 0, %s92
    %s110 = sphi 0, %s110
    %s112 = sphi 0, %s110
    %s113 = sphi 0, %s112
    %s127 = sphi 0, %s113
    %s133 = sphi 0, %s135
    %s136 = sphi 0, %s133
    %s137 = sphi 0, %s136
    %s153 = sphi 0, %s137
    %s159 = sphi 0, %s161
    %s162 = sphi 0, %s159
    %s163 = sphi 0, %s162
    %s179 = sphi 0, %s163
    %s185 = sphi 0, %s187
    %s188 = sphi 0, %s185
    %s189 = sphi 0, %s188
    %s205 = sphi 0, %s189
  $region4: #{resbottleneck_forward.7} parent=0 // loop_header_branch
    %16 = sbr.rel (%p14) target = $region8
  $region5: #{resbottleneck_forward.7} parent=0 // loop_body
    %s18 = ssub.s32 %s13, 1
    %s19 = ssub.s32 %s13, 2
    %s20 = sadd.s32 %s13, 1
    %s21 = ssub.s32 %s13, %s20
    %p22 = scmp.eq.s32.totalorder %s21, 0
    %s24 = sadd.s32 %s23, 1
    %s25 = scalar_select %p22, %s23, %s24
    %p28 = pneg %p22
    %p29 = scmp.eq.s32.totalorder %s13, 1
    %p30 = por %p28, %p29
    %p31 = scmp.ne.s32.totalorder %s23, %s26
    %p32 = scmp.eq.s32.totalorder %s13, 0
    %p33 = por %p31, %p32
    %p34 = scmp.ne.s32.totalorder %s23, %s26
    %p35 = scmp.eq.s32.totalorder %s18, 1
    %p36 = por %p34, %p35
    %p37 = scmp.ne.s32.totalorder %s26, %s27
    %p38 = scmp.eq.s32.totalorder %s18, 0
    %p39 = por %p37, %p38
    %p40 = scmp.ne.s32.totalorder %s26, %s27
    %p41 = scmp.eq.s32.totalorder %s19, 1
    %p42 = por %p40, %p41
    %p44 = scmp.ne.s32.totalorder %s27, %s43
    %p45 = scmp.eq.s32.totalorder %s19, 0
    %p46 = por %p44, %p45
    %s48 = sadd.s32 %s47, 1
    %p51 = scmp.eq.s32.totalorder %s13, 1
    %p52 = scmp.ne.s32.totalorder %s47, %s49
    %p53 = scmp.eq.s32.totalorder %s13, 0
    %p54 = por %p52, %p53
    %p55 = scmp.ne.s32.totalorder %s47, %s49
    %p56 = scmp.eq.s32.totalorder %s18, 1
    %p57 = por %p55, %p56
    %p58 = scmp.ne.s32.totalorder %s49, %s50
    %p59 = scmp.eq.s32.totalorder %s18, 0
    %p60 = por %p58, %p59
    %p61 = scmp.ne.s32.totalorder %s49, %s50
    %p62 = scmp.eq.s32.totalorder %s19, 1
    %p63 = por %p61, %p62
    %p65 = scmp.ne.s32.totalorder %s50, %s64
    %p66 = scmp.eq.s32.totalorder %s19, 0
    %p67 = por %p65, %p66
    %s69 = sadd.s32 %s68, 1
    %p72 = scmp.eq.s32.totalorder %s13, 1
    %p73 = scmp.ne.s32.totalorder %s68, %s70
    %p74 = scmp.eq.s32.totalorder %s13, 0
    %p75 = por %p73, %p74
    %p76 = scmp.ne.s32.totalorder %s68, %s70
    %p77 = scmp.eq.s32.totalorder %s18, 1
    %p78 = por %p76, %p77
    %p79 = scmp.ne.s32.totalorder %s70, %s71
    %p80 = scmp.eq.s32.totalorder %s18, 0
    %p81 = por %p79, %p80
    %p82 = scmp.ne.s32.totalorder %s70, %s71
    %p83 = scmp.eq.s32.totalorder %s19, 1
    %p84 = por %p82, %p83
    %p86 = scmp.ne.s32.totalorder %s71, %s85
    %p87 = scmp.eq.s32.totalorder %s19, 0
    %p88 = por %p86, %p87
    %s90 = sadd.s32 %s89, 1
    %p93 = scmp.eq.s32.totalorder %s13, 1
    %p94 = scmp.ne.s32.totalorder %s89, %s91
    %p95 = scmp.eq.s32.totalorder %s13, 0
    %p96 = por %p94, %p95
    %p97 = scmp.ne.s32.totalorder %s89, %s91
    %p98 = scmp.eq.s32.totalorder %s18, 1
    %p99 = por %p97, %p98
    %p100 = scmp.ne.s32.totalorder %s91, %s92
    %p101 = scmp.eq.s32.totalorder %s18, 0
    %p102 = por %p100, %p101
    %p103 = scmp.ne.s32.totalorder %s91, %s92
    %p104 = scmp.eq.s32.totalorder %s19, 1
    %p105 = por %p103, %p104
    %p107 = scmp.ne.s32.totalorder %s92, %s106
    %p108 = scmp.eq.s32.totalorder %s19, 0
    %p109 = por %p107, %p108
    %s111 = sadd.s32 %s110, 1
    %p114 = scmp.eq.s32.totalorder %s13, 1
    %p115 = scmp.ne.s32.totalorder %s110, %s112
    %p116 = scmp.eq.s32.totalorder %s13, 0
    %p117 = por %p115, %p116
    %p118 = scmp.ne.s32.totalorder %s110, %s112
    %p119 = scmp.eq.s32.totalorder %s18, 1
    %p120 = por %p118, %p119
    %p121 = scmp.ne.s32.totalorder %s112, %s113
    %p122 = scmp.eq.s32.totalorder %s18, 0
    %p123 = por %p121, %p122
    %p124 = scmp.ne.s32.totalorder %s112, %s113
    %p125 = scmp.eq.s32.totalorder %s19, 1
    %p126 = por %p124, %p125
    %p128 = scmp.ne.s32.totalorder %s113, %s127
    %p129 = scmp.eq.s32.totalorder %s19, 0
    %p130 = por %p128, %p129
    %s131 = ssub.s32 %s13, %s20
    %p132 = scmp.eq.s32.totalorder %s131, 0
    %s134 = sadd.s32 %s133, 1
    %s135 = scalar_select %p132, %s133, %s134
    %p138 = pneg %p132
    %p139 = scmp.eq.s32.totalorder %s13, 1
    %p140 = por %p138, %p139
    %p141 = scmp.ne.s32.totalorder %s133, %s136
    %p142 = scmp.eq.s32.totalorder %s13, 0
    %p143 = por %p141, %p142
    %p144 = scmp.ne.s32.totalorder %s133, %s136
    %p145 = scmp.eq.s32.totalorder %s18, 1
    %p146 = por %p144, %p145
    %p147 = scmp.ne.s32.totalorder %s136, %s137
    %p148 = scmp.eq.s32.totalorder %s18, 0
    %p149 = por %p147, %p148
    %p150 = scmp.ne.s32.totalorder %s136, %s137
    %p151 = scmp.eq.s32.totalorder %s19, 1
    %p152 = por %p150, %p151
    %p154 = scmp.ne.s32.totalorder %s137, %s153
    %p155 = scmp.eq.s32.totalorder %s19, 0
    %p156 = por %p154, %p155
    %s157 = ssub.s32 %s13, %s20
    %p158 = scmp.eq.s32.totalorder %s157, 0
    %s160 = sadd.s32 %s159, 1
    %s161 = scalar_select %p158, %s159, %s160
    %p164 = pneg %p158
    %p165 = scmp.eq.s32.totalorder %s13, 1
    %p166 = por %p164, %p165
    %p167 = scmp.ne.s32.totalorder %s159, %s162
    %p168 = scmp.eq.s32.totalorder %s13, 0
    %p169 = por %p167, %p168
    %p170 = scmp.ne.s32.totalorder %s159, %s162
    %p171 = scmp.eq.s32.totalorder %s18, 1
    %p172 = por %p170, %p171
    %p173 = scmp.ne.s32.totalorder %s162, %s163
    %p174 = scmp.eq.s32.totalorder %s18, 0
    %p175 = por %p173, %p174
    %p176 = scmp.ne.s32.totalorder %s162, %s163
    %p177 = scmp.eq.s32.totalorder %s19, 1
    %p178 = por %p176, %p177
    %p180 = scmp.ne.s32.totalorder %s163, %s179
    %p181 = scmp.eq.s32.totalorder %s19, 0
    %p182 = por %p180, %p181
    %s183 = ssub.s32 %s13, %s20
    %p184 = scmp.eq.s32.totalorder %s183, 0
    %s186 = sadd.s32 %s185, 1
    %s187 = scalar_select %p184, %s185, %s186
    %p190 = pneg %p184
    %p191 = scmp.eq.s32.totalorder %s13, 1
    %p192 = por %p190, %p191
    %p193 = scmp.ne.s32.totalorder %s185, %s188
    %p194 = scmp.eq.s32.totalorder %s13, 0
    %p195 = por %p193, %p194
    %p196 = scmp.ne.s32.totalorder %s185, %s188
    %p197 = scmp.eq.s32.totalorder %s18, 1
    %p198 = por %p196, %p197
    %p199 = scmp.ne.s32.totalorder %s188, %s189
    %p200 = scmp.eq.s32.totalorder %s18, 0
    %p201 = por %p199, %p200
    %p202 = scmp.ne.s32.totalorder %s188, %s189
    %p203 = scmp.eq.s32.totalorder %s19, 1
    %p204 = por %p202, %p203
    %p206 = scmp.ne.s32.totalorder %s189, %s205
    %p207 = scmp.eq.s32.totalorder %s19, 0
    %p208 = por %p206, %p207
    %p209 = scmp.le.s32.totalorder 1, %s13
    %p210 = scmp.lt.s32.totalorder %s13, 3
    %p211 = pnand %p209, %p210
    %p212 = pneg %p211
    // Predicated region
    $region9: #{resbottleneck_forward.7} parent=5 // pred_check
      _
    $region10: #{resbottleneck_forward.7} parent=5 // pred_check_branch
      %214 = sbr.rel (%p211) target = $region12
    $region11: #{resbottleneck_forward.7} parent=5 // pred_region
      %s215 = ssub.s32 %s13, 1
      // Predicated region
      $region13: #{resbottleneck_forward.7} parent=11 // pred_check
        %p216 = pneg %p60
      $region14: #{resbottleneck_forward.7} parent=11 // pred_check_branch
        %218 = sbr.rel (%p216) target = $region16
      $region15: #{resbottleneck_forward.7} parent=11 // pred_region
        _
      $region16: #{resbottleneck_forward.7} parent=11 // pred_fallthru
        _
      // Predicated region
      $region17: #{resbottleneck_forward.7} parent=11 // pred_check
        %p219 = pneg %p81
      $region18: #{resbottleneck_forward.7} parent=11 // pred_check_branch
        %221 = sbr.rel (%p219) target = $region20
      $region19: #{resbottleneck_forward.7} parent=11 // pred_region
        _
      $region20: #{resbottleneck_forward.7} parent=11 // pred_fallthru
        _
      // Predicated region
      $region21: #{resbottleneck_forward.7} parent=11 // pred_check
        %p222 = pneg %p102
      $region22: #{resbottleneck_forward.7} parent=11 // pred_check_branch
        %224 = sbr.rel (%p222) target = $region24
      $region23: #{resbottleneck_forward.7} parent=11 // pred_region
        _
      $region24: #{resbottleneck_forward.7} parent=11 // pred_fallthru
        _
      // Predicated region
      $region25: #{resbottleneck_forward.7} parent=11 // pred_check
        %p225 = pneg %p123
      $region26: #{resbottleneck_forward.7} parent=11 // pred_check_branch
        %227 = sbr.rel (%p225) target = $region28
      $region27: #{resbottleneck_forward.7} parent=11 // pred_region
        _
      $region28: #{resbottleneck_forward.7} parent=11 // pred_fallthru
        _
    $region12: #{resbottleneck_forward.7} parent=5 // pred_fallthru
      _
    %p228 = scmp.lt.s32.totalorder %s13, 2
    // Predicated region
    $region29: #{resbottleneck_forward.7} parent=5 // pred_check
      %p229 = pneg %p228
    $region30: #{resbottleneck_forward.7} parent=5 // pred_check_branch
      %231 = sbr.rel (%p229) target = $region32
    $region31: #{resbottleneck_forward.7} parent=5 // pred_region
      // Predicated region
      $region33: #{resbottleneck_forward.7} parent=31 // pred_check
        %p232 = pneg %p33
      $region34: #{resbottleneck_forward.7} parent=31 // pred_check_branch
        %234 = sbr.rel (%p232) target = $region36
      $region35: #{resbottleneck_forward.7} parent=31 // pred_region
        %s235 = smul.u32 32, %s13
        %p236 = scmp.lt.s32.totalorder %s235, 63
        %s237 = scalar_select %p236, %s235, 63
        %s238 = smul.addr %s237, 8
        %s239 = scalar_lea.vmem %s0, %s238
        %s240 = smul.u32 32, %s13
      $region36: #{resbottleneck_forward.7} parent=31 // pred_fallthru
        _
      // Predicated region
      $region37: #{resbottleneck_forward.7} parent=31 // pred_check
        %p241 = pneg %p143
      $region38: #{resbottleneck_forward.7} parent=31 // pred_check_branch
        %243 = sbr.rel (%p241) target = $region40
      $region39: #{resbottleneck_forward.7} parent=31 // pred_region
        %p244 = scmp.lt.s32.totalorder %s13, 1
        %s245 = scalar_select %p244, %s13, 1
        %s246 = smul.addr %s245, 16
        %s247 = smul.addr %s246, 8
        %s248 = scalar_lea.vmem %s5, %s247
      $region40: #{resbottleneck_forward.7} parent=31 // pred_fallthru
        _
      // Predicated region
      $region41: #{resbottleneck_forward.7} parent=31 // pred_check
        %p249 = pneg %p169
      $region42: #{resbottleneck_forward.7} parent=31 // pred_check_branch
        %251 = sbr.rel (%p249) target = $region44
      $region43: #{resbottleneck_forward.7} parent=31 // pred_region
        %p252 = scmp.lt.s32.totalorder %s13, 1
        %s253 = scalar_select %p252, %s13, 1
        %s254 = smul.addr %s253, 32
        %s255 = smul.addr %s254, 8
        %s256 = scalar_lea.vmem %s6, %s255
      $region44: #{resbottleneck_forward.7} parent=31 // pred_fallthru
        _
    $region32: #{resbottleneck_forward.7} parent=5 // pred_fallthru
      _
    %p257 = scmp.le.s32.totalorder 1, %s13
    %p258 = scmp.lt.s32.totalorder %s13, 3
    %p259 = pnand %p257, %p258
    %p260 = pneg %p259
    // Predicated region
    $region45: #{resbottleneck_forward.7} parent=5 // pred_check
      _
    $region46: #{resbottleneck_forward.7} parent=5 // pred_check_branch
      %262 = sbr.rel (%p259) target = $region48
    $region47: #{resbottleneck_forward.7} parent=5 // pred_region
      %s263 = ssub.s32 %s13, 1
      %s264 = smul.u32 32, %s18
      %p265 = scmp.lt.s32.totalorder %s264, 63
      %s266 = scalar_select %p265, %s264, 63
      %s267 = smul.addr %s266, 8
      %s268 = scalar_lea.vmem %s0, %s267
      %p269 = pneg %p39
      %p270 = pneg %p36
      %p271 = pneg %p60
      %p272 = pneg %p57
      %p273 = pneg %p81
      %p274 = pneg %p78
      %p275 = pneg %p102
      %p276 = pneg %p99
      %p277 = pneg %p123
      %p278 = pneg %p120
      %p279 = scmp.lt.s32.totalorder %s18, 1
      %s280 = scalar_select %p279, %s18, 1
      %s281 = smul.addr %s280, 16
      %s282 = smul.addr %s281, 8
      %s283 = scalar_lea.vmem %s5, %s282
      %p284 = pneg %p149
      %p285 = pneg %p146
      %p286 = scmp.lt.s32.totalorder %s18, 1
      %s287 = scalar_select %p286, %s18, 1
      %s288 = smul.addr %s287, 32
      %s289 = smul.addr %s288, 8
      %s290 = scalar_lea.vmem %s6, %s289
      %p291 = pneg %p175
      %p292 = pneg %p172
      %p293 = pneg %p201
      %p294 = pneg %p198
      %p295 = scmp.lt.s32.totalorder %s18, 1
      %s296 = scalar_select %p295, %s18, 1
      %s297 = smul.addr %s296, 32
      %s298 = smul.addr %s297, 8
      %s299 = scalar_lea.vmem %s7, %s298
      %s300 = smul.u32 32, %s18
      %p301 = scmp.lt.s32.totalorder %s300, 63
      %s302 = scalar_select %p301, %s300, 63
      %s303 = smul.addr %s302, 8
      %s304 = scalar_lea.vmem %s0, %s303
      %s305 = smul.u32 32, %s18
      %p306 = scmp.lt.s32.totalorder %s18, 1
      %s307 = scalar_select %p306, %s18, 1
      %s308 = smul.addr %s307, 16
      %s309 = smul.addr %s308, 8
      %s310 = scalar_lea.vmem %s5, %s309
      %p311 = scmp.lt.s32.totalorder %s18, 1
      %s312 = scalar_select %p311, %s18, 1
      %s313 = smul.addr %s312, 32
      %s314 = smul.addr %s313, 8
      %s315 = scalar_lea.vmem %s6, %s314
      %p316 = scmp.lt.s32.totalorder %s18, 1
      %s317 = scalar_select %p316, %s18, 1
      %s318 = smul.addr %s317, 32
      %s319 = smul.addr %s318, 8
      %s320 = scalar_lea.vmem %s7, %s319
      %v321 = vld [vmem:[%s304] sm:$0xff]
      %v322 = vld [vmem:[%s304 + $0x8] sm:$0xff]
      %v323 = vld [vmem:[%s304 + $0x10] sm:$0xff]
      %v324 = vld [vmem:[%s304 + $0x18] sm:$0xff]
      %v325 = vld [vmem:[%s304 + $0x20] sm:$0xff]
      %v326 = vld [vmem:[%s304 + $0x28] sm:$0xff]
      %v327 = vld [vmem:[%s304 + $0x30] sm:$0xff]
      %v328 = vld [vmem:[%s304 + $0x38] sm:$0xff]
      %v329 = vld [vmem:[%s304 + $0x40] sm:$0xff]
      %v330 = vld [vmem:[%s304 + $0x48] sm:$0xff]
      %v331 = vld [vmem:[%s304 + $0x50] sm:$0xff]
      %v332 = vld [vmem:[%s304 + $0x58] sm:$0xff]
      %v333 = vld [vmem:[%s304 + $0x60] sm:$0xff]
      %v334 = vld [vmem:[%s304 + $0x68] sm:$0xff]
      %v335 = vld [vmem:[%s304 + $0x70] sm:$0xff]
      %v336 = vld [vmem:[%s304 + $0x78] sm:$0xff]
      %v337 = vld [vmem:[%s304 + $0x80] sm:$0xff]
      %v338 = vld [vmem:[%s304 + $0x88] sm:$0xff]
      %v339 = vld [vmem:[%s304 + $0x90] sm:$0xff]
      %v340 = vld [vmem:[%s304 + $0x98] sm:$0xff]
      %v341 = vld [vmem:[%s304 + $0xa0] sm:$0xff]
      %v342 = vld [vmem:[%s304 + $0xa8] sm:$0xff]
      %v343 = vld [vmem:[%s304 + $0xb0] sm:$0xff]
      %v344 = vld [vmem:[%s304 + $0xb8] sm:$0xff]
      %v345 = vld [vmem:[%s304 + $0xc0] sm:$0xff]
      %v346 = vld [vmem:[%s304 + $0xc8] sm:$0xff]
      %v347 = vld [vmem:[%s304 + $0xd0] sm:$0xff]
      %v348 = vld [vmem:[%s304 + $0xd8] sm:$0xff]
      %v349 = vld [vmem:[%s304 + $0xe0] sm:$0xff]
      %v350 = vld [vmem:[%s304 + $0xe8] sm:$0xff]
      %v351 = vld [vmem:[%s304 + $0xf0] sm:$0xff]
      %v352 = vld [vmem:[%s304 + $0xf8] sm:$0xff]
      %v353 = vld [vmem:[%s1] sm:$0x1]
      %v355 = vlaneseq
      %v356 = vshrl.u32 %v355, 7
      %v357 = vsub.s32 0, %v356
      %v358 = vrot.slane %v353, %v357
      %v360 = vmul.f32 %v321, %v358
      %v361 = vmul.f32 %v322, %v358
      %v362 = vmul.f32 %v323, %v358
      %v363 = vmul.f32 %v324, %v358
      %v364 = vmul.f32 %v325, %v358
      %v365 = vmul.f32 %v326, %v358
      %v366 = vmul.f32 %v327, %v358
      %v367 = vmul.f32 %v328, %v358
      %v368 = vmul.f32 %v329, %v358
      %v369 = vmul.f32 %v330, %v358
      %v370 = vmul.f32 %v331, %v358
      %v371 = vmul.f32 %v332, %v358
      %v372 = vmul.f32 %v333, %v358
      %v373 = vmul.f32 %v334, %v358
      %v374 = vmul.f32 %v335, %v358
      %v375 = vmul.f32 %v336, %v358
      %v376 = vmul.f32 %v337, %v358
      %v377 = vmul.f32 %v338, %v358
      %v378 = vmul.f32 %v339, %v358
      %v379 = vmul.f32 %v340, %v358
      %v380 = vmul.f32 %v341, %v358
      %v381 = vmul.f32 %v342, %v358
      %v382 = vmul.f32 %v343, %v358
      %v383 = vmul.f32 %v344, %v358
      %v384 = vmul.f32 %v345, %v358
      %v385 = vmul.f32 %v346, %v358
      %v386 = vmul.f32 %v347, %v358
      %v387 = vmul.f32 %v348, %v358
      %v388 = vmul.f32 %v349, %v358
      %v389 = vmul.f32 %v350, %v358
      %v390 = vmul.f32 %v351, %v358
      %v391 = vmul.f32 %v352, %v358
      %v392 = vld [vmem:[%s2] sm:$0x1]
      %v394 = vlaneseq
      %v395 = vshrl.u32 %v394, 7
      %v396 = vsub.s32 0, %v395
      %v397 = vrot.slane %v392, %v396
      %v399 = vadd.f32 %v360, %v397
      %v400 = vadd.f32 %v361, %v397
      %v401 = vadd.f32 %v362, %v397
      %v402 = vadd.f32 %v363, %v397
      %v403 = vadd.f32 %v364, %v397
      %v404 = vadd.f32 %v365, %v397
      %v405 = vadd.f32 %v366, %v397
      %v406 = vadd.f32 %v367, %v397
      %v407 = vadd.f32 %v368, %v397
      %v408 = vadd.f32 %v369, %v397
      %v409 = vadd.f32 %v370, %v397
      %v410 = vadd.f32 %v371, %v397
      %v411 = vadd.f32 %v372, %v397
      %v412 = vadd.f32 %v373, %v397
      %v413 = vadd.f32 %v374, %v397
      %v414 = vadd.f32 %v375, %v397
      %v415 = vadd.f32 %v376, %v397
      %v416 = vadd.f32 %v377, %v397
      %v417 = vadd.f32 %v378, %v397
      %v418 = vadd.f32 %v379, %v397
      %v419 = vadd.f32 %v380, %v397
      %v420 = vadd.f32 %v381, %v397
      %v421 = vadd.f32 %v382, %v397
      %v422 = vadd.f32 %v383, %v397
      %v423 = vadd.f32 %v384, %v397
      %v424 = vadd.f32 %v385, %v397
      %v425 = vadd.f32 %v386, %v397
      %v426 = vadd.f32 %v387, %v397
      %v427 = vadd.f32 %v388, %v397
      %v428 = vadd.f32 %v389, %v397
      %v429 = vadd.f32 %v390, %v397
      %v430 = vadd.f32 %v391, %v397
      %v431 = vmax.f32 %v399, 0.0
      %v432 = vmax.f32 %v400, 0.0
      %v433 = vmax.f32 %v401, 0.0
      %v434 = vmax.f32 %v402, 0.0
      %v435 = vmax.f32 %v403, 0.0
      %v436 = vmax.f32 %v404, 0.0
      %v437 = vmax.f32 %v405, 0.0
      %v438 = vmax.f32 %v406, 0.0
      %v439 = vmax.f32 %v407, 0.0
      %v440 = vmax.f32 %v408, 0.0
      %v441 = vmax.f32 %v409, 0.0
      %v442 = vmax.f32 %v410, 0.0
      %v443 = vmax.f32 %v411, 0.0
      %v444 = vmax.f32 %v412, 0.0
      %v445 = vmax.f32 %v413, 0.0
      %v446 = vmax.f32 %v414, 0.0
      %v447 = vmax.f32 %v415, 0.0
      %v448 = vmax.f32 %v416, 0.0
      %v449 = vmax.f32 %v417, 0.0
      %v450 = vmax.f32 %v418, 0.0
      %v451 = vmax.f32 %v419, 0.0
      %v452 = vmax.f32 %v420, 0.0
      %v453 = vmax.f32 %v421, 0.0
      %v454 = vmax.f32 %v422, 0.0
      %v455 = vmax.f32 %v423, 0.0
      %v456 = vmax.f32 %v424, 0.0
      %v457 = vmax.f32 %v425, 0.0
      %v458 = vmax.f32 %v426, 0.0
      %v459 = vmax.f32 %v427, 0.0
      %v460 = vmax.f32 %v428, 0.0
      %v461 = vmax.f32 %v429, 0.0
      %v462 = vmax.f32 %v430, 0.0
      %v463 = vld [vmem:[%s3] sm:$0xff]
      %v464 = vld [vmem:[%s3 + $0x8] sm:$0xff]
      %v465 = vld [vmem:[%s3 + $0x10] sm:$0xff]
      %v466 = vld [vmem:[%s3 + $0x18] sm:$0xff]
      %vm467 = vcmask 261120
      %v469 = vsel %vm467, %v431, 0
      %v472 = vsel %vm467, %v432, 0
      %v475 = vsel %vm467, %v433, 0
      %v478 = vsel %vm467, %v434, 0
      %v481 = vsel %vm467, %v435, 0
      %v484 = vsel %vm467, %v436, 0
      %v487 = vsel %vm467, %v437, 0
      %v490 = vsel %vm467, %v438, 0
      %v493 = vsel %vm467, %v439, 0
      %v496 = vsel %vm467, %v440, 0
      %v499 = vsel %vm467, %v441, 0
      %v502 = vsel %vm467, %v442, 0
      %v505 = vsel %vm467, %v443, 0
      %v508 = vsel %vm467, %v444, 0
      %v511 = vsel %vm467, %v445, 0
      %v514 = vsel %vm467, %v446, 0
      %v517 = vsel %vm467, %v447, 0
      %v520 = vsel %vm467, %v448, 0
      %v523 = vsel %vm467, %v449, 0
      %v526 = vsel %vm467, %v450, 0
      %v529 = vsel %vm467, %v451, 0
      %v532 = vsel %vm467, %v452, 0
      %v535 = vsel %vm467, %v453, 0
      %v538 = vsel %vm467, %v454, 0
      %v541 = vsel %vm467, %v455, 0
      %v544 = vsel %vm467, %v456, 0
      %v547 = vsel %vm467, %v457, 0
      %v550 = vsel %vm467, %v458, 0
      %v553 = vsel %vm467, %v459, 0
      %v556 = vsel %vm467, %v460, 0
      %v559 = vsel %vm467, %v461, 0
      %v562 = vsel %vm467, %v462, 0
      %564 = vmatprep.subr.mxu0 0.0
      %565 = vmatpush1.msra.mxu0 %v463
      %566 = vmatprep.subr.mxu0 0.0
      %567 = vmatpush1.msra.mxu0 %v464
      %568 = vmatprep.subr.mxu0 0.0
      %569 = vmatpush1.msra.mxu0 %v465
      %570 = vmatprep.subr.mxu0 0.0
      %571 = vmatpush1.msra.mxu0 %v466
      %572 = vmatprep.subr.mxu0 0.0
      %573 = vmatpush1.msra.mxu0 0.0
      %574 = vmatprep.subr.mxu0 0.0
      %575 = vmatpush1.msra.mxu0 0.0
      %576 = vmatprep.subr.mxu0 0.0
      %577 = vmatpush1.msra.mxu0 0.0
      %578 = vmatprep.subr.mxu0 0.0
      %579 = vmatpush1.msra.mxu0 0.0
      %580 = vmatprep.subr.mxu0 0.0
      %581 = vmatpush1.msra.mxu0 0.0
      %582 = vmatprep.subr.mxu0 0.0
      %583 = vmatpush1.msra.mxu0 0.0
      %584 = vmatprep.subr.mxu0 0.0
      %585 = vmatpush1.msra.mxu0 0.0
      %586 = vmatprep.subr.mxu0 0.0
      %587 = vmatpush1.msra.mxu0 0.0
      %588 = vmatprep.subr.mxu0 0.0
      %589 = vmatpush1.msra.mxu0 0.0
      %590 = vmatprep.subr.mxu0 0.0
      %591 = vmatpush1.msra.mxu0 0.0
      %592 = vmatprep.subr.mxu0 0.0
      %593 = vmatpush1.msra.mxu0 0.0
      %594 = vmatprep.subr.mxu0 0.0
      %595 = vmatpush1.msra.mxu0 0.0
      %596 = vmatprep.subr.mxu0 0.0
      %597 = vmatpush1.msra.mxu0 0.0
      %598 = vmatprep.subr.mxu0 0.0
      %599 = vmatpush1.msra.mxu0 0.0
      %600 = vmatprep.subr.mxu0 0.0
      %601 = vmatpush1.msra.mxu0 0.0
      %602 = vmatprep.subr.mxu0 0.0
      %603 = vmatpush1.msra.mxu0 0.0
      %604 = vmatprep.subr.mxu0 0.0
      %605 = vmatpush1.msra.mxu0 0.0
      %606 = vmatprep.subr.mxu0 0.0
      %607 = vmatpush1.msra.mxu0 0.0
      %608 = vmatprep.subr.mxu0 0.0
      %609 = vmatpush1.msra.mxu0 0.0
      %610 = vmatprep.subr.mxu0 0.0
      %611 = vmatpush1.msra.mxu0 0.0
      %612 = vmatprep.subr.mxu0 0.0
      %613 = vmatpush1.msra.mxu0 0.0
      %614 = vmatprep.subr.mxu0 0.0
      %615 = vmatpush1.msra.mxu0 0.0
      %616 = vmatprep.subr.mxu0 0.0
      %617 = vmatpush1.msra.mxu0 0.0
      %618 = vmatprep.subr.mxu0 0.0
      %619 = vmatpush1.msra.mxu0 0.0
      %620 = vmatprep.subr.mxu0 0.0
      %621 = vmatpush1.msra.mxu0 0.0
      %622 = vmatprep.subr.mxu0 0.0
      %623 = vmatpush1.msra.mxu0 0.0
      %624 = vmatprep.subr.mxu0 0.0
      %625 = vmatpush1.msra.mxu0 0.0
      %626 = vmatprep.subr.mxu0 0.0
      %627 = vmatpush1.msra.mxu0 0.0
      %628 = vmatprep.mubr.f32.mxu0 0.0
      %629 = vmatmul.mubr.f32.gmra.mrb[0].mxu0 %v469
      %v630 = vpop.f32.mrb[0].mxu0
      %v631 = vadd.f32 0.0, %v630
      %v632 = vpop.f32.mrb[0].mxu0
      %633 = vmatprep.mubr.f32.mxu0 0.0
      %634 = vmatmul.mubr.f32.gmra.mrb[0].mxu0 %v472
      %v635 = vpop.f32.mrb[0].mxu0
      %v636 = vadd.f32 0.0, %v635
      %v637 = vpop.f32.mrb[0].mxu0
      %638 = vmatprep.mubr.f32.mxu0 0.0
      %639 = vmatmul.mubr.f32.gmra.mrb[0].mxu0 %v475
      %v640 = vpop.f32.mrb[0].mxu0
      %v641 = vadd.f32 0.0, %v640
      %v642 = vpop.f32.mrb[0].mxu0
      %643 = vmatprep.mubr.f32.mxu0 0.0
      %644 = vmatmul.mubr.f32.gmra.mrb[0].mxu0 %v478
      %v645 = vpop.f32.mrb[0].mxu0
      %v646 = vadd.f32 0.0, %v645
      %v647 = vpop.f32.mrb[0].mxu0
      %648 = vmatprep.mubr.f32.mxu0 0.0
      %649 = vmatmul.mubr.f32.gmra.mrb[0].mxu0 %v481
      %v650 = vpop.f32.mrb[0].mxu0
      %v651 = vadd.f32 0.0, %v650
      %v652 = vpop.f32.mrb[0].mxu0
      %653 = vmatprep.mubr.f32.mxu0 0.0
      %654 = vmatmul.mubr.f32.gmra.mrb[0].mxu0 %v484
      %v655 = vpop.f32.mrb[0].mxu0
      %v656 = vadd.f32 0.0, %v655
      %v657 = vpop.f32.mrb[0].mxu0
      %658 = vmatprep.mubr.f32.mxu0 0.0
      %659 = vmatmul.mubr.f32.gmra.mrb[0].mxu0 %v487
      %v660 = vpop.f32.mrb[0].mxu0
      %v661 = vadd.f32 0.0, %v660
      %v662 = vpop.f32.mrb[0].mxu0
      %663 = vmatprep.mubr.f32.mxu0 0.0
      %664 = vmatmul.mubr.f32.gmra.mrb[0].mxu0 %v490
      %v665 = vpop.f32.mrb[0].mxu0
      %v666 = vadd.f32 0.0, %v665
      %v667 = vpop.f32.mrb[0].mxu0
      %668 = vmatprep.mubr.f32.mxu0 0.0
      %669 = vmatmul.mubr.f32.gmra.mrb[0].mxu0 %v493
      %v670 = vpop.f32.mrb[0].mxu0
      %v671 = vadd.f32 0.0, %v670
      %v672 = vpop.f32.mrb[0].mxu0
      %673 = vmatprep.mubr.f32.mxu0 0.0
      %674 = vmatmul.mubr.f32.gmra.mrb[0].mxu0 %v496
      %v675 = vpop.f32.mrb[0].mxu0
      %v676 = vadd.f32 0.0, %v675
      %v677 = vpop.f32.mrb[0].mxu0
      %678 = vmatprep.mubr.f32.mxu0 0.0
      %679 = vmatmul.mubr.f32.gmra.mrb[0].mxu0 %v499
      %v680 = vpop.f32.mrb[0].mxu0
      %v681 = vadd.f32 0.0, %v680
      %v682 = vpop.f32.mrb[0].mxu0
      %683 = vmatprep.mubr.f32.mxu0 0.0
      %684 = vmatmul.mubr.f32.gmra.mrb[0].mxu0 %v502
      %v685 = vpop.f32.mrb[0].mxu0
      %v686 = vadd.f32 0.0, %v685
      %v687 = vpop.f32.mrb[0].mxu0
      %688 = vmatprep.mubr.f32.mxu0 0.0
      %689 = vmatmul.mubr.f32.gmra.mrb[0].mxu0 %v505
      %v690 = vpop.f32.mrb[0].mxu0
      %v691 = vadd.f32 0.0, %v690
      %v692 = vpop.f32.mrb[0].mxu0
      %693 = vmatprep.mubr.f32.mxu0 0.0
      %694 = vmatmul.mubr.f32.gmra.mrb[0].mxu0 %v508
      %v695 = vpop.f32.mrb[0].mxu0
      %v696 = vadd.f32 0.0, %v695
      %v697 = vpop.f32.mrb[0].mxu0
      %698 = vmatprep.mubr.f32.mxu0 0.0
      %699 = vmatmul.mubr.f32.gmra.mrb[0].mxu0 %v511
      %v700 = vpop.f32.mrb[0].mxu0
      %v701 = vadd.f32 0.0, %v700
      %v702 = vpop.f32.mrb[0].mxu0
      %703 = vmatprep.mubr.f32.mxu0 0.0
      %704 = vmatmul.mubr.f32.gmra.mrb[0].mxu0 %v514
      %v705 = vpop.f32.mrb[0].mxu0
      %v706 = vadd.f32 0.0, %v705
      %v707 = vpop.f32.mrb[0].mxu0
      %708 = vmatprep.mubr.f32.mxu0 0.0
      %709 = vmatmul.mubr.f32.gmra.mrb[0].mxu0 %v517
      %v710 = vpop.f32.mrb[0].mxu0
      %v711 = vadd.f32 0.0, %v710
      %v712 = vpop.f32.mrb[0].mxu0
      %713 = vmatprep.mubr.f32.mxu0 0.0
      %714 = vmatmul.mubr.f32.gmra.mrb[0].mxu0 %v520
      %v715 = vpop.f32.mrb[0].mxu0
      %v716 = vadd.f32 0.0, %v715
      %v717 = vpop.f32.mrb[0].mxu0
      %718 = vmatprep.mubr.f32.mxu0 0.0
      %719 = vmatmul.mubr.f32.gmra.mrb[0].mxu0 %v523
      %v720 = vpop.f32.mrb[0].mxu0
      %v721 = vadd.f32 0.0, %v720
      %v722 = vpop.f32.mrb[0].mxu0
      %723 = vmatprep.mubr.f32.mxu0 0.0
      %724 = vmatmul.mubr.f32.gmra.mrb[0].mxu0 %v526
      %v725 = vpop.f32.mrb[0].mxu0
      %v726 = vadd.f32 0.0, %v725
      %v727 = vpop.f32.mrb[0].mxu0
      %728 = vmatprep.mubr.f32.mxu0 0.0
      %729 = vmatmul.mubr.f32.gmra.mrb[0].mxu0 %v529
      %v730 = vpop.f32.mrb[0].mxu0
      %v731 = vadd.f32 0.0, %v730
      %v732 = vpop.f32.mrb[0].mxu0
      %733 = vmatprep.mubr.f32.mxu0 0.0
      %734 = vmatmul.mubr.f32.gmra.mrb[0].mxu0 %v532
      %v735 = vpop.f32.mrb[0].mxu0
      %v736 = vadd.f32 0.0, %v735
      %v737 = vpop.f32.mrb[0].mxu0
      %738 = vmatprep.mubr.f32.mxu0 0.0
      %739 = vmatmul.mubr.f32.gmra.mrb[0].mxu0 %v535
      %v740 = vpop.f32.mrb[0].mxu0
      %v741 = vadd.f32 0.0, %v740
      %v742 = vpop.f32.mrb[0].mxu0
      %743 = vmatprep.mubr.f32.mxu0 0.0
      %744 = vmatmul.mubr.f32.gmra.mrb[0].mxu0 %v538
      %v745 = vpop.f32.mrb[0].mxu0
      %v746 = vadd.f32 0.0, %v745
      %v747 = vpop.f32.mrb[0].mxu0
      %748 = vmatprep.mubr.f32.mxu0 0.0
      %749 = vmatmul.mubr.f32.gmra.mrb[0].mxu0 %v541
      %v750 = vpop.f32.mrb[0].mxu0
      %v751 = vadd.f32 0.0, %v750
      %v752 = vpop.f32.mrb[0].mxu0
      %753 = vmatprep.mubr.f32.mxu0 0.0
      %754 = vmatmul.mubr.f32.gmra.mrb[0].mxu0 %v544
      %v755 = vpop.f32.mrb[0].mxu0
      %v756 = vadd.f32 0.0, %v755
      %v757 = vpop.f32.mrb[0].mxu0
      %758 = vmatprep.mubr.f32.mxu0 0.0
      %759 = vmatmul.mubr.f32.gmra.mrb[0].mxu0 %v547
      %v760 = vpop.f32.mrb[0].mxu0
      %v761 = vadd.f32 0.0, %v760
      %v762 = vpop.f32.mrb[0].mxu0
      %763 = vmatprep.mubr.f32.mxu0 0.0
      %764 = vmatmul.mubr.f32.gmra.mrb[0].mxu0 %v550
      %v765 = vpop.f32.mrb[0].mxu0
      %v766 = vadd.f32 0.0, %v765
      %v767 = vpop.f32.mrb[0].mxu0
      %768 = vmatprep.mubr.f32.mxu0 0.0
      %769 = vmatmul.mubr.f32.gmra.mrb[0].mxu0 %v553
      %v770 = vpop.f32.mrb[0].mxu0
      %v771 = vadd.f32 0.0, %v770
      %v772 = vpop.f32.mrb[0].mxu0
      %773 = vmatprep.mubr.f32.mxu0 0.0
      %774 = vmatmul.mubr.f32.gmra.mrb[0].mxu0 %v556
      %v775 = vpop.f32.mrb[0].mxu0
      %v776 = vadd.f32 0.0, %v775
      %v777 = vpop.f32.mrb[0].mxu0
      %778 = vmatprep.mubr.f32.mxu0 0.0
      %779 = vmatmul.mubr.f32.gmra.mrb[0].mxu0 %v559
      %v780 = vpop.f32.mrb[0].mxu0
      %v781 = vadd.f32 0.0, %v780
      %v782 = vpop.f32.mrb[0].mxu0
      %783 = vmatprep.mubr.f32.mxu0 0.0
      %784 = vmatmul.mubr.f32.gmra.mrb[0].mxu0 %v562
      %v785 = vpop.f32.mrb[0].mxu0
      %v786 = vadd.f32 0.0, %v785
      %v787 = vpop.f32.mrb[0].mxu0
      %788 = vdwg.mxu0
      %789 = vxpose.xlu0.b32.start [1/16] %v631, 128
      %790 = vxpose.xlu0.b32.cont [2/16] %v636, 128
      %791 = vxpose.xlu0.b32.cont [3/16] %v641, 128
      %792 = vxpose.xlu0.b32.cont [4/16] %v646, 128
      %793 = vxpose.xlu0.b32.cont [5/16] %v651, 128
      %794 = vxpose.xlu0.b32.cont [6/16] %v656, 128
      %795 = vxpose.xlu0.b32.cont [7/16] %v661, 128
      %796 = vxpose.xlu0.b32.cont [8/16] %v666, 128
      %797 = vxpose.xlu0.b32.cont [9/16] %v671, 128
      %798 = vxpose.xlu0.b32.cont [10/16] %v676, 128
      %799 = vxpose.xlu0.b32.cont [11/16] %v681, 128
      %800 = vxpose.xlu0.b32.cont [12/16] %v686, 128
      %801 = vxpose.xlu0.b32.cont [13/16] %v691, 128
      %802 = vxpose.xlu0.b32.cont [14/16] %v696, 128
      %803 = vxpose.xlu0.b32.cont [15/16] %v701, 128
      %804 = vxpose.xlu0.b32.end [16/16] %v706, 128
      %v805 = vpop.trf.xlu0
      %v806 = vpop.trf.xlu0
      %v807 = vpop.trf.xlu0
      %v808 = vpop.trf.xlu0
      %v809 = vpop.trf.xlu0
      %v810 = vpop.trf.xlu0
      %v811 = vpop.trf.xlu0
      %v812 = vpop.trf.xlu0
      %v813 = vpop.trf.xlu0
      %v814 = vpop.trf.xlu0
      %v815 = vpop.trf.xlu0
      %v816 = vpop.trf.xlu0
      %v817 = vpop.trf.xlu0
      %v818 = vpop.trf.xlu0
      %v819 = vpop.trf.xlu0
      %v820 = vpop.trf.xlu0
      %821 = vxpose.xlu0.b32.start [1/16] %v711, 128
      %822 = vxpose.xlu0.b32.cont [2/16] %v716, 128
      %823 = vxpose.xlu0.b32.cont [3/16] %v721, 128
      %824 = vxpose.xlu0.b32.cont [4/16] %v726, 128
      %825 = vxpose.xlu0.b32.cont [5/16] %v731, 128
      %826 = vxpose.xlu0.b32.cont [6/16] %v736, 128
      %827 = vxpose.xlu0.b32.cont [7/16] %v741, 128
      %828 = vxpose.xlu0.b32.cont [8/16] %v746, 128
      %829 = vxpose.xlu0.b32.cont [9/16] %v751, 128
      %830 = vxpose.xlu0.b32.cont [10/16] %v756, 128
      %831 = vxpose.xlu0.b32.cont [11/16] %v761, 128
      %832 = vxpose.xlu0.b32.cont [12/16] %v766, 128
      %833 = vxpose.xlu0.b32.cont [13/16] %v771, 128
      %834 = vxpose.xlu0.b32.cont [14/16] %v776, 128
      %835 = vxpose.xlu0.b32.cont [15/16] %v781, 128
      %836 = vxpose.xlu0.b32.end [16/16] %v786, 128
      %v837 = vpop.trf.xlu0
      %v838 = vpop.trf.xlu0
      %v839 = vpop.trf.xlu0
      %v840 = vpop.trf.xlu0
      %v841 = vpop.trf.xlu0
      %v842 = vpop.trf.xlu0
      %v843 = vpop.trf.xlu0
      %v844 = vpop.trf.xlu0
      %v845 = vpop.trf.xlu0
      %v846 = vpop.trf.xlu0
      %v847 = vpop.trf.xlu0
      %v848 = vpop.trf.xlu0
      %v849 = vpop.trf.xlu0
      %v850 = vpop.trf.xlu0
      %v851 = vpop.trf.xlu0
      %v852 = vpop.trf.xlu0
      %v853 = vld [vmem:[%s4] sm:$0xff]
      %v854 = vld [vmem:[%s4 + $0x8] sm:$0xff]
      %v855 = vld [vmem:[%s4 + $0x10] sm:$0xff]
      %v856 = vld [vmem:[%s4 + $0x18] sm:$0xff]
      %v857 = vld [vmem:[%s4 + $0x20] sm:$0xff]
      %v858 = vld [vmem:[%s4 + $0x28] sm:$0xff]
      %v859 = vld [vmem:[%s4 + $0x30] sm:$0xff]
      %v860 = vld [vmem:[%s4 + $0x38] sm:$0xff]
      %v861 = vld [vmem:[%s4 + $0x40] sm:$0xff]
      %v862 = vld [vmem:[%s4 + $0x48] sm:$0xff]
      %v863 = vld [vmem:[%s4 + $0x50] sm:$0xff]
      %v864 = vld [vmem:[%s4 + $0x58] sm:$0xff]
      %v865 = vld [vmem:[%s4 + $0x60] sm:$0xff]
      %v866 = vld [vmem:[%s4 + $0x68] sm:$0xff]
      %v867 = vld [vmem:[%s4 + $0x70] sm:$0xff]
      %v868 = vld [vmem:[%s4 + $0x78] sm:$0xff]
      %v869 = vld [vmem:[%s310] sm:$0xff]
      %v870 = vld [vmem:[%s310 + $0x8] sm:$0xff]
      %v871 = vld [vmem:[%s310 + $0x10] sm:$0xff]
      %v872 = vld [vmem:[%s310 + $0x18] sm:$0xff]
      %v873 = vld [vmem:[%s310 + $0x20] sm:$0xff]
      %v874 = vld [vmem:[%s310 + $0x28] sm:$0xff]
      %v875 = vld [vmem:[%s310 + $0x30] sm:$0xff]
      %v876 = vld [vmem:[%s310 + $0x38] sm:$0xff]
      %v877 = vld [vmem:[%s310 + $0x40] sm:$0xff]
      %v878 = vld [vmem:[%s310 + $0x48] sm:$0xff]
      %v879 = vld [vmem:[%s310 + $0x50] sm:$0xff]
      %v880 = vld [vmem:[%s310 + $0x58] sm:$0xff]
      %v881 = vld [vmem:[%s310 + $0x60] sm:$0xff]
      %v882 = vld [vmem:[%s310 + $0x68] sm:$0xff]
      %v883 = vld [vmem:[%s310 + $0x70] sm:$0xff]
      %v884 = vld [vmem:[%s310 + $0x78] sm:$0xff]
      %886 = vset.pattern.permute.xlu0 0
      %887 = vperm.xlu0 %886, %v869
      %v888 = vpop.permute.xlu0 %887
      %891 = vset.pattern.permute.xlu0 0
      %892 = vperm.xlu0 %891, %v870
      %v893 = vpop.permute.xlu0 %892
      %896 = vset.pattern.permute.xlu0 0
      %897 = vperm.xlu0 %896, %v871
      %v898 = vpop.permute.xlu0 %897
      %901 = vset.pattern.permute.xlu0 0
      %902 = vperm.xlu0 %901, %v872
      %v903 = vpop.permute.xlu0 %902
      %906 = vset.pattern.permute.xlu0 0
      %907 = vperm.xlu0 %906, %v873
      %v908 = vpop.permute.xlu0 %907
      %911 = vset.pattern.permute.xlu0 0
      %912 = vperm.xlu0 %911, %v874
      %v913 = vpop.permute.xlu0 %912
      %916 = vset.pattern.permute.xlu0 0
      %917 = vperm.xlu0 %916, %v875
      %v918 = vpop.permute.xlu0 %917
      %921 = vset.pattern.permute.xlu0 0
      %922 = vperm.xlu0 %921, %v876
      %v923 = vpop.permute.xlu0 %922
      %926 = vset.pattern.permute.xlu0 0
      %927 = vperm.xlu0 %926, %v877
      %v928 = vpop.permute.xlu0 %927
      %931 = vset.pattern.permute.xlu0 0
      %932 = vperm.xlu0 %931, %v878
      %v933 = vpop.permute.xlu0 %932
      %936 = vset.pattern.permute.xlu0 0
      %937 = vperm.xlu0 %936, %v879
      %v938 = vpop.permute.xlu0 %937
      %941 = vset.pattern.permute.xlu0 0
      %942 = vperm.xlu0 %941, %v880
      %v943 = vpop.permute.xlu0 %942
      %946 = vset.pattern.permute.xlu0 0
      %947 = vperm.xlu0 %946, %v881
      %v948 = vpop.permute.xlu0 %947
      %951 = vset.pattern.permute.xlu0 0
      %952 = vperm.xlu0 %951, %v882
      %v953 = vpop.permute.xlu0 %952
      %956 = vset.pattern.permute.xlu0 0
      %957 = vperm.xlu0 %956, %v883
      %v958 = vpop.permute.xlu0 %957
      %961 = vset.pattern.permute.xlu0 0
      %962 = vperm.xlu0 %961, %v884
      %v963 = vpop.permute.xlu0 %962
      %v965 = vsub.f32 %v805, %v888
      %v966 = vsub.f32 %v837, %v888
      %v967 = vsub.f32 %v806, %v893
      %v968 = vsub.f32 %v838, %v893
      %v969 = vsub.f32 %v807, %v898
      %v970 = vsub.f32 %v839, %v898
      %v971 = vsub.f32 %v808, %v903
      %v972 = vsub.f32 %v840, %v903
      %v973 = vsub.f32 %v809, %v908
      %v974 = vsub.f32 %v841, %v908
      %v975 = vsub.f32 %v810, %v913
      %v976 = vsub.f32 %v842, %v913
      %v977 = vsub.f32 %v811, %v918
      %v978 = vsub.f32 %v843, %v918
      %v979 = vsub.f32 %v812, %v923
      %v980 = vsub.f32 %v844, %v923
      %v981 = vsub.f32 %v813, %v928
      %v982 = vsub.f32 %v845, %v928
      %v983 = vsub.f32 %v814, %v933
      %v984 = vsub.f32 %v846, %v933
      %v985 = vsub.f32 %v815, %v938
      %v986 = vsub.f32 %v847, %v938
      %v987 = vsub.f32 %v816, %v943
      %v988 = vsub.f32 %v848, %v943
      %v989 = vsub.f32 %v817, %v948
      %v990 = vsub.f32 %v849, %v948
      %v991 = vsub.f32 %v818, %v953
      %v992 = vsub.f32 %v850, %v953
      %v993 = vsub.f32 %v819, %v958
      %v994 = vsub.f32 %v851, %v958
      %v995 = vsub.f32 %v820, %v963
      %v996 = vsub.f32 %v852, %v963
      %998 = vset.pattern.permute.xlu0 0
      %999 = vperm.xlu0 %998, %v853
      %v1000 = vpop.permute.xlu0 %999
      %1003 = vset.pattern.permute.xlu0 0
      %1004 = vperm.xlu0 %1003, %v854
      %v1005 = vpop.permute.xlu0 %1004
      %1008 = vset.pattern.permute.xlu0 0
      %1009 = vperm.xlu0 %1008, %v855
      %v1010 = vpop.permute.xlu0 %1009
      %1013 = vset.pattern.permute.xlu0 0
      %1014 = vperm.xlu0 %1013, %v856
      %v1015 = vpop.permute.xlu0 %1014
      %1018 = vset.pattern.permute.xlu0 0
      %1019 = vperm.xlu0 %1018, %v857
      %v1020 = vpop.permute.xlu0 %1019
      %1023 = vset.pattern.permute.xlu0 0
      %1024 = vperm.xlu0 %1023, %v858
      %v1025 = vpop.permute.xlu0 %1024
      %1028 = vset.pattern.permute.xlu0 0
      %1029 = vperm.xlu0 %1028, %v859
      %v1030 = vpop.permute.xlu0 %1029
      %1033 = vset.pattern.permute.xlu0 0
      %1034 = vperm.xlu0 %1033, %v860
      %v1035 = vpop.permute.xlu0 %1034
      %1038 = vset.pattern.permute.xlu0 0
      %1039 = vperm.xlu0 %1038, %v861
      %v1040 = vpop.permute.xlu0 %1039
      %1043 = vset.pattern.permute.xlu0 0
      %1044 = vperm.xlu0 %1043, %v862
      %v1045 = vpop.permute.xlu0 %1044
      %1048 = vset.pattern.permute.xlu0 0
      %1049 = vperm.xlu0 %1048, %v863
      %v1050 = vpop.permute.xlu0 %1049
      %1053 = vset.pattern.permute.xlu0 0
      %1054 = vperm.xlu0 %1053, %v864
      %v1055 = vpop.permute.xlu0 %1054
      %1058 = vset.pattern.permute.xlu0 0
      %1059 = vperm.xlu0 %1058, %v865
      %v1060 = vpop.permute.xlu0 %1059
      %1063 = vset.pattern.permute.xlu0 0
      %1064 = vperm.xlu0 %1063, %v866
      %v1065 = vpop.permute.xlu0 %1064
      %1068 = vset.pattern.permute.xlu0 0
      %1069 = vperm.xlu0 %1068, %v867
      %v1070 = vpop.permute.xlu0 %1069
      %1073 = vset.pattern.permute.xlu0 0
      %1074 = vperm.xlu0 %1073, %v868
      %v1075 = vpop.permute.xlu0 %1074
      %v1077 = vmul.f32 %v1000, %v965
      %v1078 = vmul.f32 %v1000, %v966
      %v1079 = vmul.f32 %v1005, %v967
      %v1080 = vmul.f32 %v1005, %v968
      %v1081 = vmul.f32 %v1010, %v969
      %v1082 = vmul.f32 %v1010, %v970
      %v1083 = vmul.f32 %v1015, %v971
      %v1084 = vmul.f32 %v1015, %v972
      %v1085 = vmul.f32 %v1020, %v973
      %v1086 = vmul.f32 %v1020, %v974
      %v1087 = vmul.f32 %v1025, %v975
      %v1088 = vmul.f32 %v1025, %v976
      %v1089 = vmul.f32 %v1030, %v977
      %v1090 = vmul.f32 %v1030, %v978
      %v1091 = vmul.f32 %v1035, %v979
      %v1092 = vmul.f32 %v1035, %v980
      %v1093 = vmul.f32 %v1040, %v981
      %v1094 = vmul.f32 %v1040, %v982
      %v1095 = vmul.f32 %v1045, %v983
      %v1096 = vmul.f32 %v1045, %v984
      %v1097 = vmul.f32 %v1050, %v985
      %v1098 = vmul.f32 %v1050, %v986
      %v1099 = vmul.f32 %v1055, %v987
      %v1100 = vmul.f32 %v1055, %v988
      %v1101 = vmul.f32 %v1060, %v989
      %v1102 = vmul.f32 %v1060, %v990
      %v1103 = vmul.f32 %v1065, %v991
      %v1104 = vmul.f32 %v1065, %v992
      %v1105 = vmul.f32 %v1070, %v993
      %v1106 = vmul.f32 %v1070, %v994
      %v1107 = vmul.f32 %v1075, %v995
      %v1108 = vmul.f32 %v1075, %v996
      %v1109 = vld [vmem:[%s315] sm:$0xff]
      %v1110 = vld [vmem:[%s315 + $0x8] sm:$0xff]
      %v1111 = vld [vmem:[%s315 + $0x10] sm:$0xff]
      %v1112 = vld [vmem:[%s315 + $0x18] sm:$0xff]
      %v1113 = vld [vmem:[%s315 + $0x20] sm:$0xff]
      %v1114 = vld [vmem:[%s315 + $0x28] sm:$0xff]
      %v1115 = vld [vmem:[%s315 + $0x30] sm:$0xff]
      %v1116 = vld [vmem:[%s315 + $0x38] sm:$0xff]
      %v1117 = vld [vmem:[%s315 + $0x40] sm:$0xff]
      %v1118 = vld [vmem:[%s315 + $0x48] sm:$0xff]
      %v1119 = vld [vmem:[%s315 + $0x50] sm:$0xff]
      %v1120 = vld [vmem:[%s315 + $0x58] sm:$0xff]
      %v1121 = vld [vmem:[%s315 + $0x60] sm:$0xff]
      %v1122 = vld [vmem:[%s315 + $0x68] sm:$0xff]
      %v1123 = vld [vmem:[%s315 + $0x70] sm:$0xff]
      %v1124 = vld [vmem:[%s315 + $0x78] sm:$0xff]
      %v1125 = vld [vmem:[%s315 + $0x80] sm:$0xff]
      %v1126 = vld [vmem:[%s315 + $0x88] sm:$0xff]
      %v1127 = vld [vmem:[%s315 + $0x90] sm:$0xff]
      %v1128 = vld [vmem:[%s315 + $0x98] sm:$0xff]
      %v1129 = vld [vmem:[%s315 + $0xa0] sm:$0xff]
      %v1130 = vld [vmem:[%s315 + $0xa8] sm:$0xff]
      %v1131 = vld [vmem:[%s315 + $0xb0] sm:$0xff]
      %v1132 = vld [vmem:[%s315 + $0xb8] sm:$0xff]
      %v1133 = vld [vmem:[%s315 + $0xc0] sm:$0xff]
      %v1134 = vld [vmem:[%s315 + $0xc8] sm:$0xff]
      %v1135 = vld [vmem:[%s315 + $0xd0] sm:$0xff]
      %v1136 = vld [vmem:[%s315 + $0xd8] sm:$0xff]
      %v1137 = vld [vmem:[%s315 + $0xe0] sm:$0xff]
      %v1138 = vld [vmem:[%s315 + $0xe8] sm:$0xff]
      %v1139 = vld [vmem:[%s315 + $0xf0] sm:$0xff]
      %v1140 = vld [vmem:[%s315 + $0xf8] sm:$0xff]
      %v1141 = vadd.f32 %v1077, %v1109
      %v1142 = vadd.f32 %v1078, %v1110
      %v1143 = vadd.f32 %v1079, %v1111
      %v1144 = vadd.f32 %v1080, %v1112
      %v1145 = vadd.f32 %v1081, %v1113
      %v1146 = vadd.f32 %v1082, %v1114
      %v1147 = vadd.f32 %v1083, %v1115
      %v1148 = vadd.f32 %v1084, %v1116
      %v1149 = vadd.f32 %v1085, %v1117
      %v1150 = vadd.f32 %v1086, %v1118
      %v1151 = vadd.f32 %v1087, %v1119
      %v1152 = vadd.f32 %v1088, %v1120
      %v1153 = vadd.f32 %v1089, %v1121
      %v1154 = vadd.f32 %v1090, %v1122
      %v1155 = vadd.f32 %v1091, %v1123
      %v1156 = vadd.f32 %v1092, %v1124
      %v1157 = vadd.f32 %v1093, %v1125
      %v1158 = vadd.f32 %v1094, %v1126
      %v1159 = vadd.f32 %v1095, %v1127
      %v1160 = vadd.f32 %v1096, %v1128
      %v1161 = vadd.f32 %v1097, %v1129
      %v1162 = vadd.f32 %v1098, %v1130
      %v1163 = vadd.f32 %v1099, %v1131
      %v1164 = vadd.f32 %v1100, %v1132
      %v1165 = vadd.f32 %v1101, %v1133
      %v1166 = vadd.f32 %v1102, %v1134
      %v1167 = vadd.f32 %v1103, %v1135
      %v1168 = vadd.f32 %v1104, %v1136
      %v1169 = vadd.f32 %v1105, %v1137
      %v1170 = vadd.f32 %v1106, %v1138
      %v1171 = vadd.f32 %v1107, %v1139
      %v1172 = vadd.f32 %v1108, %v1140
      %v1173 = vmax.f32 %v1141, 0.0
      %v1174 = vmax.f32 %v1142, 0.0
      %v1175 = vmax.f32 %v1143, 0.0
      %v1176 = vmax.f32 %v1144, 0.0
      %v1177 = vmax.f32 %v1145, 0.0
      %v1178 = vmax.f32 %v1146, 0.0
      %v1179 = vmax.f32 %v1147, 0.0
      %v1180 = vmax.f32 %v1148, 0.0
      %v1181 = vmax.f32 %v1149, 0.0
      %v1182 = vmax.f32 %v1150, 0.0
      %v1183 = vmax.f32 %v1151, 0.0
      %v1184 = vmax.f32 %v1152, 0.0
      %v1185 = vmax.f32 %v1153, 0.0
      %v1186 = vmax.f32 %v1154, 0.0
      %v1187 = vmax.f32 %v1155, 0.0
      %v1188 = vmax.f32 %v1156, 0.0
      %v1189 = vmax.f32 %v1157, 0.0
      %v1190 = vmax.f32 %v1158, 0.0
      %v1191 = vmax.f32 %v1159, 0.0
      %v1192 = vmax.f32 %v1160, 0.0
      %v1193 = vmax.f32 %v1161, 0.0
      %v1194 = vmax.f32 %v1162, 0.0
      %v1195 = vmax.f32 %v1163, 0.0
      %v1196 = vmax.f32 %v1164, 0.0
      %v1197 = vmax.f32 %v1165, 0.0
      %v1198 = vmax.f32 %v1166, 0.0
      %v1199 = vmax.f32 %v1167, 0.0
      %v1200 = vmax.f32 %v1168, 0.0
      %v1201 = vmax.f32 %v1169, 0.0
      %v1202 = vmax.f32 %v1170, 0.0
      %v1203 = vmax.f32 %v1171, 0.0
      %v1204 = vmax.f32 %v1172, 0.0
      %1205 = vst [vmem:[%s320] sm:$0xff] %v1173
      %1206 = vst [vmem:[%s320 + $0x8] sm:$0xff] %v1174
      %1207 = vst [vmem:[%s320 + $0x10] sm:$0xff] %v1175
      %1208 = vst [vmem:[%s320 + $0x18] sm:$0xff] %v1176
      %1209 = vst [vmem:[%s320 + $0x20] sm:$0xff] %v1177
      %1210 = vst [vmem:[%s320 + $0x28] sm:$0xff] %v1178
      %1211 = vst [vmem:[%s320 + $0x30] sm:$0xff] %v1179
      %1212 = vst [vmem:[%s320 + $0x38] sm:$0xff] %v1180
      %1213 = vst [vmem:[%s320 + $0x40] sm:$0xff] %v1181
      %1214 = vst [vmem:[%s320 + $0x48] sm:$0xff] %v1182
      %1215 = vst [vmem:[%s320 + $0x50] sm:$0xff] %v1183
      %1216 = vst [vmem:[%s320 + $0x58] sm:$0xff] %v1184
      %1217 = vst [vmem:[%s320 + $0x60] sm:$0xff] %v1185
      %1218 = vst [vmem:[%s320 + $0x68] sm:$0xff] %v1186
      %1219 = vst [vmem:[%s320 + $0x70] sm:$0xff] %v1187
      %1220 = vst [vmem:[%s320 + $0x78] sm:$0xff] %v1188
      %1221 = vst [vmem:[%s320 + $0x80] sm:$0xff] %v1189
      %1222 = vst [vmem:[%s320 + $0x88] sm:$0xff] %v1190
      %1223 = vst [vmem:[%s320 + $0x90] sm:$0xff] %v1191
      %1224 = vst [vmem:[%s320 + $0x98] sm:$0xff] %v1192
      %1225 = vst [vmem:[%s320 + $0xa0] sm:$0xff] %v1193
      %1226 = vst [vmem:[%s320 + $0xa8] sm:$0xff] %v1194
      %1227 = vst [vmem:[%s320 + $0xb0] sm:$0xff] %v1195
      %1228 = vst [vmem:[%s320 + $0xb8] sm:$0xff] %v1196
      %1229 = vst [vmem:[%s320 + $0xc0] sm:$0xff] %v1197
      %1230 = vst [vmem:[%s320 + $0xc8] sm:$0xff] %v1198
      %1231 = vst [vmem:[%s320 + $0xd0] sm:$0xff] %v1199
      %1232 = vst [vmem:[%s320 + $0xd8] sm:$0xff] %v1200
      %1233 = vst [vmem:[%s320 + $0xe0] sm:$0xff] %v1201
      %1234 = vst [vmem:[%s320 + $0xe8] sm:$0xff] %v1202
      %1235 = vst [vmem:[%s320 + $0xf0] sm:$0xff] %v1203
      %1236 = vst [vmem:[%s320 + $0xf8] sm:$0xff] %v1204
      %p1237 = scmp.lt.s32.totalorder %s18, 1
      %s1238 = scalar_select %p1237, %s18, 1
      %s1239 = smul.addr %s1238, 32
      %s1240 = smul.addr %s1239, 8
      %s1241 = scalar_lea.vmem %s7, %s1240
      // Predicated region
      $region49: #{resbottleneck_forward.7} parent=47 // pred_check
        %p1242 = pneg %p198
      $region50: #{resbottleneck_forward.7} parent=47 // pred_check_branch
        %1244 = sbr.rel (%p1242) target = $region52
      $region51: #{resbottleneck_forward.7} parent=47 // pred_region
        _
      $region52: #{resbottleneck_forward.7} parent=47 // pred_fallthru
        _
    $region48: #{resbottleneck_forward.7} parent=5 // pred_fallthru
      _
    %p1245 = scmp.le.s32.totalorder 2, %s13
    // Predicated region
    $region53: #{resbottleneck_forward.7} parent=5 // pred_check
      %p1246 = pneg %p1245
    $region54: #{resbottleneck_forward.7} parent=5 // pred_check_branch
      %1248 = sbr.rel (%p1246) target = $region56
    $region55: #{resbottleneck_forward.7} parent=5 // pred_region
      %s1249 = ssub.s32 %s13, 2
      // Predicated region
      $region57: #{resbottleneck_forward.7} parent=55 // pred_check
        %p1250 = pneg %p204
      $region58: #{resbottleneck_forward.7} parent=55 // pred_check_branch
        %1252 = sbr.rel (%p1250) target = $region60
      $region59: #{resbottleneck_forward.7} parent=55 // pred_region
        %p1253 = scmp.lt.s32.totalorder %s19, 1
        %s1254 = scalar_select %p1253, %s19, 1
        %s1255 = smul.addr %s1254, 32
        %s1256 = smul.addr %s1255, 8
        %s1257 = scalar_lea.vmem %s7, %s1256
      $region60: #{resbottleneck_forward.7} parent=55 // pred_fallthru
        _
    $region56: #{resbottleneck_forward.7} parent=5 // pred_fallthru
      _
  $region6: #{resbottleneck_forward.7} parent=0 // loop_footer
    %s17 = sadd.s32 1, %s13
  $region7: #{resbottleneck_forward.7} parent=0 // loop_footer_branch
    %12 = sbr.rel target = $region3
  $region8: #{resbottleneck_forward.7} parent=0 // loop_exit
    _

</llo_original>
